<compile_context>
chip_gen: v7x
topology: tpu7x:2x2x1
jax: 0.10.0
libtpu: 0.0.40
codegen_flags: <defaults>
</compile_context>

<pallas_src>
import functools

import jax
import jax.numpy as jnp
from jax import lax
from jax.experimental import pallas as pl
from jax.experimental.pallas import tpu as pltpu


# ----------------------------- configuration --------------------------------
NODE_DEGREE = (4, 4)                 # config.node_degree
TOTAL_NODE = sum(NODE_DEGREE)        # 8
TREE_DEPTH = len(NODE_DEGREE)        # 2
ATTN_METHOD = "max"                  # config.attn_method
PADDING_DIST = 100

VOCAB_SIZE = 50
MAG_SIZE = 12
PRE_SIZE = 12
TOP_SIZE = 12
LOW_SIZE = 12
ROW_SIZE = 16
COL_SIZE = 16
MAX_CELL_LEN = 8
NUM_FORMAT_FEATURE = 11

HIDDEN = 32
NUM_HEADS = 4
HEAD_DIM = HIDDEN // NUM_HEADS
NUM_LAYERS = 2
INTERMEDIATE = 64
ATTN_DIST_THRESHOLD = 8              # synthetic encoder visibility threshold
LN_EPS = 1e-6

BATCH = 2
SEQ = 8


# ------------------------------ kernel helpers -------------------------------
def _layer_norm(y, g, b):
    mu = jnp.mean(y, axis=-1, keepdims=True)
    var = jnp.mean((y - mu) ** 2, axis=-1, keepdims=True)
    return (y - mu) * lax.rsqrt(var + LN_EPS) * g + b


# ------------------------------ fused kernel ---------------------------------
def _fused_forward_kernel(sum_emb_ref, fmt_ref, pos_top_ref, pos_left_ref,
                          ind_col_ref, ind_row_ref,
                          w_fmt_ref, emb_vecs_ref,
                          w_qkv_ref, b_qkv_ref, w_o_ref, vecs_ref,
                          w1_ref, b1_ref, w2_ref,
                          out_ref,
                          *, batch, seq_len, hidden, num_heads, head_dim,
                          num_layers, tree_depth, total_node,
                          padding_dist, dist_threshold):
    B, S, H, NH, hd = batch, seq_len, hidden, num_heads, head_dim
    BS = B * S
    f32 = jnp.float32
    bf16 = jnp.bfloat16

    # ------------- embeddings: format projection + sum + LayerNorm ----------
    proj = lax.dot_general(fmt_ref[...].astype(bf16), w_fmt_ref[...],
                           (((1,), (0,)), ((), ())),
                           preferred_element_type=f32)            # (BS, H)
    ev = emb_vecs_ref[...]                                        # (3, H) f32
    x = sum_emb_ref[...] + proj + ev[0:1, :]
    x = _layer_norm(x, ev[1:2, :], ev[2:3, :])

    # ----------- tree positions -> attention distance (Backbone) ------------
    node_iota = lax.broadcasted_iota(jnp.int32, (BS, total_node), 1)

    def unzip(pos_ref):   # zipped (BS, depth) -> {0,1} node union (BS, total_node)
        pos = pos_ref[...]
        e = jnp.zeros((BS, total_node), f32)
        for d in range(tree_depth):                               # static, tiny
            e = jnp.maximum(e, (pos[:, d:d + 1] == node_iota).astype(f32))
        return e                       # value == total_node (excess bit) dropped

    def pairwise_l1(e):   # binary vectors: |a-b| = a(1-b) + (1-a)b, 2-D matmuls
        a = e.astype(bf16)
        c = (1.0 - e).astype(bf16)
        ab = lax.dot_general(a, c, (((1,), (1,)), ((), ())),
                             preferred_element_type=f32)          # (BS, BS)
        ba = lax.dot_general(c, a, (((1,), (1,)), ((), ())),
                             preferred_element_type=f32)
        return ab + ba

    top_d = pairwise_l1(unzip(pos_top_ref))
    left_d = pairwise_l1(unzip(pos_left_ref))
    dist = jnp.maximum(top_d, left_d) if ATTN_METHOD == "max" else top_d + left_d

    # create_post_mask (cross-batch entries of the folded matrix are unused)
    ind_col = ind_col_ref[...]                                    # (BS, 1) int32
    ind_row = ind_row_ref[...]                                    # (1, BS) int32
    pd = f32(padding_dist)
    cls_m = jnp.maximum((ind_col == -1).astype(f32), (ind_row == -1).astype(f32))
    pad_m = jnp.maximum((ind_col == 0).astype(f32), (ind_row == 0).astype(f32)) * pd
    dist = dist - cls_m * dist + pad_m
    sep_col = ((ind_col > 0) & ((ind_col & 1) == 1)).astype(f32)
    sep_row = ((ind_row > 0) & ((ind_row & 1) == 1)).astype(f32)
    dist = dist * ((1.0 - sep_col * sep_row) * pd + 1.0)

    # additive attention bias: computed ONCE, per-batch slices hoisted out of
    # the layer loop (distances are exact small integers in f32; +0.5 slack
    # replaces the explicit rounding of the previous version).
    bias_full = jnp.where(dist <= f32(dist_threshold) + 0.5,
                          f32(0.0), f32(-10000.0))                # (BS, BS)
    bias_b = [bias_full[b * S:(b + 1) * S, b * S:(b + 1) * S] for b in range(B)]

    # per-head lane masks: merge heads into lanes without concat / transpose
    col_iota = lax.broadcasted_iota(jnp.int32, (1, H), 1)
    head_mask = [((col_iota >= h * hd) & (col_iota < (h + 1) * hd)).astype(f32)
                 for h in range(NH)]

    # ----------------------------- encoder layers ----------------------------
    scale = f32(1.0 / (hd ** 0.5))
    for l in range(num_layers):   # static unroll; use lax.fori_loop if L grows
        w_qkv = w_qkv_ref[l]                                      # (H, 3H) bf16
        b_qkv = b_qkv_ref[l]                                      # (1, 3H) f32
        w_o = w_o_ref[l]                                          # (H, H)  bf16
        vecs = vecs_ref[l]                                        # (6, H)  f32
        w1 = w1_ref[l]                                            # (H, I)  bf16
        b1 = b1_ref[l]                                            # (1, I)  f32
        w2 = w2_ref[l]                                            # (I, H)  bf16

        # fused QKV projection: ONE wide 2-D matmul over all batch rows
        qkv = lax.dot_general(x.astype(bf16), w_qkv, (((1,), (0,)), ((), ())),
                              preferred_element_type=f32) + b_qkv  # (BS, 3H)

        ctx_rows = []
        for b in range(B):
            r0 = b * S
            vb = qkv[r0:r0 + S, 2 * H:3 * H].astype(bf16)          # (S, H)
            bias = bias_b[b]                                       # (S, S)
            ctx_b = jnp.zeros((S, H), f32)
            for h in range(NH):
                c0 = h * hd
                q_bh = qkv[r0:r0 + S, c0:c0 + hd]                  # (S, hd)
                k_bh = qkv[r0:r0 + S, H + c0:H + c0 + hd]          # (S, hd)
                sc = lax.dot_general(q_bh, k_bh, (((1,), (1,)), ((), ())),
                                     preferred_element_type=f32) * scale + bias
                sc = sc - jnp.max(sc, axis=-1, keepdims=True)
                p = jnp.exp(sc)
                p = p * pl.reciprocal(jnp.sum(p, axis=-1, keepdims=True),
                                      approx=True)
                ctx_full = lax.dot_general(p.astype(bf16), vb,
                                           (((1,), (0,)), ((), ())),
                                           preferred_element_type=f32)  # (S, H)
                ctx_b = ctx_b + ctx_full * head_mask[h]            # keep head h
            ctx_rows.append(ctx_b)
        ctx_all = jnp.concatenate(ctx_rows, axis=0)                # (BS, H)

        # fused output projection: ONE 2-D matmul on merged heads
        attn_out = lax.dot_general(ctx_all.astype(bf16), w_o,
                                   (((1,), (0,)), ((), ())),
                                   preferred_element_type=f32) + vecs[0:1, :]
        x1 = _layer_norm(x + attn_out, vecs[1:2, :], vecs[2:3, :])

        h1 = lax.dot_general(x1.astype(bf16), w1, (((1,), (0,)), ((), ())),
                             preferred_element_type=f32) + b1
        h1 = jax.nn.gelu(h1)   # TODO(synk): torch nn.GELU default is exact erf
        h2 = lax.dot_general(h1.astype(bf16), w2, (((1,), (0,)), ((), ())),
                             preferred_element_type=f32) + vecs[3:4, :]
        x = _layer_norm(x1 + h2, vecs[4:5, :], vecs[5:6, :])

    out_ref[...] = x                                               # (BS, H)


# ------------------------------ pallas wrapper --------------------------------
def _full_spec(shape):
    nd = len(shape)
    return pl.BlockSpec(tuple(shape), lambda i, _nd=nd: (0,) * _nd)


def bb_for_tuta_pallas(packed, sum_emb, format_vec, pos_top, pos_left, indicator):
    B, S, H = sum_emb.shape
    BS = B * S

    # fold batch into rows (wrapper-side reshapes are free XLA glue)
    sum_emb_f = sum_emb.reshape(BS, H)
    fmt_f = format_vec.reshape(BS, -1)
    pos_top_f = pos_top.reshape(BS, -1)
    pos_left_f = pos_left.reshape(BS, -1)
    ind_col = indicator.reshape(BS, 1)
    ind_row = indicator.reshape(1, BS)

    kernel = functools.partial(
        _fused_forward_kernel,
        batch=B, seq_len=S, hidden=H, num_heads=NUM_HEADS, head_dim=HEAD_DIM,
        num_layers=NUM_LAYERS, tree_depth=TREE_DEPTH, total_node=TOTAL_NODE,
        padding_dist=PADDING_DIST, dist_threshold=ATTN_DIST_THRESHOLD)

    args = (sum_emb_f, fmt_f, pos_top_f, pos_left_f, ind_col, ind_row,
            packed["w_fmt"], packed["emb_vecs"],
            packed["w_qkv"], packed["b_qkv"], packed["w_o"],
            packed["vecs"], packed["w1"], packed["b1"], packed["w2"])

    out = pl.pallas_call(
        kernel,
        grid=(1,),                                   # whole forward in one step
        in_specs=[_full_spec(a.shape) for a in args],
        out_specs=_full_spec((BS, H)),
        out_shape=jax.ShapeDtypeStruct((BS, H), jnp.float32),
        compiler_params=pltpu.CompilerParams(
            dimension_semantics=("arbitrary",)),
    )(*args)

    return out.reshape(B, S, H)


# ------------------------------ parameters ------------------------------------
def init_params(key):
    def nrm(k, shape, scale=0.02):
        return (scale * jax.random.normal(k, shape)).astype(jnp.float32)

    keys = iter(jax.random.split(key, 64))
    emb_tables = {
        "tok_emb": nrm(next(keys), (VOCAB_SIZE, HIDDEN)),
        "mag_emb": nrm(next(keys), (MAG_SIZE, HIDDEN)),
        "pre_emb": nrm(next(keys), (PRE_SIZE, HIDDEN)),
        "top_emb": nrm(next(keys), (TOP_SIZE, HIDDEN)),
        "low_emb": nrm(next(keys), (LOW_SIZE, HIDDEN)),
        "row_emb": nrm(next(keys), (ROW_SIZE, HIDDEN)),
        "col_emb": nrm(next(keys), (COL_SIZE, HIDDEN)),
        "ord_emb": nrm(next(keys), (MAX_CELL_LEN, HIDDEN)),
    }

    w_fmt = nrm(next(keys), (NUM_FORMAT_FEATURE, HIDDEN))
    b_fmt = jnp.zeros((HIDDEN,), jnp.float32)
    emb_ln_g = jnp.ones((HIDDEN,), jnp.float32)
    emb_ln_b = jnp.zeros((HIDDEN,), jnp.float32)

    w_qkv_l, b_qkv_l, w_o_l, vec_l, w1_l, b1_l, w2_l = [], [], [], [], [], [], []
    for _ in range(NUM_LAYERS):
        wq = nrm(next(keys), (HIDDEN, HIDDEN))
        wk = nrm(next(keys), (HIDDEN, HIDDEN))
        wv = nrm(next(keys), (HIDDEN, HIDDEN))
        wo = nrm(next(keys), (HIDDEN, HIDDEN))
        bq = jnp.zeros((HIDDEN,), jnp.float32)
        bk = jnp.zeros((HIDDEN,), jnp.float32)
        bv = jnp.zeros((HIDDEN,), jnp.float32)
        bo = jnp.zeros((HIDDEN,), jnp.float32)
        ln1g = jnp.ones((HIDDEN,), jnp.float32)
        ln1b = jnp.zeros((HIDDEN,), jnp.float32)
        w1 = nrm(next(keys), (HIDDEN, INTERMEDIATE))
        b1 = jnp.zeros((INTERMEDIATE,), jnp.float32)
        w2 = nrm(next(keys), (INTERMEDIATE, HIDDEN))
        b2 = jnp.zeros((HIDDEN,), jnp.float32)
        ln2g = jnp.ones((HIDDEN,), jnp.float32)
        ln2b = jnp.zeros((HIDDEN,), jnp.float32)

        # fused QKV packing: columns [ Q | K | V ], head h at lanes h*hd:(h+1)*hd
        w_qkv_l.append(jnp.concatenate([wq, wk, wv], axis=1))          # (H, 3H)
        b_qkv_l.append(jnp.concatenate([bq, bk, bv]).reshape(1, 3 * HIDDEN))
        w_o_l.append(wo)                                                # (H, H)
        vec_l.append(jnp.stack([bo, ln1g, ln1b, b2, ln2g, ln2b], axis=0))  # (6,H)
        w1_l.append(w1)
        b1_l.append(b1.reshape(1, INTERMEDIATE))
        w2_l.append(w2)

    packed = {
        "w_fmt": w_fmt.astype(jnp.bfloat16),
        "emb_vecs": jnp.stack([b_fmt, emb_ln_g, emb_ln_b], axis=0),     # (3,H)
        "w_qkv": jnp.stack(w_qkv_l, 0).astype(jnp.bfloat16),            # (L,H,3H)
        "b_qkv": jnp.stack(b_qkv_l, 0),                                 # (L,1,3H)
        "w_o": jnp.stack(w_o_l, 0).astype(jnp.bfloat16),                # (L,H,H)
        "vecs": jnp.stack(vec_l, 0),                                    # (L,6,H)
        "w1": jnp.stack(w1_l, 0).astype(jnp.bfloat16),                  # (L,H,I)
        "b1": jnp.stack(b1_l, 0),                                       # (L,1,I)
        "w2": jnp.stack(w2_l, 0).astype(jnp.bfloat16),                  # (L,I,H)
    }
    return emb_tables, packed


# ------------------------------ full forward ----------------------------------
def bb_for_tuta_forward(emb_tables, packed, token_id, num_mag, num_pre, num_top,
                        num_low, token_order, pos_row, pos_col, pos_top,
                        pos_left, format_vec, indicator):
    # embedding-table gathers are lookups (plain-JAX glue), summed once
    sum_emb = (jnp.take(emb_tables["tok_emb"], token_id, axis=0)
               + jnp.take(emb_tables["mag_emb"], num_mag, axis=0)
               + jnp.take(emb_tables["pre_emb"], num_pre, axis=0)
               + jnp.take(emb_tables["top_emb"], num_top, axis=0)
               + jnp.take(emb_tables["low_emb"], num_low, axis=0)
               + jnp.take(emb_tables["row_emb"], pos_row, axis=0)
               + jnp.take(emb_tables["col_emb"], pos_col, axis=0)
               + jnp.take(emb_tables["ord_emb"], token_order, axis=0)
               ).astype(jnp.float32)
    return bb_for_tuta_pallas(packed, sum_emb, format_vec, pos_top, pos_left,
                              indicator)


# --------------------------------- main ----------------------------------------
if __name__ == "__main__":
    root = jax.random.PRNGKey(0)
    (k_param, k_tok, k_mag, k_pre, k_top, k_low, k_ord, k_row, k_col,
     k_pt, k_pl, k_fmt) = jax.random.split(root, 12)

    emb_tables, packed = init_params(k_param)

    token_id = jax.random.randint(k_tok, (BATCH, SEQ), 0, VOCAB_SIZE, jnp.int32)
    num_mag = jax.random.randint(k_mag, (BATCH, SEQ), 0, MAG_SIZE, jnp.int32)
    num_pre = jax.random.randint(k_pre, (BATCH, SEQ), 0, PRE_SIZE, jnp.int32)
    num_top = jax.random.randint(k_top, (BATCH, SEQ), 0, TOP_SIZE, jnp.int32)
    num_low = jax.random.randint(k_low, (BATCH, SEQ), 0, LOW_SIZE, jnp.int32)
    token_order = jax.random.randint(k_ord, (BATCH, SEQ), 0, MAX_CELL_LEN, jnp.int32)
    pos_row = jax.random.randint(k_row, (BATCH, SEQ), 0, ROW_SIZE, jnp.int32)
    pos_col = jax.random.randint(k_col, (BATCH, SEQ), 0, COL_SIZE, jnp.int32)
    # zipped tree positions in [0, total_node]; value == total_node is the
    # "excessive bit" dropped by unzip_tree_position
    pos_top = jax.random.randint(k_pt, (BATCH, SEQ, TREE_DEPTH), 0,
                                 TOTAL_NODE + 1, jnp.int32)
    pos_left = jax.random.randint(k_pl, (BATCH, SEQ, TREE_DEPTH), 0,
                                  TOTAL_NODE + 1, jnp.int32)
    format_vec = jax.random.uniform(k_fmt, (BATCH, SEQ, NUM_FORMAT_FEATURE),
                                    dtype=jnp.float32)
    # -1 = [CLS], 0 = [PAD], odd > 0 = [SEP], even > 0 = regular cell tokens
    indicator = jnp.array([[-1, 1, 2, 2, 3, 4, 0, 0],
                           [-1, 1, 2, 3, 4, 4, 5, 0]], dtype=jnp.int32)

    encoded = bb_for_tuta_forward(
        emb_tables, packed, token_id, num_mag, num_pre, num_top, num_low,
        token_order, pos_row, pos_col, pos_top, pos_left, format_vec, indicator)
    jax.block_until_ready(encoded)

    assert encoded.shape == (BATCH, SEQ, HIDDEN)
    assert bool(jnp.all(jnp.isfinite(encoded)))
    print("KERNEL_OK")
</pallas_src>

<mosaic_0001>
module attributes {stable_mosaic.version = 11 : i64} {
  func.func @_fused_forward_kernel(%arg0: i32, %arg1: memref<16x32xf32, #tpu.memory_space<vmem>>, %arg2: memref<16x11xf32, #tpu.memory_space<vmem>>, %arg3: memref<16x2xi32, #tpu.memory_space<vmem>>, %arg4: memref<16x2xi32, #tpu.memory_space<vmem>>, %arg5: memref<16x1xi32, #tpu.memory_space<vmem>>, %arg6: memref<1x16xi32, #tpu.memory_space<vmem>>, %arg7: memref<11x32xbf16, #tpu.memory_space<vmem>>, %arg8: memref<3x32xf32, #tpu.memory_space<vmem>>, %arg9: memref<2x32x96xbf16, #tpu.memory_space<vmem>>, %arg10: memref<2x1x96xf32, #tpu.memory_space<vmem>>, %arg11: memref<2x32x32xbf16, #tpu.memory_space<vmem>>, %arg12: memref<2x6x32xf32, #tpu.memory_space<vmem>>, %arg13: memref<2x32x64xbf16, #tpu.memory_space<vmem>>, %arg14: memref<2x1x64xf32, #tpu.memory_space<vmem>>, %arg15: memref<2x64x32xbf16, #tpu.memory_space<vmem>>, %arg16: memref<16x32xf32, #tpu.memory_space<vmem>>) attributes {dimension_semantics = [#tpu.dimension_semantics<arbitrary>], iteration_bounds = array<i64: 1>, scalar_prefetch = 0 : i64, scratch_operands = 0 : i64, tpu.core_type = #tpu.core_type<tc>, window_params = [{pipeline_mode = #tpu.pipeline_mode<synchronous>, transform_indices = @transform_0, window_bounds = array<i64: 16, 32>}, {pipeline_mode = #tpu.pipeline_mode<synchronous>, transform_indices = @transform_1, window_bounds = array<i64: 16, 11>}, {pipeline_mode = #tpu.pipeline_mode<synchronous>, transform_indices = @transform_2, window_bounds = array<i64: 16, 2>}, {pipeline_mode = #tpu.pipeline_mode<synchronous>, transform_indices = @transform_3, window_bounds = array<i64: 16, 2>}, {pipeline_mode = #tpu.pipeline_mode<synchronous>, transform_indices = @transform_4, window_bounds = array<i64: 16, 1>}, {pipeline_mode = #tpu.pipeline_mode<synchronous>, transform_indices = @transform_5, window_bounds = array<i64: 1, 16>}, {pipeline_mode = #tpu.pipeline_mode<synchronous>, transform_indices = @transform_6, window_bounds = array<i64: 11, 32>}, {pipeline_mode = #tpu.pipeline_mode<synchronous>, transform_indices = @transform_7, window_bounds = array<i64: 3, 32>}, {pipeline_mode = #tpu.pipeline_mode<synchronous>, transform_indices = @transform_8, window_bounds = array<i64: 2, 32, 96>}, {pipeline_mode = #tpu.pipeline_mode<synchronous>, transform_indices = @transform_9, window_bounds = array<i64: 2, 1, 96>}, {pipeline_mode = #tpu.pipeline_mode<synchronous>, transform_indices = @transform_10, window_bounds = array<i64: 2, 32, 32>}, {pipeline_mode = #tpu.pipeline_mode<synchronous>, transform_indices = @transform_11, window_bounds = array<i64: 2, 6, 32>}, {pipeline_mode = #tpu.pipeline_mode<synchronous>, transform_indices = @transform_12, window_bounds = array<i64: 2, 32, 64>}, {pipeline_mode = #tpu.pipeline_mode<synchronous>, transform_indices = @transform_13, window_bounds = array<i64: 2, 1, 64>}, {pipeline_mode = #tpu.pipeline_mode<synchronous>, transform_indices = @transform_14, window_bounds = array<i64: 2, 64, 32>}, {pipeline_mode = #tpu.pipeline_mode<synchronous>, transform_indices = @transform_15, window_bounds = array<i64: 16, 32>}]} {
    %c0 = arith.constant 0 : index
    %c0_0 = arith.constant 0 : index
    %0 = vector.load %arg2[%c0, %c0_0] : memref<16x11xf32, #tpu.memory_space<vmem>>, vector<16x11xf32>
    %1 = arith.truncf %0 : vector<16x11xf32> to vector<16x11xbf16>
    %c0_1 = arith.constant 0 : index
    %c0_2 = arith.constant 0 : index
    %2 = vector.load %arg7[%c0_1, %c0_2] : memref<11x32xbf16, #tpu.memory_space<vmem>>, vector<11x32xbf16>
    %cst = arith.constant dense<0.000000e+00> : vector<16x32xf32>
    %3 = tpu.matmul %1, %2, %cst {dimension_numbers = #tpu.dot_dimension_numbers<[1], [0], [0], [1], [0, 0, 1, 1], [], []>} : vector<16x11xbf16>, vector<11x32xbf16>, vector<16x32xf32> -> vector<16x32xf32>
    %c0_3 = arith.constant 0 : index
    %c0_4 = arith.constant 0 : index
    %4 = vector.load %arg8[%c0_3, %c0_4] : memref<3x32xf32, #tpu.memory_space<vmem>>, vector<3x32xf32>
    %c0_5 = arith.constant 0 : index
    %c0_6 = arith.constant 0 : index
    %5 = vector.load %arg1[%c0_5, %c0_6] : memref<16x32xf32, #tpu.memory_space<vmem>>, vector<16x32xf32>
    %6 = arith.addf %5, %3 : vector<16x32xf32>
    %7 = vector.extract_strided_slice %4 {offsets = [0, 0], sizes = [1, 32], strides = [1, 1]} : vector<3x32xf32> to vector<1x32xf32>
    %8 = vector.broadcast %7 : vector<1x32xf32> to vector<16x32xf32>
    %9 = arith.addf %6, %8 : vector<16x32xf32>
    %10 = vector.extract_strided_slice %4 {offsets = [1, 0], sizes = [1, 32], strides = [1, 1]} : vector<3x32xf32> to vector<1x32xf32>
    %11 = vector.extract_strided_slice %4 {offsets = [2, 0], sizes = [1, 32], strides = [1, 1]} : vector<3x32xf32> to vector<1x32xf32>
    %cst_7 = arith.constant dense<0.000000e+00> : vector<16xf32>
    %12 = vector.multi_reduction <add>, %9, %cst_7 [1] : vector<16x32xf32> to vector<16xf32>
    %13 = vector.shape_cast %12 : vector<16xf32> to vector<16x1xf32>
    %cst_8 = arith.constant 3.200000e+01 : f32
    %14 = vector.broadcast %cst_8 : f32 to vector<16x1xf32>
    %15 = arith.divf %13, %14 : vector<16x1xf32>
    %16 = vector.broadcast %15 : vector<16x1xf32> to vector<16x32xf32>
    %17 = arith.subf %9, %16 : vector<16x32xf32>
    %18 = arith.mulf %17, %17 : vector<16x32xf32>
    %cst_9 = arith.constant dense<0.000000e+00> : vector<16xf32>
    %19 = vector.multi_reduction <add>, %18, %cst_9 [1] : vector<16x32xf32> to vector<16xf32>
    %20 = vector.shape_cast %19 : vector<16xf32> to vector<16x1xf32>
    %cst_10 = arith.constant 3.200000e+01 : f32
    %21 = vector.broadcast %cst_10 : f32 to vector<16x1xf32>
    %22 = arith.divf %20, %21 : vector<16x1xf32>
    %23 = vector.broadcast %15 : vector<16x1xf32> to vector<16x32xf32>
    %24 = arith.subf %9, %23 : vector<16x32xf32>
    %cst_11 = arith.constant 9.99999997E-7 : f32
    %25 = vector.broadcast %cst_11 : f32 to vector<16x1xf32>
    %26 = arith.addf %22, %25 : vector<16x1xf32>
    %27 = math.rsqrt %26 : vector<16x1xf32>
    %28 = vector.broadcast %27 : vector<16x1xf32> to vector<16x32xf32>
    %29 = arith.mulf %24, %28 : vector<16x32xf32>
    %30 = vector.broadcast %10 : vector<1x32xf32> to vector<16x32xf32>
    %31 = arith.mulf %29, %30 : vector<16x32xf32>
    %32 = vector.broadcast %11 : vector<1x32xf32> to vector<16x32xf32>
    %33 = arith.addf %31, %32 : vector<16x32xf32>
    %34 = tpu.iota {dimensions = array<i32: 1>} : vector<16x8xi32>
    %c0_12 = arith.constant 0 : index
    %c0_13 = arith.constant 0 : index
    %35 = vector.load %arg3[%c0_12, %c0_13] : memref<16x2xi32, #tpu.memory_space<vmem>>, vector<16x2xi32>
    %cst_14 = arith.constant 0.000000e+00 : f32
    %36 = vector.broadcast %cst_14 : f32 to vector<16x8xf32>
    %37 = vector.extract_strided_slice %35 {offsets = [0, 0], sizes = [16, 1], strides = [1, 1]} : vector<16x2xi32> to vector<16x1xi32>
    %38 = vector.broadcast %37 : vector<16x1xi32> to vector<16x8xi32>
    %39 = arith.cmpi eq, %38, %34 : vector<16x8xi32>
    %40 = arith.extui %39 : vector<16x8xi1> to vector<16x8xi32>
    %41 = arith.sitofp %40 : vector<16x8xi32> to vector<16x8xf32>
    %42 = arith.maximumf %36, %41 : vector<16x8xf32>
    %43 = vector.extract_strided_slice %35 {offsets = [0, 1], sizes = [16, 1], strides = [1, 1]} : vector<16x2xi32> to vector<16x1xi32>
    %44 = vector.broadcast %43 : vector<16x1xi32> to vector<16x8xi32>
    %45 = arith.cmpi eq, %44, %34 : vector<16x8xi32>
    %46 = arith.extui %45 : vector<16x8xi1> to vector<16x8xi32>
    %47 = arith.sitofp %46 : vector<16x8xi32> to vector<16x8xf32>
    %48 = arith.maximumf %42, %47 : vector<16x8xf32>
    %49 = arith.truncf %48 : vector<16x8xf32> to vector<16x8xbf16>
    %cst_15 = arith.constant 1.000000e+00 : f32
    %50 = vector.broadcast %cst_15 : f32 to vector<16x8xf32>
    %51 = arith.subf %50, %48 : vector<16x8xf32>
    %52 = arith.truncf %51 : vector<16x8xf32> to vector<16x8xbf16>
    %cst_16 = arith.constant dense<0.000000e+00> : vector<16x16xf32>
    %53 = tpu.matmul %49, %52, %cst_16 {dimension_numbers = #tpu.dot_dimension_numbers<[1], [1], [0], [0], [0, 0, 1, 0], [], []>} : vector<16x8xbf16>, vector<16x8xbf16>, vector<16x16xf32> -> vector<16x16xf32>
    %cst_17 = arith.constant dense<0.000000e+00> : vector<16x16xf32>
    %54 = tpu.matmul %52, %49, %cst_17 {dimension_numbers = #tpu.dot_dimension_numbers<[1], [1], [0], [0], [0, 0, 1, 0], [], []>} : vector<16x8xbf16>, vector<16x8xbf16>, vector<16x16xf32> -> vector<16x16xf32>
    %55 = arith.addf %53, %54 : vector<16x16xf32>
    %c0_18 = arith.constant 0 : index
    %c0_19 = arith.constant 0 : index
    %56 = vector.load %arg4[%c0_18, %c0_19] : memref<16x2xi32, #tpu.memory_space<vmem>>, vector<16x2xi32>
    %cst_20 = arith.constant 0.000000e+00 : f32
    %57 = vector.broadcast %cst_20 : f32 to vector<16x8xf32>
    %58 = vector.extract_strided_slice %56 {offsets = [0, 0], sizes = [16, 1], strides = [1, 1]} : vector<16x2xi32> to vector<16x1xi32>
    %59 = vector.broadcast %58 : vector<16x1xi32> to vector<16x8xi32>
    %60 = arith.cmpi eq, %59, %34 : vector<16x8xi32>
    %61 = arith.extui %60 : vector<16x8xi1> to vector<16x8xi32>
    %62 = arith.sitofp %61 : vector<16x8xi32> to vector<16x8xf32>
    %63 = arith.maximumf %57, %62 : vector<16x8xf32>
    %64 = vector.extract_strided_slice %56 {offsets = [0, 1], sizes = [16, 1], strides = [1, 1]} : vector<16x2xi32> to vector<16x1xi32>
    %65 = vector.broadcast %64 : vector<16x1xi32> to vector<16x8xi32>
    %66 = arith.cmpi eq, %65, %34 : vector<16x8xi32>
    %67 = arith.extui %66 : vector<16x8xi1> to vector<16x8xi32>
    %68 = arith.sitofp %67 : vector<16x8xi32> to vector<16x8xf32>
    %69 = arith.maximumf %63, %68 : vector<16x8xf32>
    %70 = arith.truncf %69 : vector<16x8xf32> to vector<16x8xbf16>
    %cst_21 = arith.constant 1.000000e+00 : f32
    %71 = vector.broadcast %cst_21 : f32 to vector<16x8xf32>
    %72 = arith.subf %71, %69 : vector<16x8xf32>
    %73 = arith.truncf %72 : vector<16x8xf32> to vector<16x8xbf16>
    %cst_22 = arith.constant dense<0.000000e+00> : vector<16x16xf32>
    %74 = tpu.matmul %70, %73, %cst_22 {dimension_numbers = #tpu.dot_dimension_numbers<[1], [1], [0], [0], [0, 0, 1, 0], [], []>} : vector<16x8xbf16>, vector<16x8xbf16>, vector<16x16xf32> -> vector<16x16xf32>
    %cst_23 = arith.constant dense<0.000000e+00> : vector<16x16xf32>
    %75 = tpu.matmul %73, %70, %cst_23 {dimension_numbers = #tpu.dot_dimension_numbers<[1], [1], [0], [0], [0, 0, 1, 0], [], []>} : vector<16x8xbf16>, vector<16x8xbf16>, vector<16x16xf32> -> vector<16x16xf32>
    %76 = arith.addf %74, %75 : vector<16x16xf32>
    %77 = arith.maximumf %55, %76 : vector<16x16xf32>
    %c0_24 = arith.constant 0 : index
    %c0_25 = arith.constant 0 : index
    %78 = vector.load %arg5[%c0_24, %c0_25] : memref<16x1xi32, #tpu.memory_space<vmem>>, vector<16x1xi32>
    %c0_26 = arith.constant 0 : index
    %c0_27 = arith.constant 0 : index
    %79 = vector.load %arg6[%c0_26, %c0_27] : memref<1x16xi32, #tpu.memory_space<vmem>>, vector<1x16xi32>
    %c-1_i32 = arith.constant -1 : i32
    %80 = vector.broadcast %c-1_i32 : i32 to vector<16x1xi32>
    %81 = arith.cmpi eq, %78, %80 : vector<16x1xi32>
    %82 = arith.extui %81 : vector<16x1xi1> to vector<16x1xi32>
    %83 = arith.sitofp %82 : vector<16x1xi32> to vector<16x1xf32>
    %c-1_i32_28 = arith.constant -1 : i32
    %84 = vector.broadcast %c-1_i32_28 : i32 to vector<1x16xi32>
    %85 = arith.cmpi eq, %79, %84 : vector<1x16xi32>
    %86 = arith.extui %85 : vector<1x16xi1> to vector<1x16xi32>
    %87 = arith.sitofp %86 : vector<1x16xi32> to vector<1x16xf32>
    %88 = vector.broadcast %83 : vector<16x1xf32> to vector<16x16xf32>
    %89 = vector.broadcast %87 : vector<1x16xf32> to vector<16x16xf32>
    %90 = arith.maximumf %88, %89 : vector<16x16xf32>
    %c0_i32 = arith.constant 0 : i32
    %91 = vector.broadcast %c0_i32 : i32 to vector<16x1xi32>
    %92 = arith.cmpi eq, %78, %91 : vector<16x1xi32>
    %93 = arith.extui %92 : vector<16x1xi1> to vector<16x1xi32>
    %94 = arith.sitofp %93 : vector<16x1xi32> to vector<16x1xf32>
    %c0_i32_29 = arith.constant 0 : i32
    %95 = vector.broadcast %c0_i32_29 : i32 to vector<1x16xi32>
    %96 = arith.cmpi eq, %79, %95 : vector<1x16xi32>
    %97 = arith.extui %96 : vector<1x16xi1> to vector<1x16xi32>
    %98 = arith.sitofp %97 : vector<1x16xi32> to vector<1x16xf32>
    %99 = vector.broadcast %94 : vector<16x1xf32> to vector<16x16xf32>
    %100 = vector.broadcast %98 : vector<1x16xf32> to vector<16x16xf32>
    %101 = arith.maximumf %99, %100 : vector<16x16xf32>
    %cst_30 = arith.constant 1.000000e+02 : f32
    %102 = vector.broadcast %cst_30 : f32 to vector<16x16xf32>
    %103 = arith.mulf %101, %102 : vector<16x16xf32>
    %104 = arith.mulf %90, %77 : vector<16x16xf32>
    %105 = arith.subf %77, %104 : vector<16x16xf32>
    %106 = arith.addf %105, %103 : vector<16x16xf32>
    %c0_i32_31 = arith.constant 0 : i32
    %107 = vector.broadcast %c0_i32_31 : i32 to vector<16x1xi32>
    %108 = arith.cmpi sgt, %78, %107 : vector<16x1xi32>
    %c1_i32 = arith.constant 1 : i32
    %109 = vector.broadcast %c1_i32 : i32 to vector<16x1xi32>
    %110 = arith.andi %78, %109 : vector<16x1xi32>
    %c1_i32_32 = arith.constant 1 : i32
    %111 = vector.broadcast %c1_i32_32 : i32 to vector<16x1xi32>
    %112 = arith.cmpi eq, %110, %111 : vector<16x1xi32>
    %113 = arith.andi %108, %112 : vector<16x1xi1>
    %114 = arith.extui %113 : vector<16x1xi1> to vector<16x1xi32>
    %115 = arith.sitofp %114 : vector<16x1xi32> to vector<16x1xf32>
    %c0_i32_33 = arith.constant 0 : i32
    %116 = vector.broadcast %c0_i32_33 : i32 to vector<1x16xi32>
    %117 = arith.cmpi sgt, %79, %116 : vector<1x16xi32>
    %c1_i32_34 = arith.constant 1 : i32
    %118 = vector.broadcast %c1_i32_34 : i32 to vector<1x16xi32>
    %119 = arith.andi %79, %118 : vector<1x16xi32>
    %c1_i32_35 = arith.constant 1 : i32
    %120 = vector.broadcast %c1_i32_35 : i32 to vector<1x16xi32>
    %121 = arith.cmpi eq, %119, %120 : vector<1x16xi32>
    %122 = arith.andi %117, %121 : vector<1x16xi1>
    %123 = arith.extui %122 : vector<1x16xi1> to vector<1x16xi32>
    %124 = arith.sitofp %123 : vector<1x16xi32> to vector<1x16xf32>
    %125 = vector.broadcast %115 : vector<16x1xf32> to vector<16x16xf32>
    %126 = vector.broadcast %124 : vector<1x16xf32> to vector<16x16xf32>
    %127 = arith.mulf %125, %126 : vector<16x16xf32>
    %cst_36 = arith.constant 1.000000e+00 : f32
    %128 = vector.broadcast %cst_36 : f32 to vector<16x16xf32>
    %129 = arith.subf %128, %127 : vector<16x16xf32>
    %cst_37 = arith.constant 1.000000e+02 : f32
    %130 = vector.broadcast %cst_37 : f32 to vector<16x16xf32>
    %131 = arith.mulf %129, %130 : vector<16x16xf32>
    %cst_38 = arith.constant 1.000000e+00 : f32
    %132 = vector.broadcast %cst_38 : f32 to vector<16x16xf32>
    %133 = arith.addf %131, %132 : vector<16x16xf32>
    %134 = arith.mulf %106, %133 : vector<16x16xf32>
    %cst_39 = arith.constant 8.000000e+00 : f32
    %cst_40 = arith.constant 5.000000e-01 : f32
    %135 = arith.addf %cst_39, %cst_40 : f32
    %136 = vector.broadcast %135 : f32 to vector<16x16xf32>
    %137 = arith.cmpf ole, %134, %136 : vector<16x16xf32>
    %cst_41 = arith.constant 0.000000e+00 : f32
    %cst_42 = arith.constant -1.000000e+04 : f32
    %138 = vector.broadcast %cst_41 : f32 to vector<16x16xf32>
    %139 = vector.broadcast %cst_42 : f32 to vector<16x16xf32>
    %140 = arith.select %137, %138, %139 : vector<16x16xi1>, vector<16x16xf32>
    %141 = vector.extract_strided_slice %140 {offsets = [0, 0], sizes = [8, 8], strides = [1, 1]} : vector<16x16xf32> to vector<8x8xf32>
    %142 = vector.extract_strided_slice %140 {offsets = [8, 8], sizes = [8, 8], strides = [1, 1]} : vector<16x16xf32> to vector<8x8xf32>
    %143 = tpu.iota {dimensions = array<i32: 1>} : vector<1x32xi32>
    %c0_i32_43 = arith.constant 0 : i32
    %144 = vector.broadcast %c0_i32_43 : i32 to vector<1x32xi32>
    %145 = arith.cmpi sge, %143, %144 : vector<1x32xi32>
    %c8_i32 = arith.constant 8 : i32
    %146 = vector.broadcast %c8_i32 : i32 to vector<1x32xi32>
    %147 = arith.cmpi slt, %143, %146 : vector<1x32xi32>
    %148 = arith.andi %145, %147 : vector<1x32xi1>
    %149 = arith.extui %148 : vector<1x32xi1> to vector<1x32xi32>
    %150 = arith.sitofp %149 : vector<1x32xi32> to vector<1x32xf32>
    %c8_i32_44 = arith.constant 8 : i32
    %151 = vector.broadcast %c8_i32_44 : i32 to vector<1x32xi32>
    %152 = arith.cmpi sge, %143, %151 : vector<1x32xi32>
    %c16_i32 = arith.constant 16 : i32
    %153 = vector.broadcast %c16_i32 : i32 to vector<1x32xi32>
    %154 = arith.cmpi slt, %143, %153 : vector<1x32xi32>
    %155 = arith.andi %152, %154 : vector<1x32xi1>
    %156 = arith.extui %155 : vector<1x32xi1> to vector<1x32xi32>
    %157 = arith.sitofp %156 : vector<1x32xi32> to vector<1x32xf32>
    %c16_i32_45 = arith.constant 16 : i32
    %158 = vector.broadcast %c16_i32_45 : i32 to vector<1x32xi32>
    %159 = arith.cmpi sge, %143, %158 : vector<1x32xi32>
    %c24_i32 = arith.constant 24 : i32
    %160 = vector.broadcast %c24_i32 : i32 to vector<1x32xi32>
    %161 = arith.cmpi slt, %143, %160 : vector<1x32xi32>
    %162 = arith.andi %159, %161 : vector<1x32xi1>
    %163 = arith.extui %162 : vector<1x32xi1> to vector<1x32xi32>
    %164 = arith.sitofp %163 : vector<1x32xi32> to vector<1x32xf32>
    %c24_i32_46 = arith.constant 24 : i32
    %165 = vector.broadcast %c24_i32_46 : i32 to vector<1x32xi32>
    %166 = arith.cmpi sge, %143, %165 : vector<1x32xi32>
    %c32_i32 = arith.constant 32 : i32
    %167 = vector.broadcast %c32_i32 : i32 to vector<1x32xi32>
    %168 = arith.cmpi slt, %143, %167 : vector<1x32xi32>
    %169 = arith.andi %166, %168 : vector<1x32xi1>
    %170 = arith.extui %169 : vector<1x32xi1> to vector<1x32xi32>
    %171 = arith.sitofp %170 : vector<1x32xi32> to vector<1x32xf32>
    %c0_47 = arith.constant 0 : index
    %c0_48 = arith.constant 0 : index
    %c0_49 = arith.constant 0 : index
    %172 = vector.load %arg9[%c0_47, %c0_48, %c0_49] : memref<2x32x96xbf16, #tpu.memory_space<vmem>>, vector<1x32x96xbf16>
    %173 = vector.shape_cast %172 : vector<1x32x96xbf16> to vector<32x96xbf16>
    %c0_50 = arith.constant 0 : index
    %c0_51 = arith.constant 0 : index
    %c0_52 = arith.constant 0 : index
    %174 = vector.load %arg10[%c0_50, %c0_51, %c0_52] : memref<2x1x96xf32, #tpu.memory_space<vmem>>, vector<1x1x96xf32>
    %175 = vector.shape_cast %174 : vector<1x1x96xf32> to vector<1x96xf32>
    %c0_53 = arith.constant 0 : index
    %c0_54 = arith.constant 0 : index
    %c0_55 = arith.constant 0 : index
    %176 = vector.load %arg11[%c0_53, %c0_54, %c0_55] : memref<2x32x32xbf16, #tpu.memory_space<vmem>>, vector<1x32x32xbf16>
    %177 = vector.shape_cast %176 : vector<1x32x32xbf16> to vector<32x32xbf16>
    %c0_56 = arith.constant 0 : index
    %c0_57 = arith.constant 0 : index
    %c0_58 = arith.constant 0 : index
    %178 = vector.load %arg12[%c0_56, %c0_57, %c0_58] : memref<2x6x32xf32, #tpu.memory_space<vmem>>, vector<1x6x32xf32>
    %179 = vector.shape_cast %178 : vector<1x6x32xf32> to vector<6x32xf32>
    %c0_59 = arith.constant 0 : index
    %c0_60 = arith.constant 0 : index
    %c0_61 = arith.constant 0 : index
    %180 = vector.load %arg13[%c0_59, %c0_60, %c0_61] : memref<2x32x64xbf16, #tpu.memory_space<vmem>>, vector<1x32x64xbf16>
    %181 = vector.shape_cast %180 : vector<1x32x64xbf16> to vector<32x64xbf16>
    %c0_62 = arith.constant 0 : index
    %c0_63 = arith.constant 0 : index
    %c0_64 = arith.constant 0 : index
    %182 = vector.load %arg14[%c0_62, %c0_63, %c0_64] : memref<2x1x64xf32, #tpu.memory_space<vmem>>, vector<1x1x64xf32>
    %183 = vector.shape_cast %182 : vector<1x1x64xf32> to vector<1x64xf32>
    %c0_65 = arith.constant 0 : index
    %c0_66 = arith.constant 0 : index
    %c0_67 = arith.constant 0 : index
    %184 = vector.load %arg15[%c0_65, %c0_66, %c0_67] : memref<2x64x32xbf16, #tpu.memory_space<vmem>>, vector<1x64x32xbf16>
    %185 = vector.shape_cast %184 : vector<1x64x32xbf16> to vector<64x32xbf16>
    %186 = arith.truncf %33 : vector<16x32xf32> to vector<16x32xbf16>
    %cst_68 = arith.constant dense<0.000000e+00> : vector<16x96xf32>
    %187 = tpu.matmul %186, %173, %cst_68 {dimension_numbers = #tpu.dot_dimension_numbers<[1], [0], [0], [1], [0, 0, 1, 1], [], []>} : vector<16x32xbf16>, vector<32x96xbf16>, vector<16x96xf32> -> vector<16x96xf32>
    %188 = vector.broadcast %175 : vector<1x96xf32> to vector<16x96xf32>
    %189 = arith.addf %187, %188 : vector<16x96xf32>
    %190 = vector.extract_strided_slice %189 {offsets = [0, 64], sizes = [8, 32], strides = [1, 1]} : vector<16x96xf32> to vector<8x32xf32>
    %191 = arith.truncf %190 : vector<8x32xf32> to vector<8x32xbf16>
    %cst_69 = arith.constant 0.000000e+00 : f32
    %192 = vector.broadcast %cst_69 : f32 to vector<8x32xf32>
    %193 = vector.extract_strided_slice %189 {offsets = [0, 0], sizes = [8, 8], strides = [1, 1]} : vector<16x96xf32> to vector<8x8xf32>
    %194 = vector.extract_strided_slice %189 {offsets = [0, 32], sizes = [8, 8], strides = [1, 1]} : vector<16x96xf32> to vector<8x8xf32>
    %cst_70 = arith.constant dense<0.000000e+00> : vector<8x8xf32>
    %195 = tpu.matmul %193, %194, %cst_70 {dimension_numbers = #tpu.dot_dimension_numbers<[1], [1], [0], [0], [0, 0, 1, 0], [], []>} : vector<8x8xf32>, vector<8x8xf32>, vector<8x8xf32> -> vector<8x8xf32>
    %cst_71 = arith.constant 0.353553385 : f32
    %196 = vector.broadcast %cst_71 : f32 to vector<8x8xf32>
    %197 = arith.mulf %195, %196 : vector<8x8xf32>
    %198 = arith.addf %197, %141 : vector<8x8xf32>
    %cst_72 = arith.constant dense<0xFF800000> : vector<8xf32>
    %199 = vector.multi_reduction <maximumf>, %198, %cst_72 [1] : vector<8x8xf32> to vector<8xf32>
    %200 = vector.shape_cast %199 : vector<8xf32> to vector<8x1xf32>
    %201 = vector.broadcast %200 : vector<8x1xf32> to vector<8x8xf32>
    %202 = arith.subf %198, %201 : vector<8x8xf32>
    %203 = math.exp %202 : vector<8x8xf32>
    %cst_73 = arith.constant dense<0.000000e+00> : vector<8xf32>
    %204 = vector.multi_reduction <add>, %203, %cst_73 [1] : vector<8x8xf32> to vector<8xf32>
    %205 = vector.shape_cast %204 : vector<8xf32> to vector<8x1xf32>
    %206 = tpu.reciprocal %205 {approx = true} : vector<8x1xf32> -> vector<8x1xf32>
    %207 = vector.broadcast %206 : vector<8x1xf32> to vector<8x8xf32>
    %208 = arith.mulf %203, %207 : vector<8x8xf32>
    %209 = arith.truncf %208 : vector<8x8xf32> to vector<8x8xbf16>
    %cst_74 = arith.constant dense<0.000000e+00> : vector<8x32xf32>
    %210 = tpu.matmul %209, %191, %cst_74 {dimension_numbers = #tpu.dot_dimension_numbers<[1], [0], [0], [1], [0, 0, 1, 1], [], []>} : vector<8x8xbf16>, vector<8x32xbf16>, vector<8x32xf32> -> vector<8x32xf32>
    %211 = vector.broadcast %150 : vector<1x32xf32> to vector<8x32xf32>
    %212 = arith.mulf %210, %211 : vector<8x32xf32>
    %213 = arith.addf %192, %212 : vector<8x32xf32>
    %214 = vector.extract_strided_slice %189 {offsets = [0, 8], sizes = [8, 8], strides = [1, 1]} : vector<16x96xf32> to vector<8x8xf32>
    %215 = vector.extract_strided_slice %189 {offsets = [0, 40], sizes = [8, 8], strides = [1, 1]} : vector<16x96xf32> to vector<8x8xf32>
    %cst_75 = arith.constant dense<0.000000e+00> : vector<8x8xf32>
    %216 = tpu.matmul %214, %215, %cst_75 {dimension_numbers = #tpu.dot_dimension_numbers<[1], [1], [0], [0], [0, 0, 1, 0], [], []>} : vector<8x8xf32>, vector<8x8xf32>, vector<8x8xf32> -> vector<8x8xf32>
    %cst_76 = arith.constant 0.353553385 : f32
    %217 = vector.broadcast %cst_76 : f32 to vector<8x8xf32>
    %218 = arith.mulf %216, %217 : vector<8x8xf32>
    %219 = arith.addf %218, %141 : vector<8x8xf32>
    %cst_77 = arith.constant dense<0xFF800000> : vector<8xf32>
    %220 = vector.multi_reduction <maximumf>, %219, %cst_77 [1] : vector<8x8xf32> to vector<8xf32>
    %221 = vector.shape_cast %220 : vector<8xf32> to vector<8x1xf32>
    %222 = vector.broadcast %221 : vector<8x1xf32> to vector<8x8xf32>
    %223 = arith.subf %219, %222 : vector<8x8xf32>
    %224 = math.exp %223 : vector<8x8xf32>
    %cst_78 = arith.constant dense<0.000000e+00> : vector<8xf32>
    %225 = vector.multi_reduction <add>, %224, %cst_78 [1] : vector<8x8xf32> to vector<8xf32>
    %226 = vector.shape_cast %225 : vector<8xf32> to vector<8x1xf32>
    %227 = tpu.reciprocal %226 {approx = true} : vector<8x1xf32> -> vector<8x1xf32>
    %228 = vector.broadcast %227 : vector<8x1xf32> to vector<8x8xf32>
    %229 = arith.mulf %224, %228 : vector<8x8xf32>
    %230 = arith.truncf %229 : vector<8x8xf32> to vector<8x8xbf16>
    %cst_79 = arith.constant dense<0.000000e+00> : vector<8x32xf32>
    %231 = tpu.matmul %230, %191, %cst_79 {dimension_numbers = #tpu.dot_dimension_numbers<[1], [0], [0], [1], [0, 0, 1, 1], [], []>} : vector<8x8xbf16>, vector<8x32xbf16>, vector<8x32xf32> -> vector<8x32xf32>
    %232 = vector.broadcast %157 : vector<1x32xf32> to vector<8x32xf32>
    %233 = arith.mulf %231, %232 : vector<8x32xf32>
    %234 = arith.addf %213, %233 : vector<8x32xf32>
    %235 = vector.extract_strided_slice %189 {offsets = [0, 16], sizes = [8, 8], strides = [1, 1]} : vector<16x96xf32> to vector<8x8xf32>
    %236 = vector.extract_strided_slice %189 {offsets = [0, 48], sizes = [8, 8], strides = [1, 1]} : vector<16x96xf32> to vector<8x8xf32>
    %cst_80 = arith.constant dense<0.000000e+00> : vector<8x8xf32>
    %237 = tpu.matmul %235, %236, %cst_80 {dimension_numbers = #tpu.dot_dimension_numbers<[1], [1], [0], [0], [0, 0, 1, 0], [], []>} : vector<8x8xf32>, vector<8x8xf32>, vector<8x8xf32> -> vector<8x8xf32>
    %cst_81 = arith.constant 0.353553385 : f32
    %238 = vector.broadcast %cst_81 : f32 to vector<8x8xf32>
    %239 = arith.mulf %237, %238 : vector<8x8xf32>
    %240 = arith.addf %239, %141 : vector<8x8xf32>
    %cst_82 = arith.constant dense<0xFF800000> : vector<8xf32>
    %241 = vector.multi_reduction <maximumf>, %240, %cst_82 [1] : vector<8x8xf32> to vector<8xf32>
    %242 = vector.shape_cast %241 : vector<8xf32> to vector<8x1xf32>
    %243 = vector.broadcast %242 : vector<8x1xf32> to vector<8x8xf32>
    %244 = arith.subf %240, %243 : vector<8x8xf32>
    %245 = math.exp %244 : vector<8x8xf32>
    %cst_83 = arith.constant dense<0.000000e+00> : vector<8xf32>
    %246 = vector.multi_reduction <add>, %245, %cst_83 [1] : vector<8x8xf32> to vector<8xf32>
    %247 = vector.shape_cast %246 : vector<8xf32> to vector<8x1xf32>
    %248 = tpu.reciprocal %247 {approx = true} : vector<8x1xf32> -> vector<8x1xf32>
    %249 = vector.broadcast %248 : vector<8x1xf32> to vector<8x8xf32>
    %250 = arith.mulf %245, %249 : vector<8x8xf32>
    %251 = arith.truncf %250 : vector<8x8xf32> to vector<8x8xbf16>
    %cst_84 = arith.constant dense<0.000000e+00> : vector<8x32xf32>
    %252 = tpu.matmul %251, %191, %cst_84 {dimension_numbers = #tpu.dot_dimension_numbers<[1], [0], [0], [1], [0, 0, 1, 1], [], []>} : vector<8x8xbf16>, vector<8x32xbf16>, vector<8x32xf32> -> vector<8x32xf32>
    %253 = vector.broadcast %164 : vector<1x32xf32> to vector<8x32xf32>
    %254 = arith.mulf %252, %253 : vector<8x32xf32>
    %255 = arith.addf %234, %254 : vector<8x32xf32>
    %256 = vector.extract_strided_slice %189 {offsets = [0, 24], sizes = [8, 8], strides = [1, 1]} : vector<16x96xf32> to vector<8x8xf32>
    %257 = vector.extract_strided_slice %189 {offsets = [0, 56], sizes = [8, 8], strides = [1, 1]} : vector<16x96xf32> to vector<8x8xf32>
    %cst_85 = arith.constant dense<0.000000e+00> : vector<8x8xf32>
    %258 = tpu.matmul %256, %257, %cst_85 {dimension_numbers = #tpu.dot_dimension_numbers<[1], [1], [0], [0], [0, 0, 1, 0], [], []>} : vector<8x8xf32>, vector<8x8xf32>, vector<8x8xf32> -> vector<8x8xf32>
    %cst_86 = arith.constant 0.353553385 : f32
    %259 = vector.broadcast %cst_86 : f32 to vector<8x8xf32>
    %260 = arith.mulf %258, %259 : vector<8x8xf32>
    %261 = arith.addf %260, %141 : vector<8x8xf32>
    %cst_87 = arith.constant dense<0xFF800000> : vector<8xf32>
    %262 = vector.multi_reduction <maximumf>, %261, %cst_87 [1] : vector<8x8xf32> to vector<8xf32>
    %263 = vector.shape_cast %262 : vector<8xf32> to vector<8x1xf32>
    %264 = vector.broadcast %263 : vector<8x1xf32> to vector<8x8xf32>
    %265 = arith.subf %261, %264 : vector<8x8xf32>
    %266 = math.exp %265 : vector<8x8xf32>
    %cst_88 = arith.constant dense<0.000000e+00> : vector<8xf32>
    %267 = vector.multi_reduction <add>, %266, %cst_88 [1] : vector<8x8xf32> to vector<8xf32>
    %268 = vector.shape_cast %267 : vector<8xf32> to vector<8x1xf32>
    %269 = tpu.reciprocal %268 {approx = true} : vector<8x1xf32> -> vector<8x1xf32>
    %270 = vector.broadcast %269 : vector<8x1xf32> to vector<8x8xf32>
    %271 = arith.mulf %266, %270 : vector<8x8xf32>
    %272 = arith.truncf %271 : vector<8x8xf32> to vector<8x8xbf16>
    %cst_89 = arith.constant dense<0.000000e+00> : vector<8x32xf32>
    %273 = tpu.matmul %272, %191, %cst_89 {dimension_numbers = #tpu.dot_dimension_numbers<[1], [0], [0], [1], [0, 0, 1, 1], [], []>} : vector<8x8xbf16>, vector<8x32xbf16>, vector<8x32xf32> -> vector<8x32xf32>
    %274 = vector.broadcast %171 : vector<1x32xf32> to vector<8x32xf32>
    %275 = arith.mulf %273, %274 : vector<8x32xf32>
    %276 = arith.addf %255, %275 : vector<8x32xf32>
    %277 = vector.extract_strided_slice %189 {offsets = [8, 64], sizes = [8, 32], strides = [1, 1]} : vector<16x96xf32> to vector<8x32xf32>
    %278 = arith.truncf %277 : vector<8x32xf32> to vector<8x32xbf16>
    %cst_90 = arith.constant 0.000000e+00 : f32
    %279 = vector.broadcast %cst_90 : f32 to vector<8x32xf32>
    %280 = vector.extract_strided_slice %189 {offsets = [8, 0], sizes = [8, 8], strides = [1, 1]} : vector<16x96xf32> to vector<8x8xf32>
    %281 = vector.extract_strided_slice %189 {offsets = [8, 32], sizes = [8, 8], strides = [1, 1]} : vector<16x96xf32> to vector<8x8xf32>
    %cst_91 = arith.constant dense<0.000000e+00> : vector<8x8xf32>
    %282 = tpu.matmul %280, %281, %cst_91 {dimension_numbers = #tpu.dot_dimension_numbers<[1], [1], [0], [0], [0, 0, 1, 0], [], []>} : vector<8x8xf32>, vector<8x8xf32>, vector<8x8xf32> -> vector<8x8xf32>
    %cst_92 = arith.constant 0.353553385 : f32
    %283 = vector.broadcast %cst_92 : f32 to vector<8x8xf32>
    %284 = arith.mulf %282, %283 : vector<8x8xf32>
    %285 = arith.addf %284, %142 : vector<8x8xf32>
    %cst_93 = arith.constant dense<0xFF800000> : vector<8xf32>
    %286 = vector.multi_reduction <maximumf>, %285, %cst_93 [1] : vector<8x8xf32> to vector<8xf32>
    %287 = vector.shape_cast %286 : vector<8xf32> to vector<8x1xf32>
    %288 = vector.broadcast %287 : vector<8x1xf32> to vector<8x8xf32>
    %289 = arith.subf %285, %288 : vector<8x8xf32>
    %290 = math.exp %289 : vector<8x8xf32>
    %cst_94 = arith.constant dense<0.000000e+00> : vector<8xf32>
    %291 = vector.multi_reduction <add>, %290, %cst_94 [1] : vector<8x8xf32> to vector<8xf32>
    %292 = vector.shape_cast %291 : vector<8xf32> to vector<8x1xf32>
    %293 = tpu.reciprocal %292 {approx = true} : vector<8x1xf32> -> vector<8x1xf32>
    %294 = vector.broadcast %293 : vector<8x1xf32> to vector<8x8xf32>
    %295 = arith.mulf %290, %294 : vector<8x8xf32>
    %296 = arith.truncf %295 : vector<8x8xf32> to vector<8x8xbf16>
    %cst_95 = arith.constant dense<0.000000e+00> : vector<8x32xf32>
    %297 = tpu.matmul %296, %278, %cst_95 {dimension_numbers = #tpu.dot_dimension_numbers<[1], [0], [0], [1], [0, 0, 1, 1], [], []>} : vector<8x8xbf16>, vector<8x32xbf16>, vector<8x32xf32> -> vector<8x32xf32>
    %298 = vector.broadcast %150 : vector<1x32xf32> to vector<8x32xf32>
    %299 = arith.mulf %297, %298 : vector<8x32xf32>
    %300 = arith.addf %279, %299 : vector<8x32xf32>
    %301 = vector.extract_strided_slice %189 {offsets = [8, 8], sizes = [8, 8], strides = [1, 1]} : vector<16x96xf32> to vector<8x8xf32>
    %302 = vector.extract_strided_slice %189 {offsets = [8, 40], sizes = [8, 8], strides = [1, 1]} : vector<16x96xf32> to vector<8x8xf32>
    %cst_96 = arith.constant dense<0.000000e+00> : vector<8x8xf32>
    %303 = tpu.matmul %301, %302, %cst_96 {dimension_numbers = #tpu.dot_dimension_numbers<[1], [1], [0], [0], [0, 0, 1, 0], [], []>} : vector<8x8xf32>, vector<8x8xf32>, vector<8x8xf32> -> vector<8x8xf32>
    %cst_97 = arith.constant 0.353553385 : f32
    %304 = vector.broadcast %cst_97 : f32 to vector<8x8xf32>
    %305 = arith.mulf %303, %304 : vector<8x8xf32>
    %306 = arith.addf %305, %142 : vector<8x8xf32>
    %cst_98 = arith.constant dense<0xFF800000> : vector<8xf32>
    %307 = vector.multi_reduction <maximumf>, %306, %cst_98 [1] : vector<8x8xf32> to vector<8xf32>
    %308 = vector.shape_cast %307 : vector<8xf32> to vector<8x1xf32>
    %309 = vector.broadcast %308 : vector<8x1xf32> to vector<8x8xf32>
    %310 = arith.subf %306, %309 : vector<8x8xf32>
    %311 = math.exp %310 : vector<8x8xf32>
    %cst_99 = arith.constant dense<0.000000e+00> : vector<8xf32>
    %312 = vector.multi_reduction <add>, %311, %cst_99 [1] : vector<8x8xf32> to vector<8xf32>
    %313 = vector.shape_cast %312 : vector<8xf32> to vector<8x1xf32>
    %314 = tpu.reciprocal %313 {approx = true} : vector<8x1xf32> -> vector<8x1xf32>
    %315 = vector.broadcast %314 : vector<8x1xf32> to vector<8x8xf32>
    %316 = arith.mulf %311, %315 : vector<8x8xf32>
    %317 = arith.truncf %316 : vector<8x8xf32> to vector<8x8xbf16>
    %cst_100 = arith.constant dense<0.000000e+00> : vector<8x32xf32>
    %318 = tpu.matmul %317, %278, %cst_100 {dimension_numbers = #tpu.dot_dimension_numbers<[1], [0], [0], [1], [0, 0, 1, 1], [], []>} : vector<8x8xbf16>, vector<8x32xbf16>, vector<8x32xf32> -> vector<8x32xf32>
    %319 = vector.broadcast %157 : vector<1x32xf32> to vector<8x32xf32>
    %320 = arith.mulf %318, %319 : vector<8x32xf32>
    %321 = arith.addf %300, %320 : vector<8x32xf32>
    %322 = vector.extract_strided_slice %189 {offsets = [8, 16], sizes = [8, 8], strides = [1, 1]} : vector<16x96xf32> to vector<8x8xf32>
    %323 = vector.extract_strided_slice %189 {offsets = [8, 48], sizes = [8, 8], strides = [1, 1]} : vector<16x96xf32> to vector<8x8xf32>
    %cst_101 = arith.constant dense<0.000000e+00> : vector<8x8xf32>
    %324 = tpu.matmul %322, %323, %cst_101 {dimension_numbers = #tpu.dot_dimension_numbers<[1], [1], [0], [0], [0, 0, 1, 0], [], []>} : vector<8x8xf32>, vector<8x8xf32>, vector<8x8xf32> -> vector<8x8xf32>
    %cst_102 = arith.constant 0.353553385 : f32
    %325 = vector.broadcast %cst_102 : f32 to vector<8x8xf32>
    %326 = arith.mulf %324, %325 : vector<8x8xf32>
    %327 = arith.addf %326, %142 : vector<8x8xf32>
    %cst_103 = arith.constant dense<0xFF800000> : vector<8xf32>
    %328 = vector.multi_reduction <maximumf>, %327, %cst_103 [1] : vector<8x8xf32> to vector<8xf32>
    %329 = vector.shape_cast %328 : vector<8xf32> to vector<8x1xf32>
    %330 = vector.broadcast %329 : vector<8x1xf32> to vector<8x8xf32>
    %331 = arith.subf %327, %330 : vector<8x8xf32>
    %332 = math.exp %331 : vector<8x8xf32>
    %cst_104 = arith.constant dense<0.000000e+00> : vector<8xf32>
    %333 = vector.multi_reduction <add>, %332, %cst_104 [1] : vector<8x8xf32> to vector<8xf32>
    %334 = vector.shape_cast %333 : vector<8xf32> to vector<8x1xf32>
    %335 = tpu.reciprocal %334 {approx = true} : vector<8x1xf32> -> vector<8x1xf32>
    %336 = vector.broadcast %335 : vector<8x1xf32> to vector<8x8xf32>
    %337 = arith.mulf %332, %336 : vector<8x8xf32>
    %338 = arith.truncf %337 : vector<8x8xf32> to vector<8x8xbf16>
    %cst_105 = arith.constant dense<0.000000e+00> : vector<8x32xf32>
    %339 = tpu.matmul %338, %278, %cst_105 {dimension_numbers = #tpu.dot_dimension_numbers<[1], [0], [0], [1], [0, 0, 1, 1], [], []>} : vector<8x8xbf16>, vector<8x32xbf16>, vector<8x32xf32> -> vector<8x32xf32>
    %340 = vector.broadcast %164 : vector<1x32xf32> to vector<8x32xf32>
    %341 = arith.mulf %339, %340 : vector<8x32xf32>
    %342 = arith.addf %321, %341 : vector<8x32xf32>
    %343 = vector.extract_strided_slice %189 {offsets = [8, 24], sizes = [8, 8], strides = [1, 1]} : vector<16x96xf32> to vector<8x8xf32>
    %344 = vector.extract_strided_slice %189 {offsets = [8, 56], sizes = [8, 8], strides = [1, 1]} : vector<16x96xf32> to vector<8x8xf32>
    %cst_106 = arith.constant dense<0.000000e+00> : vector<8x8xf32>
    %345 = tpu.matmul %343, %344, %cst_106 {dimension_numbers = #tpu.dot_dimension_numbers<[1], [1], [0], [0], [0, 0, 1, 0], [], []>} : vector<8x8xf32>, vector<8x8xf32>, vector<8x8xf32> -> vector<8x8xf32>
    %cst_107 = arith.constant 0.353553385 : f32
    %346 = vector.broadcast %cst_107 : f32 to vector<8x8xf32>
    %347 = arith.mulf %345, %346 : vector<8x8xf32>
    %348 = arith.addf %347, %142 : vector<8x8xf32>
    %cst_108 = arith.constant dense<0xFF800000> : vector<8xf32>
    %349 = vector.multi_reduction <maximumf>, %348, %cst_108 [1] : vector<8x8xf32> to vector<8xf32>
    %350 = vector.shape_cast %349 : vector<8xf32> to vector<8x1xf32>
    %351 = vector.broadcast %350 : vector<8x1xf32> to vector<8x8xf32>
    %352 = arith.subf %348, %351 : vector<8x8xf32>
    %353 = math.exp %352 : vector<8x8xf32>
    %cst_109 = arith.constant dense<0.000000e+00> : vector<8xf32>
    %354 = vector.multi_reduction <add>, %353, %cst_109 [1] : vector<8x8xf32> to vector<8xf32>
    %355 = vector.shape_cast %354 : vector<8xf32> to vector<8x1xf32>
    %356 = tpu.reciprocal %355 {approx = true} : vector<8x1xf32> -> vector<8x1xf32>
    %357 = vector.broadcast %356 : vector<8x1xf32> to vector<8x8xf32>
    %358 = arith.mulf %353, %357 : vector<8x8xf32>
    %359 = arith.truncf %358 : vector<8x8xf32> to vector<8x8xbf16>
    %cst_110 = arith.constant dense<0.000000e+00> : vector<8x32xf32>
    %360 = tpu.matmul %359, %278, %cst_110 {dimension_numbers = #tpu.dot_dimension_numbers<[1], [0], [0], [1], [0, 0, 1, 1], [], []>} : vector<8x8xbf16>, vector<8x32xbf16>, vector<8x32xf32> -> vector<8x32xf32>
    %361 = vector.broadcast %171 : vector<1x32xf32> to vector<8x32xf32>
    %362 = arith.mulf %360, %361 : vector<8x32xf32>
    %363 = arith.addf %342, %362 : vector<8x32xf32>
    %364 = tpu.concatenate %276, %363 in 0 : vector<8x32xf32>, vector<8x32xf32> -> vector<16x32xf32>
    %365 = arith.truncf %364 : vector<16x32xf32> to vector<16x32xbf16>
    %cst_111 = arith.constant dense<0.000000e+00> : vector<16x32xf32>
    %366 = tpu.matmul %365, %177, %cst_111 {dimension_numbers = #tpu.dot_dimension_numbers<[1], [0], [0], [1], [0, 0, 1, 1], [], []>} : vector<16x32xbf16>, vector<32x32xbf16>, vector<16x32xf32> -> vector<16x32xf32>
    %367 = vector.extract_strided_slice %179 {offsets = [0, 0], sizes = [1, 32], strides = [1, 1]} : vector<6x32xf32> to vector<1x32xf32>
    %368 = vector.broadcast %367 : vector<1x32xf32> to vector<16x32xf32>
    %369 = arith.addf %366, %368 : vector<16x32xf32>
    %370 = arith.addf %33, %369 : vector<16x32xf32>
    %371 = vector.extract_strided_slice %179 {offsets = [1, 0], sizes = [1, 32], strides = [1, 1]} : vector<6x32xf32> to vector<1x32xf32>
    %372 = vector.extract_strided_slice %179 {offsets = [2, 0], sizes = [1, 32], strides = [1, 1]} : vector<6x32xf32> to vector<1x32xf32>
    %cst_112 = arith.constant dense<0.000000e+00> : vector<16xf32>
    %373 = vector.multi_reduction <add>, %370, %cst_112 [1] : vector<16x32xf32> to vector<16xf32>
    %374 = vector.shape_cast %373 : vector<16xf32> to vector<16x1xf32>
    %cst_113 = arith.constant 3.200000e+01 : f32
    %375 = vector.broadcast %cst_113 : f32 to vector<16x1xf32>
    %376 = arith.divf %374, %375 : vector<16x1xf32>
    %377 = vector.broadcast %376 : vector<16x1xf32> to vector<16x32xf32>
    %378 = arith.subf %370, %377 : vector<16x32xf32>
    %379 = arith.mulf %378, %378 : vector<16x32xf32>
    %cst_114 = arith.constant dense<0.000000e+00> : vector<16xf32>
    %380 = vector.multi_reduction <add>, %379, %cst_114 [1] : vector<16x32xf32> to vector<16xf32>
    %381 = vector.shape_cast %380 : vector<16xf32> to vector<16x1xf32>
    %cst_115 = arith.constant 3.200000e+01 : f32
    %382 = vector.broadcast %cst_115 : f32 to vector<16x1xf32>
    %383 = arith.divf %381, %382 : vector<16x1xf32>
    %384 = vector.broadcast %376 : vector<16x1xf32> to vector<16x32xf32>
    %385 = arith.subf %370, %384 : vector<16x32xf32>
    %cst_116 = arith.constant 9.99999997E-7 : f32
    %386 = vector.broadcast %cst_116 : f32 to vector<16x1xf32>
    %387 = arith.addf %383, %386 : vector<16x1xf32>
    %388 = math.rsqrt %387 : vector<16x1xf32>
    %389 = vector.broadcast %388 : vector<16x1xf32> to vector<16x32xf32>
    %390 = arith.mulf %385, %389 : vector<16x32xf32>
    %391 = vector.broadcast %371 : vector<1x32xf32> to vector<16x32xf32>
    %392 = arith.mulf %390, %391 : vector<16x32xf32>
    %393 = vector.broadcast %372 : vector<1x32xf32> to vector<16x32xf32>
    %394 = arith.addf %392, %393 : vector<16x32xf32>
    %395 = arith.truncf %394 : vector<16x32xf32> to vector<16x32xbf16>
    %cst_117 = arith.constant dense<0.000000e+00> : vector<16x64xf32>
    %396 = tpu.matmul %395, %181, %cst_117 {dimension_numbers = #tpu.dot_dimension_numbers<[1], [0], [0], [1], [0, 0, 1, 1], [], []>} : vector<16x32xbf16>, vector<32x64xbf16>, vector<16x64xf32> -> vector<16x64xf32>
    %397 = vector.broadcast %183 : vector<1x64xf32> to vector<16x64xf32>
    %398 = arith.addf %396, %397 : vector<16x64xf32>
    %399 = arith.mulf %398, %398 : vector<16x64xf32>
    %400 = arith.mulf %398, %399 : vector<16x64xf32>
    %cst_118 = arith.constant 4.471500e-02 : f32
    %401 = vector.broadcast %cst_118 : f32 to vector<16x64xf32>
    %402 = arith.mulf %401, %400 : vector<16x64xf32>
    %403 = arith.addf %398, %402 : vector<16x64xf32>
    %cst_119 = arith.constant 0.797884583 : f32
    %404 = vector.broadcast %cst_119 : f32 to vector<16x64xf32>
    %405 = arith.mulf %404, %403 : vector<16x64xf32>
    %406 = math.tanh %405 : vector<16x64xf32>
    %cst_120 = arith.constant 1.000000e+00 : f32
    %407 = vector.broadcast %cst_120 : f32 to vector<16x64xf32>
    %408 = arith.addf %407, %406 : vector<16x64xf32>
    %cst_121 = arith.constant 5.000000e-01 : f32
    %409 = vector.broadcast %cst_121 : f32 to vector<16x64xf32>
    %410 = arith.mulf %409, %408 : vector<16x64xf32>
    %411 = arith.mulf %398, %410 : vector<16x64xf32>
    %412 = arith.truncf %411 : vector<16x64xf32> to vector<16x64xbf16>
    %cst_122 = arith.constant dense<0.000000e+00> : vector<16x32xf32>
    %413 = tpu.matmul %412, %185, %cst_122 {dimension_numbers = #tpu.dot_dimension_numbers<[1], [0], [0], [1], [0, 0, 1, 1], [], []>} : vector<16x64xbf16>, vector<64x32xbf16>, vector<16x32xf32> -> vector<16x32xf32>
    %414 = vector.extract_strided_slice %179 {offsets = [3, 0], sizes = [1, 32], strides = [1, 1]} : vector<6x32xf32> to vector<1x32xf32>
    %415 = vector.broadcast %414 : vector<1x32xf32> to vector<16x32xf32>
    %416 = arith.addf %413, %415 : vector<16x32xf32>
    %417 = arith.addf %394, %416 : vector<16x32xf32>
    %418 = vector.extract_strided_slice %179 {offsets = [4, 0], sizes = [1, 32], strides = [1, 1]} : vector<6x32xf32> to vector<1x32xf32>
    %419 = vector.extract_strided_slice %179 {offsets = [5, 0], sizes = [1, 32], strides = [1, 1]} : vector<6x32xf32> to vector<1x32xf32>
    %cst_123 = arith.constant dense<0.000000e+00> : vector<16xf32>
    %420 = vector.multi_reduction <add>, %417, %cst_123 [1] : vector<16x32xf32> to vector<16xf32>
    %421 = vector.shape_cast %420 : vector<16xf32> to vector<16x1xf32>
    %cst_124 = arith.constant 3.200000e+01 : f32
    %422 = vector.broadcast %cst_124 : f32 to vector<16x1xf32>
    %423 = arith.divf %421, %422 : vector<16x1xf32>
    %424 = vector.broadcast %423 : vector<16x1xf32> to vector<16x32xf32>
    %425 = arith.subf %417, %424 : vector<16x32xf32>
    %426 = arith.mulf %425, %425 : vector<16x32xf32>
    %cst_125 = arith.constant dense<0.000000e+00> : vector<16xf32>
    %427 = vector.multi_reduction <add>, %426, %cst_125 [1] : vector<16x32xf32> to vector<16xf32>
    %428 = vector.shape_cast %427 : vector<16xf32> to vector<16x1xf32>
    %cst_126 = arith.constant 3.200000e+01 : f32
    %429 = vector.broadcast %cst_126 : f32 to vector<16x1xf32>
    %430 = arith.divf %428, %429 : vector<16x1xf32>
    %431 = vector.broadcast %423 : vector<16x1xf32> to vector<16x32xf32>
    %432 = arith.subf %417, %431 : vector<16x32xf32>
    %cst_127 = arith.constant 9.99999997E-7 : f32
    %433 = vector.broadcast %cst_127 : f32 to vector<16x1xf32>
    %434 = arith.addf %430, %433 : vector<16x1xf32>
    %435 = math.rsqrt %434 : vector<16x1xf32>
    %436 = vector.broadcast %435 : vector<16x1xf32> to vector<16x32xf32>
    %437 = arith.mulf %432, %436 : vector<16x32xf32>
    %438 = vector.broadcast %418 : vector<1x32xf32> to vector<16x32xf32>
    %439 = arith.mulf %437, %438 : vector<16x32xf32>
    %440 = vector.broadcast %419 : vector<1x32xf32> to vector<16x32xf32>
    %441 = arith.addf %439, %440 : vector<16x32xf32>
    %c1 = arith.constant 1 : index
    %c0_128 = arith.constant 0 : index
    %c0_129 = arith.constant 0 : index
    %442 = vector.load %arg9[%c1, %c0_128, %c0_129] : memref<2x32x96xbf16, #tpu.memory_space<vmem>>, vector<1x32x96xbf16>
    %443 = vector.shape_cast %442 : vector<1x32x96xbf16> to vector<32x96xbf16>
    %c1_130 = arith.constant 1 : index
    %c0_131 = arith.constant 0 : index
    %c0_132 = arith.constant 0 : index
    %444 = vector.load %arg10[%c1_130, %c0_131, %c0_132] : memref<2x1x96xf32, #tpu.memory_space<vmem>>, vector<1x1x96xf32>
    %445 = vector.shape_cast %444 : vector<1x1x96xf32> to vector<1x96xf32>
    %c1_133 = arith.constant 1 : index
    %c0_134 = arith.constant 0 : index
    %c0_135 = arith.constant 0 : index
    %446 = vector.load %arg11[%c1_133, %c0_134, %c0_135] : memref<2x32x32xbf16, #tpu.memory_space<vmem>>, vector<1x32x32xbf16>
    %447 = vector.shape_cast %446 : vector<1x32x32xbf16> to vector<32x32xbf16>
    %c1_136 = arith.constant 1 : index
    %c0_137 = arith.constant 0 : index
    %c0_138 = arith.constant 0 : index
    %448 = vector.load %arg12[%c1_136, %c0_137, %c0_138] : memref<2x6x32xf32, #tpu.memory_space<vmem>>, vector<1x6x32xf32>
    %449 = vector.shape_cast %448 : vector<1x6x32xf32> to vector<6x32xf32>
    %c1_139 = arith.constant 1 : index
    %c0_140 = arith.constant 0 : index
    %c0_141 = arith.constant 0 : index
    %450 = vector.load %arg13[%c1_139, %c0_140, %c0_141] : memref<2x32x64xbf16, #tpu.memory_space<vmem>>, vector<1x32x64xbf16>
    %451 = vector.shape_cast %450 : vector<1x32x64xbf16> to vector<32x64xbf16>
    %c1_142 = arith.constant 1 : index
    %c0_143 = arith.constant 0 : index
    %c0_144 = arith.constant 0 : index
    %452 = vector.load %arg14[%c1_142, %c0_143, %c0_144] : memref<2x1x64xf32, #tpu.memory_space<vmem>>, vector<1x1x64xf32>
    %453 = vector.shape_cast %452 : vector<1x1x64xf32> to vector<1x64xf32>
    %c1_145 = arith.constant 1 : index
    %c0_146 = arith.constant 0 : index
    %c0_147 = arith.constant 0 : index
    %454 = vector.load %arg15[%c1_145, %c0_146, %c0_147] : memref<2x64x32xbf16, #tpu.memory_space<vmem>>, vector<1x64x32xbf16>
    %455 = vector.shape_cast %454 : vector<1x64x32xbf16> to vector<64x32xbf16>
    %456 = arith.truncf %441 : vector<16x32xf32> to vector<16x32xbf16>
    %cst_148 = arith.constant dense<0.000000e+00> : vector<16x96xf32>
    %457 = tpu.matmul %456, %443, %cst_148 {dimension_numbers = #tpu.dot_dimension_numbers<[1], [0], [0], [1], [0, 0, 1, 1], [], []>} : vector<16x32xbf16>, vector<32x96xbf16>, vector<16x96xf32> -> vector<16x96xf32>
    %458 = vector.broadcast %445 : vector<1x96xf32> to vector<16x96xf32>
    %459 = arith.addf %457, %458 : vector<16x96xf32>
    %460 = vector.extract_strided_slice %459 {offsets = [0, 64], sizes = [8, 32], strides = [1, 1]} : vector<16x96xf32> to vector<8x32xf32>
    %461 = arith.truncf %460 : vector<8x32xf32> to vector<8x32xbf16>
    %cst_149 = arith.constant 0.000000e+00 : f32
    %462 = vector.broadcast %cst_149 : f32 to vector<8x32xf32>
    %463 = vector.extract_strided_slice %459 {offsets = [0, 0], sizes = [8, 8], strides = [1, 1]} : vector<16x96xf32> to vector<8x8xf32>
    %464 = vector.extract_strided_slice %459 {offsets = [0, 32], sizes = [8, 8], strides = [1, 1]} : vector<16x96xf32> to vector<8x8xf32>
    %cst_150 = arith.constant dense<0.000000e+00> : vector<8x8xf32>
    %465 = tpu.matmul %463, %464, %cst_150 {dimension_numbers = #tpu.dot_dimension_numbers<[1], [1], [0], [0], [0, 0, 1, 0], [], []>} : vector<8x8xf32>, vector<8x8xf32>, vector<8x8xf32> -> vector<8x8xf32>
    %cst_151 = arith.constant 0.353553385 : f32
    %466 = vector.broadcast %cst_151 : f32 to vector<8x8xf32>
    %467 = arith.mulf %465, %466 : vector<8x8xf32>
    %468 = arith.addf %467, %141 : vector<8x8xf32>
    %cst_152 = arith.constant dense<0xFF800000> : vector<8xf32>
    %469 = vector.multi_reduction <maximumf>, %468, %cst_152 [1] : vector<8x8xf32> to vector<8xf32>
    %470 = vector.shape_cast %469 : vector<8xf32> to vector<8x1xf32>
    %471 = vector.broadcast %470 : vector<8x1xf32> to vector<8x8xf32>
    %472 = arith.subf %468, %471 : vector<8x8xf32>
    %473 = math.exp %472 : vector<8x8xf32>
    %cst_153 = arith.constant dense<0.000000e+00> : vector<8xf32>
    %474 = vector.multi_reduction <add>, %473, %cst_153 [1] : vector<8x8xf32> to vector<8xf32>
    %475 = vector.shape_cast %474 : vector<8xf32> to vector<8x1xf32>
    %476 = tpu.reciprocal %475 {approx = true} : vector<8x1xf32> -> vector<8x1xf32>
    %477 = vector.broadcast %476 : vector<8x1xf32> to vector<8x8xf32>
    %478 = arith.mulf %473, %477 : vector<8x8xf32>
    %479 = arith.truncf %478 : vector<8x8xf32> to vector<8x8xbf16>
    %cst_154 = arith.constant dense<0.000000e+00> : vector<8x32xf32>
    %480 = tpu.matmul %479, %461, %cst_154 {dimension_numbers = #tpu.dot_dimension_numbers<[1], [0], [0], [1], [0, 0, 1, 1], [], []>} : vector<8x8xbf16>, vector<8x32xbf16>, vector<8x32xf32> -> vector<8x32xf32>
    %481 = vector.broadcast %150 : vector<1x32xf32> to vector<8x32xf32>
    %482 = arith.mulf %480, %481 : vector<8x32xf32>
    %483 = arith.addf %462, %482 : vector<8x32xf32>
    %484 = vector.extract_strided_slice %459 {offsets = [0, 8], sizes = [8, 8], strides = [1, 1]} : vector<16x96xf32> to vector<8x8xf32>
    %485 = vector.extract_strided_slice %459 {offsets = [0, 40], sizes = [8, 8], strides = [1, 1]} : vector<16x96xf32> to vector<8x8xf32>
    %cst_155 = arith.constant dense<0.000000e+00> : vector<8x8xf32>
    %486 = tpu.matmul %484, %485, %cst_155 {dimension_numbers = #tpu.dot_dimension_numbers<[1], [1], [0], [0], [0, 0, 1, 0], [], []>} : vector<8x8xf32>, vector<8x8xf32>, vector<8x8xf32> -> vector<8x8xf32>
    %cst_156 = arith.constant 0.353553385 : f32
    %487 = vector.broadcast %cst_156 : f32 to vector<8x8xf32>
    %488 = arith.mulf %486, %487 : vector<8x8xf32>
    %489 = arith.addf %488, %141 : vector<8x8xf32>
    %cst_157 = arith.constant dense<0xFF800000> : vector<8xf32>
    %490 = vector.multi_reduction <maximumf>, %489, %cst_157 [1] : vector<8x8xf32> to vector<8xf32>
    %491 = vector.shape_cast %490 : vector<8xf32> to vector<8x1xf32>
    %492 = vector.broadcast %491 : vector<8x1xf32> to vector<8x8xf32>
    %493 = arith.subf %489, %492 : vector<8x8xf32>
    %494 = math.exp %493 : vector<8x8xf32>
    %cst_158 = arith.constant dense<0.000000e+00> : vector<8xf32>
    %495 = vector.multi_reduction <add>, %494, %cst_158 [1] : vector<8x8xf32> to vector<8xf32>
    %496 = vector.shape_cast %495 : vector<8xf32> to vector<8x1xf32>
    %497 = tpu.reciprocal %496 {approx = true} : vector<8x1xf32> -> vector<8x1xf32>
    %498 = vector.broadcast %497 : vector<8x1xf32> to vector<8x8xf32>
    %499 = arith.mulf %494, %498 : vector<8x8xf32>
    %500 = arith.truncf %499 : vector<8x8xf32> to vector<8x8xbf16>
    %cst_159 = arith.constant dense<0.000000e+00> : vector<8x32xf32>
    %501 = tpu.matmul %500, %461, %cst_159 {dimension_numbers = #tpu.dot_dimension_numbers<[1], [0], [0], [1], [0, 0, 1, 1], [], []>} : vector<8x8xbf16>, vector<8x32xbf16>, vector<8x32xf32> -> vector<8x32xf32>
    %502 = vector.broadcast %157 : vector<1x32xf32> to vector<8x32xf32>
    %503 = arith.mulf %501, %502 : vector<8x32xf32>
    %504 = arith.addf %483, %503 : vector<8x32xf32>
    %505 = vector.extract_strided_slice %459 {offsets = [0, 16], sizes = [8, 8], strides = [1, 1]} : vector<16x96xf32> to vector<8x8xf32>
    %506 = vector.extract_strided_slice %459 {offsets = [0, 48], sizes = [8, 8], strides = [1, 1]} : vector<16x96xf32> to vector<8x8xf32>
    %cst_160 = arith.constant dense<0.000000e+00> : vector<8x8xf32>
    %507 = tpu.matmul %505, %506, %cst_160 {dimension_numbers = #tpu.dot_dimension_numbers<[1], [1], [0], [0], [0, 0, 1, 0], [], []>} : vector<8x8xf32>, vector<8x8xf32>, vector<8x8xf32> -> vector<8x8xf32>
    %cst_161 = arith.constant 0.353553385 : f32
    %508 = vector.broadcast %cst_161 : f32 to vector<8x8xf32>
    %509 = arith.mulf %507, %508 : vector<8x8xf32>
    %510 = arith.addf %509, %141 : vector<8x8xf32>
    %cst_162 = arith.constant dense<0xFF800000> : vector<8xf32>
    %511 = vector.multi_reduction <maximumf>, %510, %cst_162 [1] : vector<8x8xf32> to vector<8xf32>
    %512 = vector.shape_cast %511 : vector<8xf32> to vector<8x1xf32>
    %513 = vector.broadcast %512 : vector<8x1xf32> to vector<8x8xf32>
    %514 = arith.subf %510, %513 : vector<8x8xf32>
    %515 = math.exp %514 : vector<8x8xf32>
    %cst_163 = arith.constant dense<0.000000e+00> : vector<8xf32>
    %516 = vector.multi_reduction <add>, %515, %cst_163 [1] : vector<8x8xf32> to vector<8xf32>
    %517 = vector.shape_cast %516 : vector<8xf32> to vector<8x1xf32>
    %518 = tpu.reciprocal %517 {approx = true} : vector<8x1xf32> -> vector<8x1xf32>
    %519 = vector.broadcast %518 : vector<8x1xf32> to vector<8x8xf32>
    %520 = arith.mulf %515, %519 : vector<8x8xf32>
    %521 = arith.truncf %520 : vector<8x8xf32> to vector<8x8xbf16>
    %cst_164 = arith.constant dense<0.000000e+00> : vector<8x32xf32>
    %522 = tpu.matmul %521, %461, %cst_164 {dimension_numbers = #tpu.dot_dimension_numbers<[1], [0], [0], [1], [0, 0, 1, 1], [], []>} : vector<8x8xbf16>, vector<8x32xbf16>, vector<8x32xf32> -> vector<8x32xf32>
    %523 = vector.broadcast %164 : vector<1x32xf32> to vector<8x32xf32>
    %524 = arith.mulf %522, %523 : vector<8x32xf32>
    %525 = arith.addf %504, %524 : vector<8x32xf32>
    %526 = vector.extract_strided_slice %459 {offsets = [0, 24], sizes = [8, 8], strides = [1, 1]} : vector<16x96xf32> to vector<8x8xf32>
    %527 = vector.extract_strided_slice %459 {offsets = [0, 56], sizes = [8, 8], strides = [1, 1]} : vector<16x96xf32> to vector<8x8xf32>
    %cst_165 = arith.constant dense<0.000000e+00> : vector<8x8xf32>
    %528 = tpu.matmul %526, %527, %cst_165 {dimension_numbers = #tpu.dot_dimension_numbers<[1], [1], [0], [0], [0, 0, 1, 0], [], []>} : vector<8x8xf32>, vector<8x8xf32>, vector<8x8xf32> -> vector<8x8xf32>
    %cst_166 = arith.constant 0.353553385 : f32
    %529 = vector.broadcast %cst_166 : f32 to vector<8x8xf32>
    %530 = arith.mulf %528, %529 : vector<8x8xf32>
    %531 = arith.addf %530, %141 : vector<8x8xf32>
    %cst_167 = arith.constant dense<0xFF800000> : vector<8xf32>
    %532 = vector.multi_reduction <maximumf>, %531, %cst_167 [1] : vector<8x8xf32> to vector<8xf32>
    %533 = vector.shape_cast %532 : vector<8xf32> to vector<8x1xf32>
    %534 = vector.broadcast %533 : vector<8x1xf32> to vector<8x8xf32>
    %535 = arith.subf %531, %534 : vector<8x8xf32>
    %536 = math.exp %535 : vector<8x8xf32>
    %cst_168 = arith.constant dense<0.000000e+00> : vector<8xf32>
    %537 = vector.multi_reduction <add>, %536, %cst_168 [1] : vector<8x8xf32> to vector<8xf32>
    %538 = vector.shape_cast %537 : vector<8xf32> to vector<8x1xf32>
    %539 = tpu.reciprocal %538 {approx = true} : vector<8x1xf32> -> vector<8x1xf32>
    %540 = vector.broadcast %539 : vector<8x1xf32> to vector<8x8xf32>
    %541 = arith.mulf %536, %540 : vector<8x8xf32>
    %542 = arith.truncf %541 : vector<8x8xf32> to vector<8x8xbf16>
    %cst_169 = arith.constant dense<0.000000e+00> : vector<8x32xf32>
    %543 = tpu.matmul %542, %461, %cst_169 {dimension_numbers = #tpu.dot_dimension_numbers<[1], [0], [0], [1], [0, 0, 1, 1], [], []>} : vector<8x8xbf16>, vector<8x32xbf16>, vector<8x32xf32> -> vector<8x32xf32>
    %544 = vector.broadcast %171 : vector<1x32xf32> to vector<8x32xf32>
    %545 = arith.mulf %543, %544 : vector<8x32xf32>
    %546 = arith.addf %525, %545 : vector<8x32xf32>
    %547 = vector.extract_strided_slice %459 {offsets = [8, 64], sizes = [8, 32], strides = [1, 1]} : vector<16x96xf32> to vector<8x32xf32>
    %548 = arith.truncf %547 : vector<8x32xf32> to vector<8x32xbf16>
    %cst_170 = arith.constant 0.000000e+00 : f32
    %549 = vector.broadcast %cst_170 : f32 to vector<8x32xf32>
    %550 = vector.extract_strided_slice %459 {offsets = [8, 0], sizes = [8, 8], strides = [1, 1]} : vector<16x96xf32> to vector<8x8xf32>
    %551 = vector.extract_strided_slice %459 {offsets = [8, 32], sizes = [8, 8], strides = [1, 1]} : vector<16x96xf32> to vector<8x8xf32>
    %cst_171 = arith.constant dense<0.000000e+00> : vector<8x8xf32>
    %552 = tpu.matmul %550, %551, %cst_171 {dimension_numbers = #tpu.dot_dimension_numbers<[1], [1], [0], [0], [0, 0, 1, 0], [], []>} : vector<8x8xf32>, vector<8x8xf32>, vector<8x8xf32> -> vector<8x8xf32>
    %cst_172 = arith.constant 0.353553385 : f32
    %553 = vector.broadcast %cst_172 : f32 to vector<8x8xf32>
    %554 = arith.mulf %552, %553 : vector<8x8xf32>
    %555 = arith.addf %554, %142 : vector<8x8xf32>
    %cst_173 = arith.constant dense<0xFF800000> : vector<8xf32>
    %556 = vector.multi_reduction <maximumf>, %555, %cst_173 [1] : vector<8x8xf32> to vector<8xf32>
    %557 = vector.shape_cast %556 : vector<8xf32> to vector<8x1xf32>
    %558 = vector.broadcast %557 : vector<8x1xf32> to vector<8x8xf32>
    %559 = arith.subf %555, %558 : vector<8x8xf32>
    %560 = math.exp %559 : vector<8x8xf32>
    %cst_174 = arith.constant dense<0.000000e+00> : vector<8xf32>
    %561 = vector.multi_reduction <add>, %560, %cst_174 [1] : vector<8x8xf32> to vector<8xf32>
    %562 = vector.shape_cast %561 : vector<8xf32> to vector<8x1xf32>
    %563 = tpu.reciprocal %562 {approx = true} : vector<8x1xf32> -> vector<8x1xf32>
    %564 = vector.broadcast %563 : vector<8x1xf32> to vector<8x8xf32>
    %565 = arith.mulf %560, %564 : vector<8x8xf32>
    %566 = arith.truncf %565 : vector<8x8xf32> to vector<8x8xbf16>
    %cst_175 = arith.constant dense<0.000000e+00> : vector<8x32xf32>
    %567 = tpu.matmul %566, %548, %cst_175 {dimension_numbers = #tpu.dot_dimension_numbers<[1], [0], [0], [1], [0, 0, 1, 1], [], []>} : vector<8x8xbf16>, vector<8x32xbf16>, vector<8x32xf32> -> vector<8x32xf32>
    %568 = vector.broadcast %150 : vector<1x32xf32> to vector<8x32xf32>
    %569 = arith.mulf %567, %568 : vector<8x32xf32>
    %570 = arith.addf %549, %569 : vector<8x32xf32>
    %571 = vector.extract_strided_slice %459 {offsets = [8, 8], sizes = [8, 8], strides = [1, 1]} : vector<16x96xf32> to vector<8x8xf32>
    %572 = vector.extract_strided_slice %459 {offsets = [8, 40], sizes = [8, 8], strides = [1, 1]} : vector<16x96xf32> to vector<8x8xf32>
    %cst_176 = arith.constant dense<0.000000e+00> : vector<8x8xf32>
    %573 = tpu.matmul %571, %572, %cst_176 {dimension_numbers = #tpu.dot_dimension_numbers<[1], [1], [0], [0], [0, 0, 1, 0], [], []>} : vector<8x8xf32>, vector<8x8xf32>, vector<8x8xf32> -> vector<8x8xf32>
    %cst_177 = arith.constant 0.353553385 : f32
    %574 = vector.broadcast %cst_177 : f32 to vector<8x8xf32>
    %575 = arith.mulf %573, %574 : vector<8x8xf32>
    %576 = arith.addf %575, %142 : vector<8x8xf32>
    %cst_178 = arith.constant dense<0xFF800000> : vector<8xf32>
    %577 = vector.multi_reduction <maximumf>, %576, %cst_178 [1] : vector<8x8xf32> to vector<8xf32>
    %578 = vector.shape_cast %577 : vector<8xf32> to vector<8x1xf32>
    %579 = vector.broadcast %578 : vector<8x1xf32> to vector<8x8xf32>
    %580 = arith.subf %576, %579 : vector<8x8xf32>
    %581 = math.exp %580 : vector<8x8xf32>
    %cst_179 = arith.constant dense<0.000000e+00> : vector<8xf32>
    %582 = vector.multi_reduction <add>, %581, %cst_179 [1] : vector<8x8xf32> to vector<8xf32>
    %583 = vector.shape_cast %582 : vector<8xf32> to vector<8x1xf32>
    %584 = tpu.reciprocal %583 {approx = true} : vector<8x1xf32> -> vector<8x1xf32>
    %585 = vector.broadcast %584 : vector<8x1xf32> to vector<8x8xf32>
    %586 = arith.mulf %581, %585 : vector<8x8xf32>
    %587 = arith.truncf %586 : vector<8x8xf32> to vector<8x8xbf16>
    %cst_180 = arith.constant dense<0.000000e+00> : vector<8x32xf32>
    %588 = tpu.matmul %587, %548, %cst_180 {dimension_numbers = #tpu.dot_dimension_numbers<[1], [0], [0], [1], [0, 0, 1, 1], [], []>} : vector<8x8xbf16>, vector<8x32xbf16>, vector<8x32xf32> -> vector<8x32xf32>
    %589 = vector.broadcast %157 : vector<1x32xf32> to vector<8x32xf32>
    %590 = arith.mulf %588, %589 : vector<8x32xf32>
    %591 = arith.addf %570, %590 : vector<8x32xf32>
    %592 = vector.extract_strided_slice %459 {offsets = [8, 16], sizes = [8, 8], strides = [1, 1]} : vector<16x96xf32> to vector<8x8xf32>
    %593 = vector.extract_strided_slice %459 {offsets = [8, 48], sizes = [8, 8], strides = [1, 1]} : vector<16x96xf32> to vector<8x8xf32>
    %cst_181 = arith.constant dense<0.000000e+00> : vector<8x8xf32>
    %594 = tpu.matmul %592, %593, %cst_181 {dimension_numbers = #tpu.dot_dimension_numbers<[1], [1], [0], [0], [0, 0, 1, 0], [], []>} : vector<8x8xf32>, vector<8x8xf32>, vector<8x8xf32> -> vector<8x8xf32>
    %cst_182 = arith.constant 0.353553385 : f32
    %595 = vector.broadcast %cst_182 : f32 to vector<8x8xf32>
    %596 = arith.mulf %594, %595 : vector<8x8xf32>
    %597 = arith.addf %596, %142 : vector<8x8xf32>
    %cst_183 = arith.constant dense<0xFF800000> : vector<8xf32>
    %598 = vector.multi_reduction <maximumf>, %597, %cst_183 [1] : vector<8x8xf32> to vector<8xf32>
    %599 = vector.shape_cast %598 : vector<8xf32> to vector<8x1xf32>
    %600 = vector.broadcast %599 : vector<8x1xf32> to vector<8x8xf32>
    %601 = arith.subf %597, %600 : vector<8x8xf32>
    %602 = math.exp %601 : vector<8x8xf32>
    %cst_184 = arith.constant dense<0.000000e+00> : vector<8xf32>
    %603 = vector.multi_reduction <add>, %602, %cst_184 [1] : vector<8x8xf32> to vector<8xf32>
    %604 = vector.shape_cast %603 : vector<8xf32> to vector<8x1xf32>
    %605 = tpu.reciprocal %604 {approx = true} : vector<8x1xf32> -> vector<8x1xf32>
    %606 = vector.broadcast %605 : vector<8x1xf32> to vector<8x8xf32>
    %607 = arith.mulf %602, %606 : vector<8x8xf32>
    %608 = arith.truncf %607 : vector<8x8xf32> to vector<8x8xbf16>
    %cst_185 = arith.constant dense<0.000000e+00> : vector<8x32xf32>
    %609 = tpu.matmul %608, %548, %cst_185 {dimension_numbers = #tpu.dot_dimension_numbers<[1], [0], [0], [1], [0, 0, 1, 1], [], []>} : vector<8x8xbf16>, vector<8x32xbf16>, vector<8x32xf32> -> vector<8x32xf32>
    %610 = vector.broadcast %164 : vector<1x32xf32> to vector<8x32xf32>
    %611 = arith.mulf %609, %610 : vector<8x32xf32>
    %612 = arith.addf %591, %611 : vector<8x32xf32>
    %613 = vector.extract_strided_slice %459 {offsets = [8, 24], sizes = [8, 8], strides = [1, 1]} : vector<16x96xf32> to vector<8x8xf32>
    %614 = vector.extract_strided_slice %459 {offsets = [8, 56], sizes = [8, 8], strides = [1, 1]} : vector<16x96xf32> to vector<8x8xf32>
    %cst_186 = arith.constant dense<0.000000e+00> : vector<8x8xf32>
    %615 = tpu.matmul %613, %614, %cst_186 {dimension_numbers = #tpu.dot_dimension_numbers<[1], [1], [0], [0], [0, 0, 1, 0], [], []>} : vector<8x8xf32>, vector<8x8xf32>, vector<8x8xf32> -> vector<8x8xf32>
    %cst_187 = arith.constant 0.353553385 : f32
    %616 = vector.broadcast %cst_187 : f32 to vector<8x8xf32>
    %617 = arith.mulf %615, %616 : vector<8x8xf32>
    %618 = arith.addf %617, %142 : vector<8x8xf32>
    %cst_188 = arith.constant dense<0xFF800000> : vector<8xf32>
    %619 = vector.multi_reduction <maximumf>, %618, %cst_188 [1] : vector<8x8xf32> to vector<8xf32>
    %620 = vector.shape_cast %619 : vector<8xf32> to vector<8x1xf32>
    %621 = vector.broadcast %620 : vector<8x1xf32> to vector<8x8xf32>
    %622 = arith.subf %618, %621 : vector<8x8xf32>
    %623 = math.exp %622 : vector<8x8xf32>
    %cst_189 = arith.constant dense<0.000000e+00> : vector<8xf32>
    %624 = vector.multi_reduction <add>, %623, %cst_189 [1] : vector<8x8xf32> to vector<8xf32>
    %625 = vector.shape_cast %624 : vector<8xf32> to vector<8x1xf32>
    %626 = tpu.reciprocal %625 {approx = true} : vector<8x1xf32> -> vector<8x1xf32>
    %627 = vector.broadcast %626 : vector<8x1xf32> to vector<8x8xf32>
    %628 = arith.mulf %623, %627 : vector<8x8xf32>
    %629 = arith.truncf %628 : vector<8x8xf32> to vector<8x8xbf16>
    %cst_190 = arith.constant dense<0.000000e+00> : vector<8x32xf32>
    %630 = tpu.matmul %629, %548, %cst_190 {dimension_numbers = #tpu.dot_dimension_numbers<[1], [0], [0], [1], [0, 0, 1, 1], [], []>} : vector<8x8xbf16>, vector<8x32xbf16>, vector<8x32xf32> -> vector<8x32xf32>
    %631 = vector.broadcast %171 : vector<1x32xf32> to vector<8x32xf32>
    %632 = arith.mulf %630, %631 : vector<8x32xf32>
    %633 = arith.addf %612, %632 : vector<8x32xf32>
    %634 = tpu.concatenate %546, %633 in 0 : vector<8x32xf32>, vector<8x32xf32> -> vector<16x32xf32>
    %635 = arith.truncf %634 : vector<16x32xf32> to vector<16x32xbf16>
    %cst_191 = arith.constant dense<0.000000e+00> : vector<16x32xf32>
    %636 = tpu.matmul %635, %447, %cst_191 {dimension_numbers = #tpu.dot_dimension_numbers<[1], [0], [0], [1], [0, 0, 1, 1], [], []>} : vector<16x32xbf16>, vector<32x32xbf16>, vector<16x32xf32> -> vector<16x32xf32>
    %637 = vector.extract_strided_slice %449 {offsets = [0, 0], sizes = [1, 32], strides = [1, 1]} : vector<6x32xf32> to vector<1x32xf32>
    %638 = vector.broadcast %637 : vector<1x32xf32> to vector<16x32xf32>
    %639 = arith.addf %636, %638 : vector<16x32xf32>
    %640 = arith.addf %441, %639 : vector<16x32xf32>
    %641 = vector.extract_strided_slice %449 {offsets = [1, 0], sizes = [1, 32], strides = [1, 1]} : vector<6x32xf32> to vector<1x32xf32>
    %642 = vector.extract_strided_slice %449 {offsets = [2, 0], sizes = [1, 32], strides = [1, 1]} : vector<6x32xf32> to vector<1x32xf32>
    %cst_192 = arith.constant dense<0.000000e+00> : vector<16xf32>
    %643 = vector.multi_reduction <add>, %640, %cst_192 [1] : vector<16x32xf32> to vector<16xf32>
    %644 = vector.shape_cast %643 : vector<16xf32> to vector<16x1xf32>
    %cst_193 = arith.constant 3.200000e+01 : f32
    %645 = vector.broadcast %cst_193 : f32 to vector<16x1xf32>
    %646 = arith.divf %644, %645 : vector<16x1xf32>
    %647 = vector.broadcast %646 : vector<16x1xf32> to vector<16x32xf32>
    %648 = arith.subf %640, %647 : vector<16x32xf32>
    %649 = arith.mulf %648, %648 : vector<16x32xf32>
    %cst_194 = arith.constant dense<0.000000e+00> : vector<16xf32>
    %650 = vector.multi_reduction <add>, %649, %cst_194 [1] : vector<16x32xf32> to vector<16xf32>
    %651 = vector.shape_cast %650 : vector<16xf32> to vector<16x1xf32>
    %cst_195 = arith.constant 3.200000e+01 : f32
    %652 = vector.broadcast %cst_195 : f32 to vector<16x1xf32>
    %653 = arith.divf %651, %652 : vector<16x1xf32>
    %654 = vector.broadcast %646 : vector<16x1xf32> to vector<16x32xf32>
    %655 = arith.subf %640, %654 : vector<16x32xf32>
    %cst_196 = arith.constant 9.99999997E-7 : f32
    %656 = vector.broadcast %cst_196 : f32 to vector<16x1xf32>
    %657 = arith.addf %653, %656 : vector<16x1xf32>
    %658 = math.rsqrt %657 : vector<16x1xf32>
    %659 = vector.broadcast %658 : vector<16x1xf32> to vector<16x32xf32>
    %660 = arith.mulf %655, %659 : vector<16x32xf32>
    %661 = vector.broadcast %641 : vector<1x32xf32> to vector<16x32xf32>
    %662 = arith.mulf %660, %661 : vector<16x32xf32>
    %663 = vector.broadcast %642 : vector<1x32xf32> to vector<16x32xf32>
    %664 = arith.addf %662, %663 : vector<16x32xf32>
    %665 = arith.truncf %664 : vector<16x32xf32> to vector<16x32xbf16>
    %cst_197 = arith.constant dense<0.000000e+00> : vector<16x64xf32>
    %666 = tpu.matmul %665, %451, %cst_197 {dimension_numbers = #tpu.dot_dimension_numbers<[1], [0], [0], [1], [0, 0, 1, 1], [], []>} : vector<16x32xbf16>, vector<32x64xbf16>, vector<16x64xf32> -> vector<16x64xf32>
    %667 = vector.broadcast %453 : vector<1x64xf32> to vector<16x64xf32>
    %668 = arith.addf %666, %667 : vector<16x64xf32>
    %669 = arith.mulf %668, %668 : vector<16x64xf32>
    %670 = arith.mulf %668, %669 : vector<16x64xf32>
    %cst_198 = arith.constant 4.471500e-02 : f32
    %671 = vector.broadcast %cst_198 : f32 to vector<16x64xf32>
    %672 = arith.mulf %671, %670 : vector<16x64xf32>
    %673 = arith.addf %668, %672 : vector<16x64xf32>
    %cst_199 = arith.constant 0.797884583 : f32
    %674 = vector.broadcast %cst_199 : f32 to vector<16x64xf32>
    %675 = arith.mulf %674, %673 : vector<16x64xf32>
    %676 = math.tanh %675 : vector<16x64xf32>
    %cst_200 = arith.constant 1.000000e+00 : f32
    %677 = vector.broadcast %cst_200 : f32 to vector<16x64xf32>
    %678 = arith.addf %677, %676 : vector<16x64xf32>
    %cst_201 = arith.constant 5.000000e-01 : f32
    %679 = vector.broadcast %cst_201 : f32 to vector<16x64xf32>
    %680 = arith.mulf %679, %678 : vector<16x64xf32>
    %681 = arith.mulf %668, %680 : vector<16x64xf32>
    %682 = arith.truncf %681 : vector<16x64xf32> to vector<16x64xbf16>
    %cst_202 = arith.constant dense<0.000000e+00> : vector<16x32xf32>
    %683 = tpu.matmul %682, %455, %cst_202 {dimension_numbers = #tpu.dot_dimension_numbers<[1], [0], [0], [1], [0, 0, 1, 1], [], []>} : vector<16x64xbf16>, vector<64x32xbf16>, vector<16x32xf32> -> vector<16x32xf32>
    %684 = vector.extract_strided_slice %449 {offsets = [3, 0], sizes = [1, 32], strides = [1, 1]} : vector<6x32xf32> to vector<1x32xf32>
    %685 = vector.broadcast %684 : vector<1x32xf32> to vector<16x32xf32>
    %686 = arith.addf %683, %685 : vector<16x32xf32>
    %687 = arith.addf %664, %686 : vector<16x32xf32>
    %688 = vector.extract_strided_slice %449 {offsets = [4, 0], sizes = [1, 32], strides = [1, 1]} : vector<6x32xf32> to vector<1x32xf32>
    %689 = vector.extract_strided_slice %449 {offsets = [5, 0], sizes = [1, 32], strides = [1, 1]} : vector<6x32xf32> to vector<1x32xf32>
    %cst_203 = arith.constant dense<0.000000e+00> : vector<16xf32>
    %690 = vector.multi_reduction <add>, %687, %cst_203 [1] : vector<16x32xf32> to vector<16xf32>
    %691 = vector.shape_cast %690 : vector<16xf32> to vector<16x1xf32>
    %cst_204 = arith.constant 3.200000e+01 : f32
    %692 = vector.broadcast %cst_204 : f32 to vector<16x1xf32>
    %693 = arith.divf %691, %692 : vector<16x1xf32>
    %694 = vector.broadcast %693 : vector<16x1xf32> to vector<16x32xf32>
    %695 = arith.subf %687, %694 : vector<16x32xf32>
    %696 = arith.mulf %695, %695 : vector<16x32xf32>
    %cst_205 = arith.constant dense<0.000000e+00> : vector<16xf32>
    %697 = vector.multi_reduction <add>, %696, %cst_205 [1] : vector<16x32xf32> to vector<16xf32>
    %698 = vector.shape_cast %697 : vector<16xf32> to vector<16x1xf32>
    %cst_206 = arith.constant 3.200000e+01 : f32
    %699 = vector.broadcast %cst_206 : f32 to vector<16x1xf32>
    %700 = arith.divf %698, %699 : vector<16x1xf32>
    %701 = vector.broadcast %693 : vector<16x1xf32> to vector<16x32xf32>
    %702 = arith.subf %687, %701 : vector<16x32xf32>
    %cst_207 = arith.constant 9.99999997E-7 : f32
    %703 = vector.broadcast %cst_207 : f32 to vector<16x1xf32>
    %704 = arith.addf %700, %703 : vector<16x1xf32>
    %705 = math.rsqrt %704 : vector<16x1xf32>
    %706 = vector.broadcast %705 : vector<16x1xf32> to vector<16x32xf32>
    %707 = arith.mulf %702, %706 : vector<16x32xf32>
    %708 = vector.broadcast %688 : vector<1x32xf32> to vector<16x32xf32>
    %709 = arith.mulf %707, %708 : vector<16x32xf32>
    %710 = vector.broadcast %689 : vector<1x32xf32> to vector<16x32xf32>
    %711 = arith.addf %709, %710 : vector<16x32xf32>
    %c0_208 = arith.constant 0 : index
    %c0_209 = arith.constant 0 : index
    %712 = vector.load %arg16[%c0_208, %c0_209] : memref<16x32xf32, #tpu.memory_space<vmem>>, vector<16x32xf32>
    tpu.vector_store %arg16[%c0_208, %c0_209], %711 {strides = array<i32>} : memref<16x32xf32, #tpu.memory_space<vmem>>, vector<16x32xf32>,
    return
  }
  func.func @transform_0(%arg0: i32) -> (i32, i32) {
    %c0_i32 = arith.constant 0 : i32
    %c0_i32_0 = arith.constant 0 : i32
    %c0_i32_1 = arith.constant 0 : i32
    return %c0_i32, %c0_i32_0 : i32, i32
  }
  func.func @transform_1(%arg0: i32) -> (i32, i32) {
    %c0_i32 = arith.constant 0 : i32
    %c0_i32_0 = arith.constant 0 : i32
    %c0_i32_1 = arith.constant 0 : i32
    return %c0_i32, %c0_i32_0 : i32, i32
  }
  func.func @transform_2(%arg0: i32) -> (i32, i32) {
    %c0_i32 = arith.constant 0 : i32
    %c0_i32_0 = arith.constant 0 : i32
    %c0_i32_1 = arith.constant 0 : i32
    return %c0_i32, %c0_i32_0 : i32, i32
  }
  func.func @transform_3(%arg0: i32) -> (i32, i32) {
    %c0_i32 = arith.constant 0 : i32
    %c0_i32_0 = arith.constant 0 : i32
    %c0_i32_1 = arith.constant 0 : i32
    return %c0_i32, %c0_i32_0 : i32, i32
  }
  func.func @transform_4(%arg0: i32) -> (i32, i32) {
    %c0_i32 = arith.constant 0 : i32
    %c0_i32_0 = arith.constant 0 : i32
    %c0_i32_1 = arith.constant 0 : i32
    return %c0_i32, %c0_i32_0 : i32, i32
  }
  func.func @transform_5(%arg0: i32) -> (i32, i32) {
    %c0_i32 = arith.constant 0 : i32
    %c0_i32_0 = arith.constant 0 : i32
    %c0_i32_1 = arith.constant 0 : i32
    return %c0_i32, %c0_i32_0 : i32, i32
  }
  func.func @transform_6(%arg0: i32) -> (i32, i32) {
    %c0_i32 = arith.constant 0 : i32
    %c0_i32_0 = arith.constant 0 : i32
    %c0_i32_1 = arith.constant 0 : i32
    return %c0_i32, %c0_i32_0 : i32, i32
  }
  func.func @transform_7(%arg0: i32) -> (i32, i32) {
    %c0_i32 = arith.constant 0 : i32
    %c0_i32_0 = arith.constant 0 : i32
    %c0_i32_1 = arith.constant 0 : i32
    return %c0_i32, %c0_i32_0 : i32, i32
  }
  func.func @transform_8(%arg0: i32) -> (i32, i32, i32) {
    %c0_i32 = arith.constant 0 : i32
    %c0_i32_0 = arith.constant 0 : i32
    %c0_i32_1 = arith.constant 0 : i32
    %c0_i32_2 = arith.constant 0 : i32
    return %c0_i32, %c0_i32_0, %c0_i32_1 : i32, i32, i32
  }
  func.func @transform_9(%arg0: i32) -> (i32, i32, i32) {
    %c0_i32 = arith.constant 0 : i32
    %c0_i32_0 = arith.constant 0 : i32
    %c0_i32_1 = arith.constant 0 : i32
    %c0_i32_2 = arith.constant 0 : i32
    return %c0_i32, %c0_i32_0, %c0_i32_1 : i32, i32, i32
  }
  func.func @transform_10(%arg0: i32) -> (i32, i32, i32) {
    %c0_i32 = arith.constant 0 : i32
    %c0_i32_0 = arith.constant 0 : i32
    %c0_i32_1 = arith.constant 0 : i32
    %c0_i32_2 = arith.constant 0 : i32
    return %c0_i32, %c0_i32_0, %c0_i32_1 : i32, i32, i32
  }
  func.func @transform_11(%arg0: i32) -> (i32, i32, i32) {
    %c0_i32 = arith.constant 0 : i32
    %c0_i32_0 = arith.constant 0 : i32
    %c0_i32_1 = arith.constant 0 : i32
    %c0_i32_2 = arith.constant 0 : i32
    return %c0_i32, %c0_i32_0, %c0_i32_1 : i32, i32, i32
  }
  func.func @transform_12(%arg0: i32) -> (i32, i32, i32) {
    %c0_i32 = arith.constant 0 : i32
    %c0_i32_0 = arith.constant 0 : i32
    %c0_i32_1 = arith.constant 0 : i32
    %c0_i32_2 = arith.constant 0 : i32
    return %c0_i32, %c0_i32_0, %c0_i32_1 : i32, i32, i32
  }
  func.func @transform_13(%arg0: i32) -> (i32, i32, i32) {
    %c0_i32 = arith.constant 0 : i32
    %c0_i32_0 = arith.constant 0 : i32
    %c0_i32_1 = arith.constant 0 : i32
    %c0_i32_2 = arith.constant 0 : i32
    return %c0_i32, %c0_i32_0, %c0_i32_1 : i32, i32, i32
  }
  func.func @transform_14(%arg0: i32) -> (i32, i32, i32) {
    %c0_i32 = arith.constant 0 : i32
    %c0_i32_0 = arith.constant 0 : i32
    %c0_i32_1 = arith.constant 0 : i32
    %c0_i32_2 = arith.constant 0 : i32
    return %c0_i32, %c0_i32_0, %c0_i32_1 : i32, i32, i32
  }
  func.func @transform_15(%arg0: i32) -> (i32, i32) {
    %c0_i32 = arith.constant 0 : i32
    %c0_i32_0 = arith.constant 0 : i32
    %c0_i32_1 = arith.constant 0 : i32
    return %c0_i32, %c0_i32_0 : i32, i32
  }
}

</mosaic_0001>

<llo_original>
// kernel: tpu_custom_call.1
$region0: #{tpu_custom_call.1}
  #allocation0 [shape = 'u32[]', space=smem, size = 0x4, offset = 0x4, fixed_abs, tag = 'smem constant byte address 0x4 - core index']
  #allocation1 [shape = 'u32[144,128]{1,0:T(1,128)}', space=vmem, size = 0x12000, scoped, tag = 'internal scratch']
  %s0 = inlined_call_operand.vmem [shape: f32[16,32], index: 0, kind: input, shape index: {}]
  %s1 = inlined_call_operand.vmem [shape: f32[16,11], index: 1, kind: input, shape index: {}]
  %s2 = inlined_call_operand.vmem [shape: s32[16,2], index: 2, kind: input, shape index: {}]
  %s3 = inlined_call_operand.vmem [shape: s32[16,2], index: 3, kind: input, shape index: {}]
  %s4 = inlined_call_operand.vmem [shape: s32[16,1], index: 4, kind: input, shape index: {}]
  %s5 = inlined_call_operand.vmem [shape: s32[1,16], index: 5, kind: input, shape index: {}]
  %s6 = inlined_call_operand.vmem [shape: bf16[11,32], index: 6, kind: input, shape index: {}]
  %s7 = inlined_call_operand.vmem [shape: f32[3,32], index: 7, kind: input, shape index: {}]
  %s8 = inlined_call_operand.vmem [shape: bf16[2,32,96], index: 8, kind: input, shape index: {}]
  %s9 = inlined_call_operand.vmem [shape: f32[2,1,96], index: 9, kind: input, shape index: {}]
  %s10 = inlined_call_operand.vmem [shape: bf16[2,32,32], index: 10, kind: input, shape index: {}]
  %s11 = inlined_call_operand.vmem [shape: f32[2,6,32], index: 11, kind: input, shape index: {}]
  %s12 = inlined_call_operand.vmem [shape: bf16[2,32,64], index: 12, kind: input, shape index: {}]
  %s13 = inlined_call_operand.vmem [shape: f32[2,1,64], index: 13, kind: input, shape index: {}]
  %s14 = inlined_call_operand.vmem [shape: bf16[2,64,32], index: 14, kind: input, shape index: {}]
  %s15 = inlined_call_operand.hbm [shape: f32[16,32], index: 15, kind: output, shape index: {}]
  %s16 = sld [smem:[#allocation0]]
  $region70: #{tpu_custom_call.1} parent=0
    _
  %s18 = ssub.s32 1, %s16
  %s19 = scalar_select 0, %s18, %s16
  $region1: #{tpu_custom_call.1} parent=0
    #allocation2 [shape = 'u8[8192]{0}', space=vmem, size = 0x2000, scoped, tag = 'output window, operand 0, single buffered']
    #allocation3 [shape = 's32[1]{0}', space=sflag, size = 0x4, scoped, tag = 'scoped memory for tpu_custom_call.1']
    %20 = vsyncpa [#allocation3], 0
    // Predicated region
    $region2: #{tpu_custom_call.1} parent=1 // pred_check
      _
    $region3: #{tpu_custom_call.1} parent=1 // pred_check_branch
      %22 = sbr.rel (0) target = $region5
    $region4: #{tpu_custom_call.1} parent=1 // pred_region
      _
    $region5: #{tpu_custom_call.1} parent=1 // pred_fallthru
      _
    // Predicated region
    $region6: #{tpu_custom_call.1} parent=1 // pred_check
      _
    $region7: #{tpu_custom_call.1} parent=1 // pred_check_branch
      %24 = sbr.rel (0) target = $region9
    $region8: #{tpu_custom_call.1} parent=1 // pred_region
      _
    $region9: #{tpu_custom_call.1} parent=1 // pred_fallthru
      _
    // Predicated region
    $region10: #{tpu_custom_call.1} parent=1 // pred_check
      _
    $region11: #{tpu_custom_call.1} parent=1 // pred_check_branch
      %26 = sbr.rel (0) target = $region13
    $region12: #{tpu_custom_call.1} parent=1 // pred_region
      _
    $region13: #{tpu_custom_call.1} parent=1 // pred_fallthru
      _
    // Predicated region
    $region14: #{tpu_custom_call.1} parent=1 // pred_check
      _
    $region15: #{tpu_custom_call.1} parent=1 // pred_check_branch
      %28 = sbr.rel (0) target = $region17
    $region16: #{tpu_custom_call.1} parent=1 // pred_region
      _
    $region17: #{tpu_custom_call.1} parent=1 // pred_fallthru
      _
    // Predicated region
    $region18: #{tpu_custom_call.1} parent=1 // pred_check
      _
    $region19: #{tpu_custom_call.1} parent=1 // pred_check_branch
      %30 = sbr.rel (0) target = $region21
    $region20: #{tpu_custom_call.1} parent=1 // pred_region
      _
    $region21: #{tpu_custom_call.1} parent=1 // pred_fallthru
      _
    // Predicated region
    $region22: #{tpu_custom_call.1} parent=1 // pred_check
      _
    $region23: #{tpu_custom_call.1} parent=1 // pred_check_branch
      %32 = sbr.rel (0) target = $region25
    $region24: #{tpu_custom_call.1} parent=1 // pred_region
      _
    $region25: #{tpu_custom_call.1} parent=1 // pred_fallthru
      _
    // Predicated region
    $region26: #{tpu_custom_call.1} parent=1 // pred_check
      _
    $region27: #{tpu_custom_call.1} parent=1 // pred_check_branch
      %34 = sbr.rel (0) target = $region29
    $region28: #{tpu_custom_call.1} parent=1 // pred_region
      _
    $region29: #{tpu_custom_call.1} parent=1 // pred_fallthru
      _
    // Predicated region
    $region30: #{tpu_custom_call.1} parent=1 // pred_check
      _
    $region31: #{tpu_custom_call.1} parent=1 // pred_check_branch
      %36 = sbr.rel (0) target = $region33
    $region32: #{tpu_custom_call.1} parent=1 // pred_region
      _
    $region33: #{tpu_custom_call.1} parent=1 // pred_fallthru
      _
    // Predicated region
    $region34: #{tpu_custom_call.1} parent=1 // pred_check
      _
    $region35: #{tpu_custom_call.1} parent=1 // pred_check_branch
      %38 = sbr.rel (0) target = $region37
    $region36: #{tpu_custom_call.1} parent=1 // pred_region
      _
    $region37: #{tpu_custom_call.1} parent=1 // pred_fallthru
      _
    // Predicated region
    $region38: #{tpu_custom_call.1} parent=1 // pred_check
      _
    $region39: #{tpu_custom_call.1} parent=1 // pred_check_branch
      %40 = sbr.rel (0) target = $region41
    $region40: #{tpu_custom_call.1} parent=1 // pred_region
      _
    $region41: #{tpu_custom_call.1} parent=1 // pred_fallthru
      _
    // Predicated region
    $region42: #{tpu_custom_call.1} parent=1 // pred_check
      _
    $region43: #{tpu_custom_call.1} parent=1 // pred_check_branch
      %42 = sbr.rel (0) target = $region45
    $region44: #{tpu_custom_call.1} parent=1 // pred_region
      _
    $region45: #{tpu_custom_call.1} parent=1 // pred_fallthru
      _
    // Predicated region
    $region46: #{tpu_custom_call.1} parent=1 // pred_check
      _
    $region47: #{tpu_custom_call.1} parent=1 // pred_check_branch
      %44 = sbr.rel (0) target = $region49
    $region48: #{tpu_custom_call.1} parent=1 // pred_region
      _
    $region49: #{tpu_custom_call.1} parent=1 // pred_fallthru
      _
    // Predicated region
    $region50: #{tpu_custom_call.1} parent=1 // pred_check
      _
    $region51: #{tpu_custom_call.1} parent=1 // pred_check_branch
      %46 = sbr.rel (0) target = $region53
    $region52: #{tpu_custom_call.1} parent=1 // pred_region
      _
    $region53: #{tpu_custom_call.1} parent=1 // pred_fallthru
      _
    // Predicated region
    $region54: #{tpu_custom_call.1} parent=1 // pred_check
      _
    $region55: #{tpu_custom_call.1} parent=1 // pred_check_branch
      %48 = sbr.rel (0) target = $region57
    $region56: #{tpu_custom_call.1} parent=1 // pred_region
      _
    $region57: #{tpu_custom_call.1} parent=1 // pred_fallthru
      _
    // Predicated region
    $region58: #{tpu_custom_call.1} parent=1 // pred_check
      _
    $region59: #{tpu_custom_call.1} parent=1 // pred_check_branch
      %50 = sbr.rel (0) target = $region61
    $region60: #{tpu_custom_call.1} parent=1 // pred_region
      _
    $region61: #{tpu_custom_call.1} parent=1 // pred_fallthru
      _
    %v52 = vld [vmem:[%s1] sm:$0xff]
    %v53 = vld [vmem:[%s1 + $0x8] sm:$0xff]
    %v54 = vpack.c.bf16 %v53, %v52
    %v55 = vld [vmem:[%s6] sm:$0xf]
    %v56 = vld [vmem:[%s6 + $0x4] sm:$0x3]
    %v59 = vunpack.c.l.b16 %v55
    %v60 = vunpack.c.l.b16 %v56
    %v61 = vpack.c.b16 %v60, %v59
    %vm62 = vcmask 89088
    %v64 = vsel %vm62, %v54, 0
    %vm66 = vcmask 1044480
    %vm67 = vcmask 1045504
    %v68 = vsel %vm66, 4294967295, 65535
    %v69 = vsel %vm67, %v68, 0
    %v71 = vand.u32 %v61, %v69
    %73 = vmatprep.subr.bf16.mxu0 0
    %74 = vmatpush1.bf16.msra.mxu0 %v71
    %75 = vmatprep.subr.bf16.mxu0 0
    %76 = vmatpush1.bf16.msra.mxu0 0
    %77 = vmatprep.subr.bf16.mxu0 0
    %78 = vmatpush1.bf16.msra.mxu0 0
    %79 = vmatprep.subr.bf16.mxu0 0
    %80 = vmatpush1.bf16.msra.mxu0 0
    %81 = vmatprep.subr.bf16.mxu0 0
    %82 = vmatpush1.bf16.msra.mxu0 0
    %83 = vmatprep.subr.bf16.mxu0 0
    %84 = vmatpush1.bf16.msra.mxu0 0
    %85 = vmatprep.subr.bf16.mxu0 0
    %86 = vmatpush1.bf16.msra.mxu0 0
    %87 = vmatprep.subr.bf16.mxu0 0
    %88 = vmatpush1.bf16.msra.mxu0 0
    %89 = vmatprep.subr.bf16.mxu0 0
    %90 = vmatpush1.bf16.msra.mxu0 0
    %91 = vmatprep.subr.bf16.mxu0 0
    %92 = vmatpush1.bf16.msra.mxu0 0
    %93 = vmatprep.subr.bf16.mxu0 0
    %94 = vmatpush1.bf16.msra.mxu0 0
    %95 = vmatprep.subr.bf16.mxu0 0
    %96 = vmatpush1.bf16.msra.mxu0 0
    %97 = vmatprep.subr.bf16.mxu0 0
    %98 = vmatpush1.bf16.msra.mxu0 0
    %99 = vmatprep.subr.bf16.mxu0 0
    %100 = vmatpush1.bf16.msra.mxu0 0
    %101 = vmatprep.subr.bf16.mxu0 0
    %102 = vmatpush1.bf16.msra.mxu0 0
    %103 = vmatprep.subr.bf16.mxu0 0
    %104 = vmatpush1.bf16.msra.mxu0 0
    %105 = vmatprep.mubr.bf16.mxu0 0
    %106 = vmatmul.mubr.bf16.gmra.mrb[0].mxu0 %v64
    %v107 = vpop.f32.mrb[0].mxu0
    %v108 = vadd.f32 0.0, %v107
    %v109 = vpop.f32.mrb[0].mxu0
    %v110 = vpop.f32.mrb[0].mxu0
    %v111 = vadd.f32 0.0, %v110
    %v112 = vpop.f32.mrb[0].mxu0
    %113 = vdwg.mxu0
    %v114 = vld [vmem:[%s7] sm:$0x7]
    %v115 = vld [vmem:[%s0] sm:$0xff]
    %v116 = vld [vmem:[%s0 + $0x8] sm:$0xff]
    %v117 = vadd.f32 %v115, %v108
    %v118 = vadd.f32 %v116, %v111
    %v119 = vlaneseq
    %v120 = vshrl.u32 %v119, 7
    %v121 = vsub.s32 0, %v120
    %v122 = vrot.slane %v114, %v121
    %v123 = vadd.f32 %v117, %v122
    %v124 = vadd.f32 %v118, %v122
    %vm125 = vcmask 261120
    %v126 = vsel %vm125, %v123, 0.0
    %127 = vadd.xlane.f32.xlu0 %v126
    %v128 = vpop.xlane.xlu0 %127
    %v129 = vsel %vm125, %v124, 0.0
    %130 = vadd.xlane.f32.xlu0 %v129
    %v131 = vpop.xlane.xlu0 %130
    %v132 = vrcp.pop 32.0
    %v133 = vmul.f32 %v128, %v132
    %v134 = vmul.f32 %v131, %v132
    %v135 = vsub.f32 %v123, %v133
    %v136 = vsub.f32 %v124, %v134
    %v137 = vmul.f32 %v135, %v135
    %v138 = vmul.f32 %v136, %v136
    %v139 = vsel %vm125, %v137, 0.0
    %140 = vadd.xlane.f32.xlu0 %v139
    %v141 = vpop.xlane.xlu0 %140
    %v142 = vsel %vm125, %v138, 0.0
    %143 = vadd.xlane.f32.xlu0 %v142
    %v144 = vpop.xlane.xlu0 %143
    %v145 = vmul.f32 %v141, %v132
    %v146 = vmul.f32 %v144, %v132
    %v147 = vadd.f32 %v145, 1e-06
    %v148 = vadd.f32 %v146, 1e-06
    %v149 = vrsqrt.pop %v147
    %v150 = vrsqrt.pop %v148
    %v151 = vmul.f32 %v135, %v149
    %v152 = vmul.f32 %v136, %v150
    %v153 = vlaneseq
    %v154 = vshrl.u32 %v153, 7
    %v155 = vsub.s32 1, %v154
    %v156 = vrot.slane %v114, %v155
    %v157 = vmul.f32 %v151, %v156
    %v158 = vmul.f32 %v152, %v156
    %v159 = vlaneseq
    %v160 = vshrl.u32 %v159, 7
    %v161 = vsub.s32 2, %v160
    %v162 = vrot.slane %v114, %v161
    %v163 = vadd.f32 %v157, %v162
    %v164 = vadd.f32 %v158, %v162
    %v165 = vlaneseq
    %v166 = vand.u32 %v165, 127
    %v167 = vld [vmem:[%s2] sm:$0xff]
    %v168 = vld [vmem:[%s2 + $0x8] sm:$0xff]
    %169 = vset.pattern.permute.xlu0 0
    %170 = vperm.xlu0 %169, %v167
    %v171 = vpop.permute.xlu0 %170
    %172 = vset.pattern.permute.xlu0 0
    %173 = vperm.xlu0 %172, %v168
    %v174 = vpop.permute.xlu0 %173
    %vm175 = vcmp.eq.s32.totalorder %v171, %v166
    %vm176 = vcmp.eq.s32.totalorder %v174, %v166
    %v177 = vsel %vm175, 1, 0
    %v178 = vsel %vm176, 1, 0
    %v179 = vcvt.s32.f32 %v177
    %v180 = vcvt.s32.f32 %v178
    %v181 = vmax.f32 %v179, 0.0
    %v182 = vmax.f32 %v180, 0.0
    %183 = vset.pattern.permute.xlu0 1
    %184 = vperm.xlu0 %183, %v167
    %v185 = vpop.permute.xlu0 %184
    %186 = vset.pattern.permute.xlu0 1
    %187 = vperm.xlu0 %186, %v168
    %v188 = vpop.permute.xlu0 %187
    %vm189 = vcmp.eq.s32.totalorder %v185, %v166
    %vm190 = vcmp.eq.s32.totalorder %v188, %v166
    %v191 = vsel %vm189, 1, 0
    %v192 = vsel %vm190, 1, 0
    %v193 = vcvt.s32.f32 %v191
    %v194 = vcvt.s32.f32 %v192
    %v195 = vmax.f32 %v181, %v193
    %v196 = vmax.f32 %v182, %v194
    %v197 = vpack.c.bf16 %v196, %v195
    %v198 = vsub.f32 1.0, %v195
    %v199 = vsub.f32 1.0, %v196
    %v200 = vpack.c.bf16 %v199, %v198
    %vm201 = vcmask 64512
    %v203 = vsel %vm201, %v200, 0
    %v206 = vsel %vm201, %v197, 0
    %208 = vmatprep.subr.bf16.mxu0 0
    %209 = vmatpush1.bf16.xpose.msra.mxu0 %v206
    %210 = vmatprep.subr.bf16.mxu0 0
    %211 = vmatpush1.bf16.xpose.msra.mxu0 0
    %212 = vmatprep.subr.bf16.mxu0 0
    %213 = vmatpush1.bf16.xpose.msra.mxu0 0
    %214 = vmatprep.subr.bf16.mxu0 0
    %215 = vmatpush1.bf16.xpose.msra.mxu0 0
    %216 = vmatprep.subr.bf16.mxu0 0
    %217 = vmatpush1.bf16.xpose.msra.mxu0 0
    %218 = vmatprep.subr.bf16.mxu0 0
    %219 = vmatpush1.bf16.xpose.msra.mxu0 0
    %220 = vmatprep.subr.bf16.mxu0 0
    %221 = vmatpush1.bf16.xpose.msra.mxu0 0
    %222 = vmatprep.subr.bf16.mxu0 0
    %223 = vmatpush1.bf16.xpose.msra.mxu0 0
    %224 = vmatprep.subr.bf16.mxu0 0
    %225 = vmatpush1.bf16.xpose.msra.mxu0 0
    %226 = vmatprep.subr.bf16.mxu0 0
    %227 = vmatpush1.bf16.xpose.msra.mxu0 0
    %228 = vmatprep.subr.bf16.mxu0 0
    %229 = vmatpush1.bf16.xpose.msra.mxu0 0
    %230 = vmatprep.subr.bf16.mxu0 0
    %231 = vmatpush1.bf16.xpose.msra.mxu0 0
    %232 = vmatprep.subr.bf16.mxu0 0
    %233 = vmatpush1.bf16.xpose.msra.mxu0 0
    %234 = vmatprep.subr.bf16.mxu0 0
    %235 = vmatpush1.bf16.xpose.msra.mxu0 0
    %236 = vmatprep.subr.bf16.mxu0 0
    %237 = vmatpush1.bf16.xpose.msra.mxu0 0
    %238 = vmatprep.subr.bf16.mxu0 0
    %239 = vmatpush1.bf16.xpose.msra.mxu0 0
    %240 = vmatprep.mubr.bf16.mxu0 0
    %241 = vmatmul.mubr.bf16.gmra.mrb[0].mxu0 %v203
    %v242 = vpop.f32.mrb[0].mxu0
    %v243 = vadd.f32 0.0, %v242
    %v244 = vpop.f32.mrb[0].mxu0
    %v245 = vpop.f32.mrb[0].mxu0
    %v246 = vadd.f32 0.0, %v245
    %v247 = vpop.f32.mrb[0].mxu0
    %248 = vdwg.mxu0
    %249 = vmatprep.subr.bf16.mxu0 0
    %250 = vmatpush1.bf16.xpose.msra.mxu0 %v203
    %251 = vmatprep.subr.bf16.mxu0 0
    %252 = vmatpush1.bf16.xpose.msra.mxu0 0
    %253 = vmatprep.subr.bf16.mxu0 0
    %254 = vmatpush1.bf16.xpose.msra.mxu0 0
    %255 = vmatprep.subr.bf16.mxu0 0
    %256 = vmatpush1.bf16.xpose.msra.mxu0 0
    %257 = vmatprep.subr.bf16.mxu0 0
    %258 = vmatpush1.bf16.xpose.msra.mxu0 0
    %259 = vmatprep.subr.bf16.mxu0 0
    %260 = vmatpush1.bf16.xpose.msra.mxu0 0
    %261 = vmatprep.subr.bf16.mxu0 0
    %262 = vmatpush1.bf16.xpose.msra.mxu0 0
    %263 = vmatprep.subr.bf16.mxu0 0
    %264 = vmatpush1.bf16.xpose.msra.mxu0 0
    %265 = vmatprep.subr.bf16.mxu0 0
    %266 = vmatpush1.bf16.xpose.msra.mxu0 0
    %267 = vmatprep.subr.bf16.mxu0 0
    %268 = vmatpush1.bf16.xpose.msra.mxu0 0
    %269 = vmatprep.subr.bf16.mxu0 0
    %270 = vmatpush1.bf16.xpose.msra.mxu0 0
    %271 = vmatprep.subr.bf16.mxu0 0
    %272 = vmatpush1.bf16.xpose.msra.mxu0 0
    %273 = vmatprep.subr.bf16.mxu0 0
    %274 = vmatpush1.bf16.xpose.msra.mxu0 0
    %275 = vmatprep.subr.bf16.mxu0 0
    %276 = vmatpush1.bf16.xpose.msra.mxu0 0
    %277 = vmatprep.subr.bf16.mxu0 0
    %278 = vmatpush1.bf16.xpose.msra.mxu0 0
    %279 = vmatprep.subr.bf16.mxu0 0
    %280 = vmatpush1.bf16.xpose.msra.mxu0 0
    %281 = vmatprep.mubr.bf16.mxu0 0
    %282 = vmatmul.mubr.bf16.gmra.mrb[0].mxu0 %v206
    %v283 = vpop.f32.mrb[0].mxu0
    %v284 = vadd.f32 %v243, %v283
    %v285 = vpop.f32.mrb[0].mxu0
    %v286 = vpop.f32.mrb[0].mxu0
    %v287 = vadd.f32 %v246, %v286
    %v288 = vpop.f32.mrb[0].mxu0
    %289 = vdwg.mxu0
    %v290 = vld [vmem:[%s3] sm:$0xff]
    %v291 = vld [vmem:[%s3 + $0x8] sm:$0xff]
    %292 = vset.pattern.permute.xlu0 0
    %293 = vperm.xlu0 %292, %v290
    %v294 = vpop.permute.xlu0 %293
    %295 = vset.pattern.permute.xlu0 0
    %296 = vperm.xlu0 %295, %v291
    %v297 = vpop.permute.xlu0 %296
    %vm298 = vcmp.eq.s32.totalorder %v294, %v166
    %vm299 = vcmp.eq.s32.totalorder %v297, %v166
    %v300 = vsel %vm298, 1, 0
    %v301 = vsel %vm299, 1, 0
    %v302 = vcvt.s32.f32 %v300
    %v303 = vcvt.s32.f32 %v301
    %v304 = vmax.f32 %v302, 0.0
    %v305 = vmax.f32 %v303, 0.0
    %306 = vset.pattern.permute.xlu0 1
    %307 = vperm.xlu0 %306, %v290
    %v308 = vpop.permute.xlu0 %307
    %309 = vset.pattern.permute.xlu0 1
    %310 = vperm.xlu0 %309, %v291
    %v311 = vpop.permute.xlu0 %310
    %vm312 = vcmp.eq.s32.totalorder %v308, %v166
    %vm313 = vcmp.eq.s32.totalorder %v311, %v166
    %v314 = vsel %vm312, 1, 0
    %v315 = vsel %vm313, 1, 0
    %v316 = vcvt.s32.f32 %v314
    %v317 = vcvt.s32.f32 %v315
    %v318 = vmax.f32 %v304, %v316
    %v319 = vmax.f32 %v305, %v317
    %v320 = vpack.c.bf16 %v319, %v318
    %v321 = vsub.f32 1.0, %v318
    %v322 = vsub.f32 1.0, %v319
    %v323 = vpack.c.bf16 %v322, %v321
    %v325 = vsel %vm201, %v323, 0
    %v328 = vsel %vm201, %v320, 0
    %330 = vmatprep.subr.bf16.mxu0 0
    %331 = vmatpush1.bf16.xpose.msra.mxu0 %v328
    %332 = vmatprep.subr.bf16.mxu0 0
    %333 = vmatpush1.bf16.xpose.msra.mxu0 0
    %334 = vmatprep.subr.bf16.mxu0 0
    %335 = vmatpush1.bf16.xpose.msra.mxu0 0
    %336 = vmatprep.subr.bf16.mxu0 0
    %337 = vmatpush1.bf16.xpose.msra.mxu0 0
    %338 = vmatprep.subr.bf16.mxu0 0
    %339 = vmatpush1.bf16.xpose.msra.mxu0 0
    %340 = vmatprep.subr.bf16.mxu0 0
    %341 = vmatpush1.bf16.xpose.msra.mxu0 0
    %342 = vmatprep.subr.bf16.mxu0 0
    %343 = vmatpush1.bf16.xpose.msra.mxu0 0
    %344 = vmatprep.subr.bf16.mxu0 0
    %345 = vmatpush1.bf16.xpose.msra.mxu0 0
    %346 = vmatprep.subr.bf16.mxu0 0
    %347 = vmatpush1.bf16.xpose.msra.mxu0 0
    %348 = vmatprep.subr.bf16.mxu0 0
    %349 = vmatpush1.bf16.xpose.msra.mxu0 0
    %350 = vmatprep.subr.bf16.mxu0 0
    %351 = vmatpush1.bf16.xpose.msra.mxu0 0
    %352 = vmatprep.subr.bf16.mxu0 0
    %353 = vmatpush1.bf16.xpose.msra.mxu0 0
    %354 = vmatprep.subr.bf16.mxu0 0
    %355 = vmatpush1.bf16.xpose.msra.mxu0 0
    %356 = vmatprep.subr.bf16.mxu0 0
    %357 = vmatpush1.bf16.xpose.msra.mxu0 0
    %358 = vmatprep.subr.bf16.mxu0 0
    %359 = vmatpush1.bf16.xpose.msra.mxu0 0
    %360 = vmatprep.subr.bf16.mxu0 0
    %361 = vmatpush1.bf16.xpose.msra.mxu0 0
    %362 = vmatprep.mubr.bf16.mxu0 0
    %363 = vmatmul.mubr.bf16.gmra.mrb[0].mxu0 %v325
    %v364 = vpop.f32.mrb[0].mxu0
    %v365 = vadd.f32 0.0, %v364
    %v366 = vpop.f32.mrb[0].mxu0
    %v367 = vpop.f32.mrb[0].mxu0
    %v368 = vadd.f32 0.0, %v367
    %v369 = vpop.f32.mrb[0].mxu0
    %370 = vdwg.mxu0
    %371 = vmatprep.subr.bf16.mxu0 0
    %372 = vmatpush1.bf16.xpose.msra.mxu0 %v325
    %373 = vmatprep.subr.bf16.mxu0 0
    %374 = vmatpush1.bf16.xpose.msra.mxu0 0
    %375 = vmatprep.subr.bf16.mxu0 0
    %376 = vmatpush1.bf16.xpose.msra.mxu0 0
    %377 = vmatprep.subr.bf16.mxu0 0
    %378 = vmatpush1.bf16.xpose.msra.mxu0 0
    %379 = vmatprep.subr.bf16.mxu0 0
    %380 = vmatpush1.bf16.xpose.msra.mxu0 0
    %381 = vmatprep.subr.bf16.mxu0 0
    %382 = vmatpush1.bf16.xpose.msra.mxu0 0
    %383 = vmatprep.subr.bf16.mxu0 0
    %384 = vmatpush1.bf16.xpose.msra.mxu0 0
    %385 = vmatprep.subr.bf16.mxu0 0
    %386 = vmatpush1.bf16.xpose.msra.mxu0 0
    %387 = vmatprep.subr.bf16.mxu0 0
    %388 = vmatpush1.bf16.xpose.msra.mxu0 0
    %389 = vmatprep.subr.bf16.mxu0 0
    %390 = vmatpush1.bf16.xpose.msra.mxu0 0
    %391 = vmatprep.subr.bf16.mxu0 0
    %392 = vmatpush1.bf16.xpose.msra.mxu0 0
    %393 = vmatprep.subr.bf16.mxu0 0
    %394 = vmatpush1.bf16.xpose.msra.mxu0 0
    %395 = vmatprep.subr.bf16.mxu0 0
    %396 = vmatpush1.bf16.xpose.msra.mxu0 0
    %397 = vmatprep.subr.bf16.mxu0 0
    %398 = vmatpush1.bf16.xpose.msra.mxu0 0
    %399 = vmatprep.subr.bf16.mxu0 0
    %400 = vmatpush1.bf16.xpose.msra.mxu0 0
    %401 = vmatprep.subr.bf16.mxu0 0
    %402 = vmatpush1.bf16.xpose.msra.mxu0 0
    %403 = vmatprep.mubr.bf16.mxu0 0
    %404 = vmatmul.mubr.bf16.gmra.mrb[0].mxu0 %v328
    %v405 = vpop.f32.mrb[0].mxu0
    %v406 = vadd.f32 %v365, %v405
    %v407 = vpop.f32.mrb[0].mxu0
    %v408 = vpop.f32.mrb[0].mxu0
    %v409 = vadd.f32 %v368, %v408
    %v410 = vpop.f32.mrb[0].mxu0
    %411 = vdwg.mxu0
    %v412 = vmax.f32 %v284, %v406
    %v413 = vmax.f32 %v287, %v409
    %v414 = vld [vmem:[%s4] sm:$0xff]
    %v415 = vld [vmem:[%s4 + $0x8] sm:$0xff]
    %v416 = vld [vmem:[%s5] sm:$0x1]
    %vm417 = vcmp.eq.s32.totalorder %v414, 4294967295
    %vm418 = vcmp.eq.s32.totalorder %v415, 4294967295
    %v419 = vsel %vm417, 1, 0
    %v420 = vsel %vm418, 1, 0
    %v421 = vcvt.s32.f32 %v419
    %v422 = vcvt.s32.f32 %v420
    %vm423 = vcmp.eq.s32.totalorder %v416, 4294967295
    %v424 = vsel %vm423, 1, 0
    %v425 = vcvt.s32.f32 %v424
    %427 = vset.pattern.permute.xlu0 0
    %428 = vperm.xlu0 %427, %v421
    %v429 = vpop.permute.xlu0 %428
    %432 = vset.pattern.permute.xlu0 0
    %433 = vperm.xlu0 %432, %v422
    %v434 = vpop.permute.xlu0 %433
    %v437 = vlaneseq
    %v438 = vshrl.u32 %v437, 7
    %v439 = vsub.s32 0, %v438
    %v440 = vrot.slane %v425, %v439
    %v442 = vmax.f32 %v429, %v440
    %v443 = vmax.f32 %v434, %v440
    %vm444 = vcmp.eq.s32.totalorder %v414, 0
    %vm445 = vcmp.eq.s32.totalorder %v415, 0
    %v446 = vsel %vm444, 1, 0
    %v447 = vsel %vm445, 1, 0
    %v448 = vcvt.s32.f32 %v446
    %v449 = vcvt.s32.f32 %v447
    %vm450 = vcmp.eq.s32.totalorder %v416, 0
    %v451 = vsel %vm450, 1, 0
    %v452 = vcvt.s32.f32 %v451
    %454 = vset.pattern.permute.xlu0 0
    %455 = vperm.xlu0 %454, %v448
    %v456 = vpop.permute.xlu0 %455
    %459 = vset.pattern.permute.xlu0 0
    %460 = vperm.xlu0 %459, %v449
    %v461 = vpop.permute.xlu0 %460
    %v464 = vlaneseq
    %v465 = vshrl.u32 %v464, 7
    %v466 = vsub.s32 0, %v465
    %v467 = vrot.slane %v452, %v466
    %v469 = vmax.f32 %v456, %v467
    %v470 = vmax.f32 %v461, %v467
    %v471 = vmul.f32 %v469, 100.0
    %v472 = vmul.f32 %v470, 100.0
    %v473 = vmul.f32 %v442, %v412
    %v474 = vmul.f32 %v443, %v413
    %v475 = vsub.f32 %v412, %v473
    %v476 = vsub.f32 %v413, %v474
    %v477 = vadd.f32 %v475, %v471
    %v478 = vadd.f32 %v476, %v472
    %vm479 = vcmp.gt.s32.totalorder %v414, 0
    %vm480 = vcmp.gt.s32.totalorder %v415, 0
    %v481 = vand.u32 %v414, 1
    %v482 = vand.u32 %v415, 1
    %vm483 = vcmp.eq.s32.totalorder %v481, 1
    %vm484 = vcmp.eq.s32.totalorder %v482, 1
    %vm485 = vmand %vm479, %vm483
    %vm486 = vmand %vm480, %vm484
    %v487 = vsel %vm485, 1, 0
    %v488 = vsel %vm486, 1, 0
    %v489 = vcvt.s32.f32 %v487
    %v490 = vcvt.s32.f32 %v488
    %vm491 = vcmp.gt.s32.totalorder %v416, 0
    %v492 = vand.u32 %v416, 1
    %vm493 = vcmp.eq.s32.totalorder %v492, 1
    %vm494 = vmand %vm491, %vm493
    %v495 = vsel %vm494, 1, 0
    %v496 = vcvt.s32.f32 %v495
    %498 = vset.pattern.permute.xlu0 0
    %499 = vperm.xlu0 %498, %v489
    %v500 = vpop.permute.xlu0 %499
    %503 = vset.pattern.permute.xlu0 0
    %504 = vperm.xlu0 %503, %v490
    %v505 = vpop.permute.xlu0 %504
    %v508 = vlaneseq
    %v509 = vshrl.u32 %v508, 7
    %v510 = vsub.s32 0, %v509
    %v511 = vrot.slane %v496, %v510
    %v513 = vmul.f32 %v500, %v511
    %v514 = vmul.f32 %v505, %v511
    %v515 = vsub.f32 1.0, %v513
    %v516 = vsub.f32 1.0, %v514
    %v517 = vmul.f32 %v515, 100.0
    %v518 = vmul.f32 %v516, 100.0
    %v519 = vadd.f32 %v517, 1.0
    %v520 = vadd.f32 %v518, 1.0
    %v521 = vmul.f32 %v477, %v519
    %v522 = vmul.f32 %v478, %v520
    %vm523 = vcmp.le.f32.partialorder %v521, 8.5
    %vm524 = vcmp.le.f32.partialorder %v522, 8.5
    %v525 = vsel %vm523, 0.0, -10000.0
    %v526 = vsel %vm524, 0.0, -10000.0
    %vm527 = vcmp.ge.s32.totalorder %v166, 0
    %vm528 = vcmp.lt.s32.totalorder %v166, 8
    %vm529 = vmand %vm527, %vm528
    %v530 = vsel %vm529, 1, 0
    %v531 = vcvt.s32.f32 %v530
    %vm532 = vcmp.ge.s32.totalorder %v166, 8
    %vm533 = vcmp.lt.s32.totalorder %v166, 16
    %vm534 = vmand %vm532, %vm533
    %v535 = vsel %vm534, 1, 0
    %v536 = vcvt.s32.f32 %v535
    %vm537 = vcmp.ge.s32.totalorder %v166, 16
    %vm538 = vcmp.lt.s32.totalorder %v166, 24
    %vm539 = vmand %vm537, %vm538
    %v540 = vsel %vm539, 1, 0
    %v541 = vcvt.s32.f32 %v540
    %vm542 = vcmp.ge.s32.totalorder %v166, 24
    %vm543 = vcmp.lt.s32.totalorder %v166, 32
    %vm544 = vmand %vm542, %vm543
    %v545 = vsel %vm544, 1, 0
    %v546 = vcvt.s32.f32 %v545
    %v547 = vld [vmem:[%s8] sm:$0xf]
    %v548 = vld [vmem:[%s8 + $0x4] sm:$0xf]
    %v549 = vld [vmem:[%s8 + $0x8] sm:$0xf]
    %v550 = vld [vmem:[%s8 + $0xc] sm:$0xf]
    %v551 = vld [vmem:[%s9] sm:$0x1]
    %v552 = vld [vmem:[%s10] sm:$0xf]
    %v553 = vld [vmem:[%s10 + $0x4] sm:$0xf]
    %v554 = vld [vmem:[%s10 + $0x8] sm:$0xf]
    %v555 = vld [vmem:[%s10 + $0xc] sm:$0xf]
    %v556 = vld [vmem:[%s11] sm:$0x3f]
    %v557 = vld [vmem:[%s12] sm:$0xf]
    %v558 = vld [vmem:[%s12 + $0x4] sm:$0xf]
    %v559 = vld [vmem:[%s12 + $0x8] sm:$0xf]
    %v560 = vld [vmem:[%s12 + $0xc] sm:$0xf]
    %v561 = vld [vmem:[%s13] sm:$0x1]
    %v562 = vld [vmem:[%s14] sm:$0xf]
    %v563 = vld [vmem:[%s14 + $0x4] sm:$0xf]
    %v564 = vld [vmem:[%s14 + $0x8] sm:$0xf]
    %v565 = vld [vmem:[%s14 + $0xc] sm:$0xf]
    %v566 = vld [vmem:[%s14 + $0x10] sm:$0xf]
    %v567 = vld [vmem:[%s14 + $0x14] sm:$0xf]
    %v568 = vld [vmem:[%s14 + $0x18] sm:$0xf]
    %v569 = vld [vmem:[%s14 + $0x1c] sm:$0xf]
    %v570 = vpack.c.bf16 %v164, %v163
    %v572 = vlaneseq
    %v573 = vshrl.u32 %v572, 7
    %v574 = vsub.s32 0, %v573
    %v575 = vrot.slane %v551, %v574
    %v581 = vunpack.c.l.b16 %v547
    %v582 = vunpack.c.l.b16 %v548
    %v583 = vunpack.c.l.b16 %v549
    %v584 = vunpack.c.l.b16 %v550
    %v585 = vpack.c.b16 %v582, %v581
    %v586 = vpack.c.b16 %v584, %v583
    %v590 = vsel %vm125, %v570, 0
    %592 = vmatprep.subr.bf16.mxu0 0
    %593 = vmatpush1.bf16.msra.mxu0 %v585
    %594 = vmatprep.subr.bf16.mxu0 0
    %595 = vmatpush1.bf16.msra.mxu0 %v586
    %596 = vmatprep.subr.bf16.mxu0 0
    %597 = vmatpush1.bf16.msra.mxu0 0
    %598 = vmatprep.subr.bf16.mxu0 0
    %599 = vmatpush1.bf16.msra.mxu0 0
    %600 = vmatprep.subr.bf16.mxu0 0
    %601 = vmatpush1.bf16.msra.mxu0 0
    %602 = vmatprep.subr.bf16.mxu0 0
    %603 = vmatpush1.bf16.msra.mxu0 0
    %604 = vmatprep.subr.bf16.mxu0 0
    %605 = vmatpush1.bf16.msra.mxu0 0
    %606 = vmatprep.subr.bf16.mxu0 0
    %607 = vmatpush1.bf16.msra.mxu0 0
    %608 = vmatprep.subr.bf16.mxu0 0
    %609 = vmatpush1.bf16.msra.mxu0 0
    %610 = vmatprep.subr.bf16.mxu0 0
    %611 = vmatpush1.bf16.msra.mxu0 0
    %612 = vmatprep.subr.bf16.mxu0 0
    %613 = vmatpush1.bf16.msra.mxu0 0
    %614 = vmatprep.subr.bf16.mxu0 0
    %615 = vmatpush1.bf16.msra.mxu0 0
    %616 = vmatprep.subr.bf16.mxu0 0
    %617 = vmatpush1.bf16.msra.mxu0 0
    %618 = vmatprep.subr.bf16.mxu0 0
    %619 = vmatpush1.bf16.msra.mxu0 0
    %620 = vmatprep.subr.bf16.mxu0 0
    %621 = vmatpush1.bf16.msra.mxu0 0
    %622 = vmatprep.subr.bf16.mxu0 0
    %623 = vmatpush1.bf16.msra.mxu0 0
    %624 = vmatprep.mubr.bf16.mxu0 0
    %625 = vmatmul.mubr.bf16.gmra.mrb[0].mxu0 %v590
    %v626 = vpop.f32.mrb[0].mxu0
    %v627 = vadd.f32 %v575, %v626
    %v628 = vpop.f32.mrb[0].mxu0
    %v629 = vpop.f32.mrb[0].mxu0
    %v630 = vadd.f32 %v575, %v629
    %v631 = vpop.f32.mrb[0].mxu0
    %632 = vdwg.mxu0
    %v633 = vpack.c.bf16 %v627, %v627
    %635 = vrot.lane.b32.xlu0 %v627, 96
    %v636 = vpop.permute.xlu0 %635
    %v637 = vsel %vm201, %v627, 0
    %v639 = vsel %vm201, %v636, 0
    %641 = vmatprep.subr.mxu0 0.0
    %642 = vmatpush1.xpose.msra.mxu0 %v639
    %643 = vmatprep.subr.mxu0 0.0
    %644 = vmatpush1.xpose.msra.mxu0 0.0
    %645 = vmatprep.subr.mxu0 0.0
    %646 = vmatpush1.xpose.msra.mxu0 0.0
    %647 = vmatprep.subr.mxu0 0.0
    %648 = vmatpush1.xpose.msra.mxu0 0.0
    %649 = vmatprep.subr.mxu0 0.0
    %650 = vmatpush1.xpose.msra.mxu0 0.0
    %651 = vmatprep.subr.mxu0 0.0
    %652 = vmatpush1.xpose.msra.mxu0 0.0
    %653 = vmatprep.subr.mxu0 0.0
    %654 = vmatpush1.xpose.msra.mxu0 0.0
    %655 = vmatprep.subr.mxu0 0.0
    %656 = vmatpush1.xpose.msra.mxu0 0.0
    %657 = vmatprep.subr.mxu0 0.0
    %658 = vmatpush1.xpose.msra.mxu0 0.0
    %659 = vmatprep.subr.mxu0 0.0
    %660 = vmatpush1.xpose.msra.mxu0 0.0
    %661 = vmatprep.subr.mxu0 0.0
    %662 = vmatpush1.xpose.msra.mxu0 0.0
    %663 = vmatprep.subr.mxu0 0.0
    %664 = vmatpush1.xpose.msra.mxu0 0.0
    %665 = vmatprep.subr.mxu0 0.0
    %666 = vmatpush1.xpose.msra.mxu0 0.0
    %667 = vmatprep.subr.mxu0 0.0
    %668 = vmatpush1.xpose.msra.mxu0 0.0
    %669 = vmatprep.subr.mxu0 0.0
    %670 = vmatpush1.xpose.msra.mxu0 0.0
    %671 = vmatprep.subr.mxu0 0.0
    %672 = vmatpush1.xpose.msra.mxu0 0.0
    %673 = vmatprep.subr.mxu0 0.0
    %674 = vmatpush1.xpose.msra.mxu0 0.0
    %675 = vmatprep.subr.mxu0 0.0
    %676 = vmatpush1.xpose.msra.mxu0 0.0
    %677 = vmatprep.subr.mxu0 0.0
    %678 = vmatpush1.xpose.msra.mxu0 0.0
    %679 = vmatprep.subr.mxu0 0.0
    %680 = vmatpush1.xpose.msra.mxu0 0.0
    %681 = vmatprep.subr.mxu0 0.0
    %682 = vmatpush1.xpose.msra.mxu0 0.0
    %683 = vmatprep.subr.mxu0 0.0
    %684 = vmatpush1.xpose.msra.mxu0 0.0
    %685 = vmatprep.subr.mxu0 0.0
    %686 = vmatpush1.xpose.msra.mxu0 0.0
    %687 = vmatprep.subr.mxu0 0.0
    %688 = vmatpush1.xpose.msra.mxu0 0.0
    %689 = vmatprep.subr.mxu0 0.0
    %690 = vmatpush1.xpose.msra.mxu0 0.0
    %691 = vmatprep.subr.mxu0 0.0
    %692 = vmatpush1.xpose.msra.mxu0 0.0
    %693 = vmatprep.subr.mxu0 0.0
    %694 = vmatpush1.xpose.msra.mxu0 0.0
    %695 = vmatprep.subr.mxu0 0.0
    %696 = vmatpush1.xpose.msra.mxu0 0.0
    %697 = vmatprep.subr.mxu0 0.0
    %698 = vmatpush1.xpose.msra.mxu0 0.0
    %699 = vmatprep.subr.mxu0 0.0
    %700 = vmatpush1.xpose.msra.mxu0 0.0
    %701 = vmatprep.subr.mxu0 0.0
    %702 = vmatpush1.xpose.msra.mxu0 0.0
    %703 = vmatprep.subr.mxu0 0.0
    %704 = vmatpush1.xpose.msra.mxu0 0.0
    %705 = vmatprep.mubr.f32.mxu0 0.0
    %706 = vmatmul.mubr.f32.gmra.mrb[0].mxu0 %v637
    %v707 = vpop.f32.mrb[0].mxu0
    %v708 = vadd.f32 0.0, %v707
    %v709 = vpop.f32.mrb[0].mxu0
    %710 = vdwg.mxu0
    %v711 = vmul.f32 %v708, 0.35355338
    %v712 = vadd.f32 %v711, %v525
    %v713 = vsel %vm201, %v712, -inf
    %714 = vmax.xlane.f32.xlu0 %v713
    %v715 = vpop.xlane.xlu0 %714
    %v716 = vsub.f32 %v712, %v715
    %v717 = vmul.f32 %v716, 1.442695
    %v718 = vpow.pop %v717
    %v719 = vsel %vm201, %v718, 0.0
    %720 = vadd.xlane.f32.xlu0 %v719
    %v721 = vpop.xlane.xlu0 %720
    %v722 = vrcp.pop %v721
    %v723 = vmul.f32 %v718, %v722
    %v724 = vpack.c.bf16 %v723, %v723
    %726 = vrot.lane.b32.xlu0 %v633, 64
    %v727 = vpop.permute.xlu0 %726
    %v729 = vsel %vm201, %v724, 0
    %vm731 = vcmask 1043456
    %v733 = vsel %vm731, %v727, 0
    %735 = vmatprep.subr.bf16.mxu0 0
    %736 = vmatpush1.bf16.msra.mxu0 %v733
    %737 = vmatprep.subr.bf16.mxu0 0
    %738 = vmatpush1.bf16.msra.mxu0 0
    %739 = vmatprep.subr.bf16.mxu0 0
    %740 = vmatpush1.bf16.msra.mxu0 0
    %741 = vmatprep.subr.bf16.mxu0 0
    %742 = vmatpush1.bf16.msra.mxu0 0
    %743 = vmatprep.subr.bf16.mxu0 0
    %744 = vmatpush1.bf16.msra.mxu0 0
    %745 = vmatprep.subr.bf16.mxu0 0
    %746 = vmatpush1.bf16.msra.mxu0 0
    %747 = vmatprep.subr.bf16.mxu0 0
    %748 = vmatpush1.bf16.msra.mxu0 0
    %749 = vmatprep.subr.bf16.mxu0 0
    %750 = vmatpush1.bf16.msra.mxu0 0
    %751 = vmatprep.subr.bf16.mxu0 0
    %752 = vmatpush1.bf16.msra.mxu0 0
    %753 = vmatprep.subr.bf16.mxu0 0
    %754 = vmatpush1.bf16.msra.mxu0 0
    %755 = vmatprep.subr.bf16.mxu0 0
    %756 = vmatpush1.bf16.msra.mxu0 0
    %757 = vmatprep.subr.bf16.mxu0 0
    %758 = vmatpush1.bf16.msra.mxu0 0
    %759 = vmatprep.subr.bf16.mxu0 0
    %760 = vmatpush1.bf16.msra.mxu0 0
    %761 = vmatprep.subr.bf16.mxu0 0
    %762 = vmatpush1.bf16.msra.mxu0 0
    %763 = vmatprep.subr.bf16.mxu0 0
    %764 = vmatpush1.bf16.msra.mxu0 0
    %765 = vmatprep.subr.bf16.mxu0 0
    %766 = vmatpush1.bf16.msra.mxu0 0
    %767 = vmatprep.mubr.bf16.mxu0 0
    %768 = vmatmul.mubr.bf16.gmra.mrb[0].mxu0 %v729
    %v769 = vpop.f32.mrb[0].mxu0
    %v770 = vadd.f32 0.0, %v769
    %v771 = vpop.f32.mrb[0].mxu0
    %v772 = vpop.f32.mrb[0].mxu0
    %v773 = vpop.f32.mrb[0].mxu0
    %774 = vdwg.mxu0
    %v775 = vmul.f32 %v770, %v531
    %v776 = vadd.f32 %v775, 0.0
    %777 = vrot.lane.b32.xlu0 %v627, 120
    %v778 = vpop.permute.xlu0 %777
    %779 = vrot.lane.b32.xlu0 %v627, 88
    %v780 = vpop.permute.xlu0 %779
    %v781 = vsel %vm201, %v778, 0
    %v783 = vsel %vm201, %v780, 0
    %785 = vmatprep.subr.mxu0 0.0
    %786 = vmatpush1.xpose.msra.mxu0 %v783
    %787 = vmatprep.subr.mxu0 0.0
    %788 = vmatpush1.xpose.msra.mxu0 0.0
    %789 = vmatprep.subr.mxu0 0.0
    %790 = vmatpush1.xpose.msra.mxu0 0.0
    %791 = vmatprep.subr.mxu0 0.0
    %792 = vmatpush1.xpose.msra.mxu0 0.0
    %793 = vmatprep.subr.mxu0 0.0
    %794 = vmatpush1.xpose.msra.mxu0 0.0
    %795 = vmatprep.subr.mxu0 0.0
    %796 = vmatpush1.xpose.msra.mxu0 0.0
    %797 = vmatprep.subr.mxu0 0.0
    %798 = vmatpush1.xpose.msra.mxu0 0.0
    %799 = vmatprep.subr.mxu0 0.0
    %800 = vmatpush1.xpose.msra.mxu0 0.0
    %801 = vmatprep.subr.mxu0 0.0
    %802 = vmatpush1.xpose.msra.mxu0 0.0
    %803 = vmatprep.subr.mxu0 0.0
    %804 = vmatpush1.xpose.msra.mxu0 0.0
    %805 = vmatprep.subr.mxu0 0.0
    %806 = vmatpush1.xpose.msra.mxu0 0.0
    %807 = vmatprep.subr.mxu0 0.0
    %808 = vmatpush1.xpose.msra.mxu0 0.0
    %809 = vmatprep.subr.mxu0 0.0
    %810 = vmatpush1.xpose.msra.mxu0 0.0
    %811 = vmatprep.subr.mxu0 0.0
    %812 = vmatpush1.xpose.msra.mxu0 0.0
    %813 = vmatprep.subr.mxu0 0.0
    %814 = vmatpush1.xpose.msra.mxu0 0.0
    %815 = vmatprep.subr.mxu0 0.0
    %816 = vmatpush1.xpose.msra.mxu0 0.0
    %817 = vmatprep.subr.mxu0 0.0
    %818 = vmatpush1.xpose.msra.mxu0 0.0
    %819 = vmatprep.subr.mxu0 0.0
    %820 = vmatpush1.xpose.msra.mxu0 0.0
    %821 = vmatprep.subr.mxu0 0.0
    %822 = vmatpush1.xpose.msra.mxu0 0.0
    %823 = vmatprep.subr.mxu0 0.0
    %824 = vmatpush1.xpose.msra.mxu0 0.0
    %825 = vmatprep.subr.mxu0 0.0
    %826 = vmatpush1.xpose.msra.mxu0 0.0
    %827 = vmatprep.subr.mxu0 0.0
    %828 = vmatpush1.xpose.msra.mxu0 0.0
    %829 = vmatprep.subr.mxu0 0.0
    %830 = vmatpush1.xpose.msra.mxu0 0.0
    %831 = vmatprep.subr.mxu0 0.0
    %832 = vmatpush1.xpose.msra.mxu0 0.0
    %833 = vmatprep.subr.mxu0 0.0
    %834 = vmatpush1.xpose.msra.mxu0 0.0
    %835 = vmatprep.subr.mxu0 0.0
    %836 = vmatpush1.xpose.msra.mxu0 0.0
    %837 = vmatprep.subr.mxu0 0.0
    %838 = vmatpush1.xpose.msra.mxu0 0.0
    %839 = vmatprep.subr.mxu0 0.0
    %840 = vmatpush1.xpose.msra.mxu0 0.0
    %841 = vmatprep.subr.mxu0 0.0
    %842 = vmatpush1.xpose.msra.mxu0 0.0
    %843 = vmatprep.subr.mxu0 0.0
    %844 = vmatpush1.xpose.msra.mxu0 0.0
    %845 = vmatprep.subr.mxu0 0.0
    %846 = vmatpush1.xpose.msra.mxu0 0.0
    %847 = vmatprep.subr.mxu0 0.0
    %848 = vmatpush1.xpose.msra.mxu0 0.0
    %849 = vmatprep.mubr.f32.mxu0 0.0
    %850 = vmatmul.mubr.f32.gmra.mrb[0].mxu0 %v781
    %v851 = vpop.f32.mrb[0].mxu0
    %v852 = vadd.f32 0.0, %v851
    %v853 = vpop.f32.mrb[0].mxu0
    %854 = vdwg.mxu0
    %v855 = vmul.f32 %v852, 0.35355338
    %v856 = vadd.f32 %v855, %v525
    %v857 = vsel %vm201, %v856, -inf
    %858 = vmax.xlane.f32.xlu0 %v857
    %v859 = vpop.xlane.xlu0 %858
    %v860 = vsub.f32 %v856, %v859
    %v861 = vmul.f32 %v860, 1.442695
    %v862 = vpow.pop %v861
    %v863 = vsel %vm201, %v862, 0.0
    %864 = vadd.xlane.f32.xlu0 %v863
    %v865 = vpop.xlane.xlu0 %864
    %v866 = vrcp.pop %v865
    %v867 = vmul.f32 %v862, %v866
    %v868 = vpack.c.bf16 %v867, %v867
    %v870 = vsel %vm201, %v868, 0
    %872 = vmatprep.subr.bf16.mxu0 0
    %873 = vmatpush1.bf16.msra.mxu0 %v733
    %874 = vmatprep.subr.bf16.mxu0 0
    %875 = vmatpush1.bf16.msra.mxu0 0
    %876 = vmatprep.subr.bf16.mxu0 0
    %877 = vmatpush1.bf16.msra.mxu0 0
    %878 = vmatprep.subr.bf16.mxu0 0
    %879 = vmatpush1.bf16.msra.mxu0 0
    %880 = vmatprep.subr.bf16.mxu0 0
    %881 = vmatpush1.bf16.msra.mxu0 0
    %882 = vmatprep.subr.bf16.mxu0 0
    %883 = vmatpush1.bf16.msra.mxu0 0
    %884 = vmatprep.subr.bf16.mxu0 0
    %885 = vmatpush1.bf16.msra.mxu0 0
    %886 = vmatprep.subr.bf16.mxu0 0
    %887 = vmatpush1.bf16.msra.mxu0 0
    %888 = vmatprep.subr.bf16.mxu0 0
    %889 = vmatpush1.bf16.msra.mxu0 0
    %890 = vmatprep.subr.bf16.mxu0 0
    %891 = vmatpush1.bf16.msra.mxu0 0
    %892 = vmatprep.subr.bf16.mxu0 0
    %893 = vmatpush1.bf16.msra.mxu0 0
    %894 = vmatprep.subr.bf16.mxu0 0
    %895 = vmatpush1.bf16.msra.mxu0 0
    %896 = vmatprep.subr.bf16.mxu0 0
    %897 = vmatpush1.bf16.msra.mxu0 0
    %898 = vmatprep.subr.bf16.mxu0 0
    %899 = vmatpush1.bf16.msra.mxu0 0
    %900 = vmatprep.subr.bf16.mxu0 0
    %901 = vmatpush1.bf16.msra.mxu0 0
    %902 = vmatprep.subr.bf16.mxu0 0
    %903 = vmatpush1.bf16.msra.mxu0 0
    %904 = vmatprep.mubr.bf16.mxu0 0
    %905 = vmatmul.mubr.bf16.gmra.mrb[0].mxu0 %v870
    %v906 = vpop.f32.mrb[0].mxu0
    %v907 = vadd.f32 0.0, %v906
    %v908 = vpop.f32.mrb[0].mxu0
    %v909 = vpop.f32.mrb[0].mxu0
    %v910 = vpop.f32.mrb[0].mxu0
    %911 = vdwg.mxu0
    %v912 = vmul.f32 %v907, %v536
    %v913 = vadd.f32 %v776, %v912
    %914 = vrot.lane.b32.xlu0 %v627, 112
    %v915 = vpop.permute.xlu0 %914
    %916 = vrot.lane.b32.xlu0 %v627, 80
    %v917 = vpop.permute.xlu0 %916
    %v918 = vsel %vm201, %v915, 0
    %v920 = vsel %vm201, %v917, 0
    %922 = vmatprep.subr.mxu0 0.0
    %923 = vmatpush1.xpose.msra.mxu0 %v920
    %924 = vmatprep.subr.mxu0 0.0
    %925 = vmatpush1.xpose.msra.mxu0 0.0
    %926 = vmatprep.subr.mxu0 0.0
    %927 = vmatpush1.xpose.msra.mxu0 0.0
    %928 = vmatprep.subr.mxu0 0.0
    %929 = vmatpush1.xpose.msra.mxu0 0.0
    %930 = vmatprep.subr.mxu0 0.0
    %931 = vmatpush1.xpose.msra.mxu0 0.0
    %932 = vmatprep.subr.mxu0 0.0
    %933 = vmatpush1.xpose.msra.mxu0 0.0
    %934 = vmatprep.subr.mxu0 0.0
    %935 = vmatpush1.xpose.msra.mxu0 0.0
    %936 = vmatprep.subr.mxu0 0.0
    %937 = vmatpush1.xpose.msra.mxu0 0.0
    %938 = vmatprep.subr.mxu0 0.0
    %939 = vmatpush1.xpose.msra.mxu0 0.0
    %940 = vmatprep.subr.mxu0 0.0
    %941 = vmatpush1.xpose.msra.mxu0 0.0
    %942 = vmatprep.subr.mxu0 0.0
    %943 = vmatpush1.xpose.msra.mxu0 0.0
    %944 = vmatprep.subr.mxu0 0.0
    %945 = vmatpush1.xpose.msra.mxu0 0.0
    %946 = vmatprep.subr.mxu0 0.0
    %947 = vmatpush1.xpose.msra.mxu0 0.0
    %948 = vmatprep.subr.mxu0 0.0
    %949 = vmatpush1.xpose.msra.mxu0 0.0
    %950 = vmatprep.subr.mxu0 0.0
    %951 = vmatpush1.xpose.msra.mxu0 0.0
    %952 = vmatprep.subr.mxu0 0.0
    %953 = vmatpush1.xpose.msra.mxu0 0.0
    %954 = vmatprep.subr.mxu0 0.0
    %955 = vmatpush1.xpose.msra.mxu0 0.0
    %956 = vmatprep.subr.mxu0 0.0
    %957 = vmatpush1.xpose.msra.mxu0 0.0
    %958 = vmatprep.subr.mxu0 0.0
    %959 = vmatpush1.xpose.msra.mxu0 0.0
    %960 = vmatprep.subr.mxu0 0.0
    %961 = vmatpush1.xpose.msra.mxu0 0.0
    %962 = vmatprep.subr.mxu0 0.0
    %963 = vmatpush1.xpose.msra.mxu0 0.0
    %964 = vmatprep.subr.mxu0 0.0
    %965 = vmatpush1.xpose.msra.mxu0 0.0
    %966 = vmatprep.subr.mxu0 0.0
    %967 = vmatpush1.xpose.msra.mxu0 0.0
    %968 = vmatprep.subr.mxu0 0.0
    %969 = vmatpush1.xpose.msra.mxu0 0.0
    %970 = vmatprep.subr.mxu0 0.0
    %971 = vmatpush1.xpose.msra.mxu0 0.0
    %972 = vmatprep.subr.mxu0 0.0
    %973 = vmatpush1.xpose.msra.mxu0 0.0
    %974 = vmatprep.subr.mxu0 0.0
    %975 = vmatpush1.xpose.msra.mxu0 0.0
    %976 = vmatprep.subr.mxu0 0.0
    %977 = vmatpush1.xpose.msra.mxu0 0.0
    %978 = vmatprep.subr.mxu0 0.0
    %979 = vmatpush1.xpose.msra.mxu0 0.0
    %980 = vmatprep.subr.mxu0 0.0
    %981 = vmatpush1.xpose.msra.mxu0 0.0
    %982 = vmatprep.subr.mxu0 0.0
    %983 = vmatpush1.xpose.msra.mxu0 0.0
    %984 = vmatprep.subr.mxu0 0.0
    %985 = vmatpush1.xpose.msra.mxu0 0.0
    %986 = vmatprep.mubr.f32.mxu0 0.0
    %987 = vmatmul.mubr.f32.gmra.mrb[0].mxu0 %v918
    %v988 = vpop.f32.mrb[0].mxu0
    %v989 = vadd.f32 0.0, %v988
    %v990 = vpop.f32.mrb[0].mxu0
    %991 = vdwg.mxu0
    %v992 = vmul.f32 %v989, 0.35355338
    %v993 = vadd.f32 %v992, %v525
    %v994 = vsel %vm201, %v993, -inf
    %995 = vmax.xlane.f32.xlu0 %v994
    %v996 = vpop.xlane.xlu0 %995
    %v997 = vsub.f32 %v993, %v996
    %v998 = vmul.f32 %v997, 1.442695
    %v999 = vpow.pop %v998
    %v1000 = vsel %vm201, %v999, 0.0
    %1001 = vadd.xlane.f32.xlu0 %v1000
    %v1002 = vpop.xlane.xlu0 %1001
    %v1003 = vrcp.pop %v1002
    %v1004 = vmul.f32 %v999, %v1003
    %v1005 = vpack.c.bf16 %v1004, %v1004
    %v1007 = vsel %vm201, %v1005, 0
    %1009 = vmatprep.subr.bf16.mxu0 0
    %1010 = vmatpush1.bf16.msra.mxu0 %v733
    %1011 = vmatprep.subr.bf16.mxu0 0
    %1012 = vmatpush1.bf16.msra.mxu0 0
    %1013 = vmatprep.subr.bf16.mxu0 0
    %1014 = vmatpush1.bf16.msra.mxu0 0
    %1015 = vmatprep.subr.bf16.mxu0 0
    %1016 = vmatpush1.bf16.msra.mxu0 0
    %1017 = vmatprep.subr.bf16.mxu0 0
    %1018 = vmatpush1.bf16.msra.mxu0 0
    %1019 = vmatprep.subr.bf16.mxu0 0
    %1020 = vmatpush1.bf16.msra.mxu0 0
    %1021 = vmatprep.subr.bf16.mxu0 0
    %1022 = vmatpush1.bf16.msra.mxu0 0
    %1023 = vmatprep.subr.bf16.mxu0 0
    %1024 = vmatpush1.bf16.msra.mxu0 0
    %1025 = vmatprep.subr.bf16.mxu0 0
    %1026 = vmatpush1.bf16.msra.mxu0 0
    %1027 = vmatprep.subr.bf16.mxu0 0
    %1028 = vmatpush1.bf16.msra.mxu0 0
    %1029 = vmatprep.subr.bf16.mxu0 0
    %1030 = vmatpush1.bf16.msra.mxu0 0
    %1031 = vmatprep.subr.bf16.mxu0 0
    %1032 = vmatpush1.bf16.msra.mxu0 0
    %1033 = vmatprep.subr.bf16.mxu0 0
    %1034 = vmatpush1.bf16.msra.mxu0 0
    %1035 = vmatprep.subr.bf16.mxu0 0
    %1036 = vmatpush1.bf16.msra.mxu0 0
    %1037 = vmatprep.subr.bf16.mxu0 0
    %1038 = vmatpush1.bf16.msra.mxu0 0
    %1039 = vmatprep.subr.bf16.mxu0 0
    %1040 = vmatpush1.bf16.msra.mxu0 0
    %1041 = vmatprep.mubr.bf16.mxu0 0
    %1042 = vmatmul.mubr.bf16.gmra.mrb[0].mxu0 %v1007
    %v1043 = vpop.f32.mrb[0].mxu0
    %v1044 = vadd.f32 0.0, %v1043
    %v1045 = vpop.f32.mrb[0].mxu0
    %v1046 = vpop.f32.mrb[0].mxu0
    %v1047 = vpop.f32.mrb[0].mxu0
    %1048 = vdwg.mxu0
    %v1049 = vmul.f32 %v1044, %v541
    %v1050 = vadd.f32 %v913, %v1049
    %1051 = vrot.lane.b32.xlu0 %v627, 104
    %v1052 = vpop.permute.xlu0 %1051
    %1053 = vrot.lane.b32.xlu0 %v627, 72
    %v1054 = vpop.permute.xlu0 %1053
    %v1055 = vsel %vm201, %v1052, 0
    %v1057 = vsel %vm201, %v1054, 0
    %1059 = vmatprep.subr.mxu0 0.0
    %1060 = vmatpush1.xpose.msra.mxu0 %v1057
    %1061 = vmatprep.subr.mxu0 0.0
    %1062 = vmatpush1.xpose.msra.mxu0 0.0
    %1063 = vmatprep.subr.mxu0 0.0
    %1064 = vmatpush1.xpose.msra.mxu0 0.0
    %1065 = vmatprep.subr.mxu0 0.0
    %1066 = vmatpush1.xpose.msra.mxu0 0.0
    %1067 = vmatprep.subr.mxu0 0.0
    %1068 = vmatpush1.xpose.msra.mxu0 0.0
    %1069 = vmatprep.subr.mxu0 0.0
    %1070 = vmatpush1.xpose.msra.mxu0 0.0
    %1071 = vmatprep.subr.mxu0 0.0
    %1072 = vmatpush1.xpose.msra.mxu0 0.0
    %1073 = vmatprep.subr.mxu0 0.0
    %1074 = vmatpush1.xpose.msra.mxu0 0.0
    %1075 = vmatprep.subr.mxu0 0.0
    %1076 = vmatpush1.xpose.msra.mxu0 0.0
    %1077 = vmatprep.subr.mxu0 0.0
    %1078 = vmatpush1.xpose.msra.mxu0 0.0
    %1079 = vmatprep.subr.mxu0 0.0
    %1080 = vmatpush1.xpose.msra.mxu0 0.0
    %1081 = vmatprep.subr.mxu0 0.0
    %1082 = vmatpush1.xpose.msra.mxu0 0.0
    %1083 = vmatprep.subr.mxu0 0.0
    %1084 = vmatpush1.xpose.msra.mxu0 0.0
    %1085 = vmatprep.subr.mxu0 0.0
    %1086 = vmatpush1.xpose.msra.mxu0 0.0
    %1087 = vmatprep.subr.mxu0 0.0
    %1088 = vmatpush1.xpose.msra.mxu0 0.0
    %1089 = vmatprep.subr.mxu0 0.0
    %1090 = vmatpush1.xpose.msra.mxu0 0.0
    %1091 = vmatprep.subr.mxu0 0.0
    %1092 = vmatpush1.xpose.msra.mxu0 0.0
    %1093 = vmatprep.subr.mxu0 0.0
    %1094 = vmatpush1.xpose.msra.mxu0 0.0
    %1095 = vmatprep.subr.mxu0 0.0
    %1096 = vmatpush1.xpose.msra.mxu0 0.0
    %1097 = vmatprep.subr.mxu0 0.0
    %1098 = vmatpush1.xpose.msra.mxu0 0.0
    %1099 = vmatprep.subr.mxu0 0.0
    %1100 = vmatpush1.xpose.msra.mxu0 0.0
    %1101 = vmatprep.subr.mxu0 0.0
    %1102 = vmatpush1.xpose.msra.mxu0 0.0
    %1103 = vmatprep.subr.mxu0 0.0
    %1104 = vmatpush1.xpose.msra.mxu0 0.0
    %1105 = vmatprep.subr.mxu0 0.0
    %1106 = vmatpush1.xpose.msra.mxu0 0.0
    %1107 = vmatprep.subr.mxu0 0.0
    %1108 = vmatpush1.xpose.msra.mxu0 0.0
    %1109 = vmatprep.subr.mxu0 0.0
    %1110 = vmatpush1.xpose.msra.mxu0 0.0
    %1111 = vmatprep.subr.mxu0 0.0
    %1112 = vmatpush1.xpose.msra.mxu0 0.0
    %1113 = vmatprep.subr.mxu0 0.0
    %1114 = vmatpush1.xpose.msra.mxu0 0.0
    %1115 = vmatprep.subr.mxu0 0.0
    %1116 = vmatpush1.xpose.msra.mxu0 0.0
    %1117 = vmatprep.subr.mxu0 0.0
    %1118 = vmatpush1.xpose.msra.mxu0 0.0
    %1119 = vmatprep.subr.mxu0 0.0
    %1120 = vmatpush1.xpose.msra.mxu0 0.0
    %1121 = vmatprep.subr.mxu0 0.0
    %1122 = vmatpush1.xpose.msra.mxu0 0.0
    %1123 = vmatprep.mubr.f32.mxu0 0.0
    %1124 = vmatmul.mubr.f32.gmra.mrb[0].mxu0 %v1055
    %v1125 = vpop.f32.mrb[0].mxu0
    %v1126 = vadd.f32 0.0, %v1125
    %v1127 = vpop.f32.mrb[0].mxu0
    %1128 = vdwg.mxu0
    %v1129 = vmul.f32 %v1126, 0.35355338
    %v1130 = vadd.f32 %v1129, %v525
    %v1131 = vsel %vm201, %v1130, -inf
    %1132 = vmax.xlane.f32.xlu0 %v1131
    %v1133 = vpop.xlane.xlu0 %1132
    %v1134 = vsub.f32 %v1130, %v1133
    %v1135 = vmul.f32 %v1134, 1.442695
    %v1136 = vpow.pop %v1135
    %v1137 = vsel %vm201, %v1136, 0.0
    %1138 = vadd.xlane.f32.xlu0 %v1137
    %v1139 = vpop.xlane.xlu0 %1138
    %v1140 = vrcp.pop %v1139
    %v1141 = vmul.f32 %v1136, %v1140
    %v1142 = vpack.c.bf16 %v1141, %v1141
    %v1144 = vsel %vm201, %v1142, 0
    %1146 = vmatprep.subr.bf16.mxu0 0
    %1147 = vmatpush1.bf16.msra.mxu0 %v733
    %1148 = vmatprep.subr.bf16.mxu0 0
    %1149 = vmatpush1.bf16.msra.mxu0 0
    %1150 = vmatprep.subr.bf16.mxu0 0
    %1151 = vmatpush1.bf16.msra.mxu0 0
    %1152 = vmatprep.subr.bf16.mxu0 0
    %1153 = vmatpush1.bf16.msra.mxu0 0
    %1154 = vmatprep.subr.bf16.mxu0 0
    %1155 = vmatpush1.bf16.msra.mxu0 0
    %1156 = vmatprep.subr.bf16.mxu0 0
    %1157 = vmatpush1.bf16.msra.mxu0 0
    %1158 = vmatprep.subr.bf16.mxu0 0
    %1159 = vmatpush1.bf16.msra.mxu0 0
    %1160 = vmatprep.subr.bf16.mxu0 0
    %1161 = vmatpush1.bf16.msra.mxu0 0
    %1162 = vmatprep.subr.bf16.mxu0 0
    %1163 = vmatpush1.bf16.msra.mxu0 0
    %1164 = vmatprep.subr.bf16.mxu0 0
    %1165 = vmatpush1.bf16.msra.mxu0 0
    %1166 = vmatprep.subr.bf16.mxu0 0
    %1167 = vmatpush1.bf16.msra.mxu0 0
    %1168 = vmatprep.subr.bf16.mxu0 0
    %1169 = vmatpush1.bf16.msra.mxu0 0
    %1170 = vmatprep.subr.bf16.mxu0 0
    %1171 = vmatpush1.bf16.msra.mxu0 0
    %1172 = vmatprep.subr.bf16.mxu0 0
    %1173 = vmatpush1.bf16.msra.mxu0 0
    %1174 = vmatprep.subr.bf16.mxu0 0
    %1175 = vmatpush1.bf16.msra.mxu0 0
    %1176 = vmatprep.subr.bf16.mxu0 0
    %1177 = vmatpush1.bf16.msra.mxu0 0
    %1178 = vmatprep.mubr.bf16.mxu0 0
    %1179 = vmatmul.mubr.bf16.gmra.mrb[0].mxu0 %v1144
    %v1180 = vpop.f32.mrb[0].mxu0
    %v1181 = vadd.f32 0.0, %v1180
    %v1182 = vpop.f32.mrb[0].mxu0
    %v1183 = vpop.f32.mrb[0].mxu0
    %v1184 = vpop.f32.mrb[0].mxu0
    %1185 = vdwg.mxu0
    %v1186 = vmul.f32 %v1181, %v546
    %v1187 = vadd.f32 %v1050, %v1186
    %v1188 = vpack.c.bf16 %v630, %v630
    %1190 = vrot.lane.b32.xlu0 %v630, 96
    %v1191 = vpop.permute.xlu0 %1190
    %v1192 = vsel %vm201, %v630, 0
    %v1194 = vsel %vm201, %v1191, 0
    %1196 = vmatprep.subr.mxu0 0.0
    %1197 = vmatpush1.xpose.msra.mxu0 %v1194
    %1198 = vmatprep.subr.mxu0 0.0
    %1199 = vmatpush1.xpose.msra.mxu0 0.0
    %1200 = vmatprep.subr.mxu0 0.0
    %1201 = vmatpush1.xpose.msra.mxu0 0.0
    %1202 = vmatprep.subr.mxu0 0.0
    %1203 = vmatpush1.xpose.msra.mxu0 0.0
    %1204 = vmatprep.subr.mxu0 0.0
    %1205 = vmatpush1.xpose.msra.mxu0 0.0
    %1206 = vmatprep.subr.mxu0 0.0
    %1207 = vmatpush1.xpose.msra.mxu0 0.0
    %1208 = vmatprep.subr.mxu0 0.0
    %1209 = vmatpush1.xpose.msra.mxu0 0.0
    %1210 = vmatprep.subr.mxu0 0.0
    %1211 = vmatpush1.xpose.msra.mxu0 0.0
    %1212 = vmatprep.subr.mxu0 0.0
    %1213 = vmatpush1.xpose.msra.mxu0 0.0
    %1214 = vmatprep.subr.mxu0 0.0
    %1215 = vmatpush1.xpose.msra.mxu0 0.0
    %1216 = vmatprep.subr.mxu0 0.0
    %1217 = vmatpush1.xpose.msra.mxu0 0.0
    %1218 = vmatprep.subr.mxu0 0.0
    %1219 = vmatpush1.xpose.msra.mxu0 0.0
    %1220 = vmatprep.subr.mxu0 0.0
    %1221 = vmatpush1.xpose.msra.mxu0 0.0
    %1222 = vmatprep.subr.mxu0 0.0
    %1223 = vmatpush1.xpose.msra.mxu0 0.0
    %1224 = vmatprep.subr.mxu0 0.0
    %1225 = vmatpush1.xpose.msra.mxu0 0.0
    %1226 = vmatprep.subr.mxu0 0.0
    %1227 = vmatpush1.xpose.msra.mxu0 0.0
    %1228 = vmatprep.subr.mxu0 0.0
    %1229 = vmatpush1.xpose.msra.mxu0 0.0
    %1230 = vmatprep.subr.mxu0 0.0
    %1231 = vmatpush1.xpose.msra.mxu0 0.0
    %1232 = vmatprep.subr.mxu0 0.0
    %1233 = vmatpush1.xpose.msra.mxu0 0.0
    %1234 = vmatprep.subr.mxu0 0.0
    %1235 = vmatpush1.xpose.msra.mxu0 0.0
    %1236 = vmatprep.subr.mxu0 0.0
    %1237 = vmatpush1.xpose.msra.mxu0 0.0
    %1238 = vmatprep.subr.mxu0 0.0
    %1239 = vmatpush1.xpose.msra.mxu0 0.0
    %1240 = vmatprep.subr.mxu0 0.0
    %1241 = vmatpush1.xpose.msra.mxu0 0.0
    %1242 = vmatprep.subr.mxu0 0.0
    %1243 = vmatpush1.xpose.msra.mxu0 0.0
    %1244 = vmatprep.subr.mxu0 0.0
    %1245 = vmatpush1.xpose.msra.mxu0 0.0
    %1246 = vmatprep.subr.mxu0 0.0
    %1247 = vmatpush1.xpose.msra.mxu0 0.0
    %1248 = vmatprep.subr.mxu0 0.0
    %1249 = vmatpush1.xpose.msra.mxu0 0.0
    %1250 = vmatprep.subr.mxu0 0.0
    %1251 = vmatpush1.xpose.msra.mxu0 0.0
    %1252 = vmatprep.subr.mxu0 0.0
    %1253 = vmatpush1.xpose.msra.mxu0 0.0
    %1254 = vmatprep.subr.mxu0 0.0
    %1255 = vmatpush1.xpose.msra.mxu0 0.0
    %1256 = vmatprep.subr.mxu0 0.0
    %1257 = vmatpush1.xpose.msra.mxu0 0.0
    %1258 = vmatprep.subr.mxu0 0.0
    %1259 = vmatpush1.xpose.msra.mxu0 0.0
    %1260 = vmatprep.mubr.f32.mxu0 0.0
    %1261 = vmatmul.mubr.f32.gmra.mrb[0].mxu0 %v1192
    %v1262 = vpop.f32.mrb[0].mxu0
    %v1263 = vadd.f32 0.0, %v1262
    %v1264 = vpop.f32.mrb[0].mxu0
    %1265 = vdwg.mxu0
    %v1266 = vmul.f32 %v1263, 0.35355338
    %1268 = vrot.lane.b32.xlu0 %v526, 120
    %v1269 = vpop.permute.xlu0 %1268
    %v1271 = vadd.f32 %v1266, %v1269
    %v1272 = vsel %vm201, %v1271, -inf
    %1273 = vmax.xlane.f32.xlu0 %v1272
    %v1274 = vpop.xlane.xlu0 %1273
    %v1275 = vsub.f32 %v1271, %v1274
    %v1276 = vmul.f32 %v1275, 1.442695
    %v1277 = vpow.pop %v1276
    %v1278 = vsel %vm201, %v1277, 0.0
    %1279 = vadd.xlane.f32.xlu0 %v1278
    %v1280 = vpop.xlane.xlu0 %1279
    %v1281 = vrcp.pop %v1280
    %v1282 = vmul.f32 %v1277, %v1281
    %v1283 = vpack.c.bf16 %v1282, %v1282
    %1285 = vrot.lane.b32.xlu0 %v1188, 64
    %v1286 = vpop.permute.xlu0 %1285
    %v1288 = vsel %vm201, %v1283, 0
    %v1291 = vsel %vm731, %v1286, 0
    %1293 = vmatprep.subr.bf16.mxu0 0
    %1294 = vmatpush1.bf16.msra.mxu0 %v1291
    %1295 = vmatprep.subr.bf16.mxu0 0
    %1296 = vmatpush1.bf16.msra.mxu0 0
    %1297 = vmatprep.subr.bf16.mxu0 0
    %1298 = vmatpush1.bf16.msra.mxu0 0
    %1299 = vmatprep.subr.bf16.mxu0 0
    %1300 = vmatpush1.bf16.msra.mxu0 0
    %1301 = vmatprep.subr.bf16.mxu0 0
    %1302 = vmatpush1.bf16.msra.mxu0 0
    %1303 = vmatprep.subr.bf16.mxu0 0
    %1304 = vmatpush1.bf16.msra.mxu0 0
    %1305 = vmatprep.subr.bf16.mxu0 0
    %1306 = vmatpush1.bf16.msra.mxu0 0
    %1307 = vmatprep.subr.bf16.mxu0 0
    %1308 = vmatpush1.bf16.msra.mxu0 0
    %1309 = vmatprep.subr.bf16.mxu0 0
    %1310 = vmatpush1.bf16.msra.mxu0 0
    %1311 = vmatprep.subr.bf16.mxu0 0
    %1312 = vmatpush1.bf16.msra.mxu0 0
    %1313 = vmatprep.subr.bf16.mxu0 0
    %1314 = vmatpush1.bf16.msra.mxu0 0
    %1315 = vmatprep.subr.bf16.mxu0 0
    %1316 = vmatpush1.bf16.msra.mxu0 0
    %1317 = vmatprep.subr.bf16.mxu0 0
    %1318 = vmatpush1.bf16.msra.mxu0 0
    %1319 = vmatprep.subr.bf16.mxu0 0
    %1320 = vmatpush1.bf16.msra.mxu0 0
    %1321 = vmatprep.subr.bf16.mxu0 0
    %1322 = vmatpush1.bf16.msra.mxu0 0
    %1323 = vmatprep.subr.bf16.mxu0 0
    %1324 = vmatpush1.bf16.msra.mxu0 0
    %1325 = vmatprep.mubr.bf16.mxu0 0
    %1326 = vmatmul.mubr.bf16.gmra.mrb[0].mxu0 %v1288
    %v1327 = vpop.f32.mrb[0].mxu0
    %v1328 = vadd.f32 0.0, %v1327
    %v1329 = vpop.f32.mrb[0].mxu0
    %v1330 = vpop.f32.mrb[0].mxu0
    %v1331 = vpop.f32.mrb[0].mxu0
    %1332 = vdwg.mxu0
    %v1333 = vmul.f32 %v1328, %v531
    %v1334 = vadd.f32 %v1333, 0.0
    %1335 = vrot.lane.b32.xlu0 %v630, 120
    %v1336 = vpop.permute.xlu0 %1335
    %1337 = vrot.lane.b32.xlu0 %v630, 88
    %v1338 = vpop.permute.xlu0 %1337
    %v1339 = vsel %vm201, %v1336, 0
    %v1341 = vsel %vm201, %v1338, 0
    %1343 = vmatprep.subr.mxu0 0.0
    %1344 = vmatpush1.xpose.msra.mxu0 %v1341
    %1345 = vmatprep.subr.mxu0 0.0
    %1346 = vmatpush1.xpose.msra.mxu0 0.0
    %1347 = vmatprep.subr.mxu0 0.0
    %1348 = vmatpush1.xpose.msra.mxu0 0.0
    %1349 = vmatprep.subr.mxu0 0.0
    %1350 = vmatpush1.xpose.msra.mxu0 0.0
    %1351 = vmatprep.subr.mxu0 0.0
    %1352 = vmatpush1.xpose.msra.mxu0 0.0
    %1353 = vmatprep.subr.mxu0 0.0
    %1354 = vmatpush1.xpose.msra.mxu0 0.0
    %1355 = vmatprep.subr.mxu0 0.0
    %1356 = vmatpush1.xpose.msra.mxu0 0.0
    %1357 = vmatprep.subr.mxu0 0.0
    %1358 = vmatpush1.xpose.msra.mxu0 0.0
    %1359 = vmatprep.subr.mxu0 0.0
    %1360 = vmatpush1.xpose.msra.mxu0 0.0
    %1361 = vmatprep.subr.mxu0 0.0
    %1362 = vmatpush1.xpose.msra.mxu0 0.0
    %1363 = vmatprep.subr.mxu0 0.0
    %1364 = vmatpush1.xpose.msra.mxu0 0.0
    %1365 = vmatprep.subr.mxu0 0.0
    %1366 = vmatpush1.xpose.msra.mxu0 0.0
    %1367 = vmatprep.subr.mxu0 0.0
    %1368 = vmatpush1.xpose.msra.mxu0 0.0
    %1369 = vmatprep.subr.mxu0 0.0
    %1370 = vmatpush1.xpose.msra.mxu0 0.0
    %1371 = vmatprep.subr.mxu0 0.0
    %1372 = vmatpush1.xpose.msra.mxu0 0.0
    %1373 = vmatprep.subr.mxu0 0.0
    %1374 = vmatpush1.xpose.msra.mxu0 0.0
    %1375 = vmatprep.subr.mxu0 0.0
    %1376 = vmatpush1.xpose.msra.mxu0 0.0
    %1377 = vmatprep.subr.mxu0 0.0
    %1378 = vmatpush1.xpose.msra.mxu0 0.0
    %1379 = vmatprep.subr.mxu0 0.0
    %1380 = vmatpush1.xpose.msra.mxu0 0.0
    %1381 = vmatprep.subr.mxu0 0.0
    %1382 = vmatpush1.xpose.msra.mxu0 0.0
    %1383 = vmatprep.subr.mxu0 0.0
    %1384 = vmatpush1.xpose.msra.mxu0 0.0
    %1385 = vmatprep.subr.mxu0 0.0
    %1386 = vmatpush1.xpose.msra.mxu0 0.0
    %1387 = vmatprep.subr.mxu0 0.0
    %1388 = vmatpush1.xpose.msra.mxu0 0.0
    %1389 = vmatprep.subr.mxu0 0.0
    %1390 = vmatpush1.xpose.msra.mxu0 0.0
    %1391 = vmatprep.subr.mxu0 0.0
    %1392 = vmatpush1.xpose.msra.mxu0 0.0
    %1393 = vmatprep.subr.mxu0 0.0
    %1394 = vmatpush1.xpose.msra.mxu0 0.0
    %1395 = vmatprep.subr.mxu0 0.0
    %1396 = vmatpush1.xpose.msra.mxu0 0.0
    %1397 = vmatprep.subr.mxu0 0.0
    %1398 = vmatpush1.xpose.msra.mxu0 0.0
    %1399 = vmatprep.subr.mxu0 0.0
    %1400 = vmatpush1.xpose.msra.mxu0 0.0
    %1401 = vmatprep.subr.mxu0 0.0
    %1402 = vmatpush1.xpose.msra.mxu0 0.0
    %1403 = vmatprep.subr.mxu0 0.0
    %1404 = vmatpush1.xpose.msra.mxu0 0.0
    %1405 = vmatprep.subr.mxu0 0.0
    %1406 = vmatpush1.xpose.msra.mxu0 0.0
    %1407 = vmatprep.mubr.f32.mxu0 0.0
    %1408 = vmatmul.mubr.f32.gmra.mrb[0].mxu0 %v1339
    %v1409 = vpop.f32.mrb[0].mxu0
    %v1410 = vadd.f32 0.0, %v1409
    %v1411 = vpop.f32.mrb[0].mxu0
    %1412 = vdwg.mxu0
    %v1413 = vmul.f32 %v1410, 0.35355338
    %v1414 = vadd.f32 %v1413, %v1269
    %v1415 = vsel %vm201, %v1414, -inf
    %1416 = vmax.xlane.f32.xlu0 %v1415
    %v1417 = vpop.xlane.xlu0 %1416
    %v1418 = vsub.f32 %v1414, %v1417
    %v1419 = vmul.f32 %v1418, 1.442695
    %v1420 = vpow.pop %v1419
    %v1421 = vsel %vm201, %v1420, 0.0
    %1422 = vadd.xlane.f32.xlu0 %v1421
    %v1423 = vpop.xlane.xlu0 %1422
    %v1424 = vrcp.pop %v1423
    %v1425 = vmul.f32 %v1420, %v1424
    %v1426 = vpack.c.bf16 %v1425, %v1425
    %v1428 = vsel %vm201, %v1426, 0
    %1430 = vmatprep.subr.bf16.mxu0 0
    %1431 = vmatpush1.bf16.msra.mxu0 %v1291
    %1432 = vmatprep.subr.bf16.mxu0 0
    %1433 = vmatpush1.bf16.msra.mxu0 0
    %1434 = vmatprep.subr.bf16.mxu0 0
    %1435 = vmatpush1.bf16.msra.mxu0 0
    %1436 = vmatprep.subr.bf16.mxu0 0
    %1437 = vmatpush1.bf16.msra.mxu0 0
    %1438 = vmatprep.subr.bf16.mxu0 0
    %1439 = vmatpush1.bf16.msra.mxu0 0
    %1440 = vmatprep.subr.bf16.mxu0 0
    %1441 = vmatpush1.bf16.msra.mxu0 0
    %1442 = vmatprep.subr.bf16.mxu0 0
    %1443 = vmatpush1.bf16.msra.mxu0 0
    %1444 = vmatprep.subr.bf16.mxu0 0
    %1445 = vmatpush1.bf16.msra.mxu0 0
    %1446 = vmatprep.subr.bf16.mxu0 0
    %1447 = vmatpush1.bf16.msra.mxu0 0
    %1448 = vmatprep.subr.bf16.mxu0 0
    %1449 = vmatpush1.bf16.msra.mxu0 0
    %1450 = vmatprep.subr.bf16.mxu0 0
    %1451 = vmatpush1.bf16.msra.mxu0 0
    %1452 = vmatprep.subr.bf16.mxu0 0
    %1453 = vmatpush1.bf16.msra.mxu0 0
    %1454 = vmatprep.subr.bf16.mxu0 0
    %1455 = vmatpush1.bf16.msra.mxu0 0
    %1456 = vmatprep.subr.bf16.mxu0 0
    %1457 = vmatpush1.bf16.msra.mxu0 0
    %1458 = vmatprep.subr.bf16.mxu0 0
    %1459 = vmatpush1.bf16.msra.mxu0 0
    %1460 = vmatprep.subr.bf16.mxu0 0
    %1461 = vmatpush1.bf16.msra.mxu0 0
    %1462 = vmatprep.mubr.bf16.mxu0 0
    %1463 = vmatmul.mubr.bf16.gmra.mrb[0].mxu0 %v1428
    %v1464 = vpop.f32.mrb[0].mxu0
    %v1465 = vadd.f32 0.0, %v1464
    %v1466 = vpop.f32.mrb[0].mxu0
    %v1467 = vpop.f32.mrb[0].mxu0
    %v1468 = vpop.f32.mrb[0].mxu0
    %1469 = vdwg.mxu0
    %v1470 = vmul.f32 %v1465, %v536
    %v1471 = vadd.f32 %v1334, %v1470
    %1472 = vrot.lane.b32.xlu0 %v630, 112
    %v1473 = vpop.permute.xlu0 %1472
    %1474 = vrot.lane.b32.xlu0 %v630, 80
    %v1475 = vpop.permute.xlu0 %1474
    %v1476 = vsel %vm201, %v1473, 0
    %v1478 = vsel %vm201, %v1475, 0
    %1480 = vmatprep.subr.mxu0 0.0
    %1481 = vmatpush1.xpose.msra.mxu0 %v1478
    %1482 = vmatprep.subr.mxu0 0.0
    %1483 = vmatpush1.xpose.msra.mxu0 0.0
    %1484 = vmatprep.subr.mxu0 0.0
    %1485 = vmatpush1.xpose.msra.mxu0 0.0
    %1486 = vmatprep.subr.mxu0 0.0
    %1487 = vmatpush1.xpose.msra.mxu0 0.0
    %1488 = vmatprep.subr.mxu0 0.0
    %1489 = vmatpush1.xpose.msra.mxu0 0.0
    %1490 = vmatprep.subr.mxu0 0.0
    %1491 = vmatpush1.xpose.msra.mxu0 0.0
    %1492 = vmatprep.subr.mxu0 0.0
    %1493 = vmatpush1.xpose.msra.mxu0 0.0
    %1494 = vmatprep.subr.mxu0 0.0
    %1495 = vmatpush1.xpose.msra.mxu0 0.0
    %1496 = vmatprep.subr.mxu0 0.0
    %1497 = vmatpush1.xpose.msra.mxu0 0.0
    %1498 = vmatprep.subr.mxu0 0.0
    %1499 = vmatpush1.xpose.msra.mxu0 0.0
    %1500 = vmatprep.subr.mxu0 0.0
    %1501 = vmatpush1.xpose.msra.mxu0 0.0
    %1502 = vmatprep.subr.mxu0 0.0
    %1503 = vmatpush1.xpose.msra.mxu0 0.0
    %1504 = vmatprep.subr.mxu0 0.0
    %1505 = vmatpush1.xpose.msra.mxu0 0.0
    %1506 = vmatprep.subr.mxu0 0.0
    %1507 = vmatpush1.xpose.msra.mxu0 0.0
    %1508 = vmatprep.subr.mxu0 0.0
    %1509 = vmatpush1.xpose.msra.mxu0 0.0
    %1510 = vmatprep.subr.mxu0 0.0
    %1511 = vmatpush1.xpose.msra.mxu0 0.0
    %1512 = vmatprep.subr.mxu0 0.0
    %1513 = vmatpush1.xpose.msra.mxu0 0.0
    %1514 = vmatprep.subr.mxu0 0.0
    %1515 = vmatpush1.xpose.msra.mxu0 0.0
    %1516 = vmatprep.subr.mxu0 0.0
    %1517 = vmatpush1.xpose.msra.mxu0 0.0
    %1518 = vmatprep.subr.mxu0 0.0
    %1519 = vmatpush1.xpose.msra.mxu0 0.0
    %1520 = vmatprep.subr.mxu0 0.0
    %1521 = vmatpush1.xpose.msra.mxu0 0.0
    %1522 = vmatprep.subr.mxu0 0.0
    %1523 = vmatpush1.xpose.msra.mxu0 0.0
    %1524 = vmatprep.subr.mxu0 0.0
    %1525 = vmatpush1.xpose.msra.mxu0 0.0
    %1526 = vmatprep.subr.mxu0 0.0
    %1527 = vmatpush1.xpose.msra.mxu0 0.0
    %1528 = vmatprep.subr.mxu0 0.0
    %1529 = vmatpush1.xpose.msra.mxu0 0.0
    %1530 = vmatprep.subr.mxu0 0.0
    %1531 = vmatpush1.xpose.msra.mxu0 0.0
    %1532 = vmatprep.subr.mxu0 0.0
    %1533 = vmatpush1.xpose.msra.mxu0 0.0
    %1534 = vmatprep.subr.mxu0 0.0
    %1535 = vmatpush1.xpose.msra.mxu0 0.0
    %1536 = vmatprep.subr.mxu0 0.0
    %1537 = vmatpush1.xpose.msra.mxu0 0.0
    %1538 = vmatprep.subr.mxu0 0.0
    %1539 = vmatpush1.xpose.msra.mxu0 0.0
    %1540 = vmatprep.subr.mxu0 0.0
    %1541 = vmatpush1.xpose.msra.mxu0 0.0
    %1542 = vmatprep.subr.mxu0 0.0
    %1543 = vmatpush1.xpose.msra.mxu0 0.0
    %1544 = vmatprep.mubr.f32.mxu0 0.0
    %1545 = vmatmul.mubr.f32.gmra.mrb[0].mxu0 %v1476
    %v1546 = vpop.f32.mrb[0].mxu0
    %v1547 = vadd.f32 0.0, %v1546
    %v1548 = vpop.f32.mrb[0].mxu0
    %1549 = vdwg.mxu0
    %v1550 = vmul.f32 %v1547, 0.35355338
    %v1551 = vadd.f32 %v1550, %v1269
    %v1552 = vsel %vm201, %v1551, -inf
    %1553 = vmax.xlane.f32.xlu0 %v1552
    %v1554 = vpop.xlane.xlu0 %1553
    %v1555 = vsub.f32 %v1551, %v1554
    %v1556 = vmul.f32 %v1555, 1.442695
    %v1557 = vpow.pop %v1556
    %v1558 = vsel %vm201, %v1557, 0.0
    %1559 = vadd.xlane.f32.xlu0 %v1558
    %v1560 = vpop.xlane.xlu0 %1559
    %v1561 = vrcp.pop %v1560
    %v1562 = vmul.f32 %v1557, %v1561
    %v1563 = vpack.c.bf16 %v1562, %v1562
    %v1565 = vsel %vm201, %v1563, 0
    %1567 = vmatprep.subr.bf16.mxu0 0
    %1568 = vmatpush1.bf16.msra.mxu0 %v1291
    %1569 = vmatprep.subr.bf16.mxu0 0
    %1570 = vmatpush1.bf16.msra.mxu0 0
    %1571 = vmatprep.subr.bf16.mxu0 0
    %1572 = vmatpush1.bf16.msra.mxu0 0
    %1573 = vmatprep.subr.bf16.mxu0 0
    %1574 = vmatpush1.bf16.msra.mxu0 0
    %1575 = vmatprep.subr.bf16.mxu0 0
    %1576 = vmatpush1.bf16.msra.mxu0 0
    %1577 = vmatprep.subr.bf16.mxu0 0
    %1578 = vmatpush1.bf16.msra.mxu0 0
    %1579 = vmatprep.subr.bf16.mxu0 0
    %1580 = vmatpush1.bf16.msra.mxu0 0
    %1581 = vmatprep.subr.bf16.mxu0 0
    %1582 = vmatpush1.bf16.msra.mxu0 0
    %1583 = vmatprep.subr.bf16.mxu0 0
    %1584 = vmatpush1.bf16.msra.mxu0 0
    %1585 = vmatprep.subr.bf16.mxu0 0
    %1586 = vmatpush1.bf16.msra.mxu0 0
    %1587 = vmatprep.subr.bf16.mxu0 0
    %1588 = vmatpush1.bf16.msra.mxu0 0
    %1589 = vmatprep.subr.bf16.mxu0 0
    %1590 = vmatpush1.bf16.msra.mxu0 0
    %1591 = vmatprep.subr.bf16.mxu0 0
    %1592 = vmatpush1.bf16.msra.mxu0 0
    %1593 = vmatprep.subr.bf16.mxu0 0
    %1594 = vmatpush1.bf16.msra.mxu0 0
    %1595 = vmatprep.subr.bf16.mxu0 0
    %1596 = vmatpush1.bf16.msra.mxu0 0
    %1597 = vmatprep.subr.bf16.mxu0 0
    %1598 = vmatpush1.bf16.msra.mxu0 0
    %1599 = vmatprep.mubr.bf16.mxu0 0
    %1600 = vmatmul.mubr.bf16.gmra.mrb[0].mxu0 %v1565
    %v1601 = vpop.f32.mrb[0].mxu0
    %v1602 = vadd.f32 0.0, %v1601
    %v1603 = vpop.f32.mrb[0].mxu0
    %v1604 = vpop.f32.mrb[0].mxu0
    %v1605 = vpop.f32.mrb[0].mxu0
    %1606 = vdwg.mxu0
    %v1607 = vmul.f32 %v1602, %v541
    %v1608 = vadd.f32 %v1471, %v1607
    %1609 = vrot.lane.b32.xlu0 %v630, 104
    %v1610 = vpop.permute.xlu0 %1609
    %1611 = vrot.lane.b32.xlu0 %v630, 72
    %v1612 = vpop.permute.xlu0 %1611
    %v1613 = vsel %vm201, %v1610, 0
    %v1615 = vsel %vm201, %v1612, 0
    %1617 = vmatprep.subr.mxu0 0.0
    %1618 = vmatpush1.xpose.msra.mxu0 %v1615
    %1619 = vmatprep.subr.mxu0 0.0
    %1620 = vmatpush1.xpose.msra.mxu0 0.0
    %1621 = vmatprep.subr.mxu0 0.0
    %1622 = vmatpush1.xpose.msra.mxu0 0.0
    %1623 = vmatprep.subr.mxu0 0.0
    %1624 = vmatpush1.xpose.msra.mxu0 0.0
    %1625 = vmatprep.subr.mxu0 0.0
    %1626 = vmatpush1.xpose.msra.mxu0 0.0
    %1627 = vmatprep.subr.mxu0 0.0
    %1628 = vmatpush1.xpose.msra.mxu0 0.0
    %1629 = vmatprep.subr.mxu0 0.0
    %1630 = vmatpush1.xpose.msra.mxu0 0.0
    %1631 = vmatprep.subr.mxu0 0.0
    %1632 = vmatpush1.xpose.msra.mxu0 0.0
    %1633 = vmatprep.subr.mxu0 0.0
    %1634 = vmatpush1.xpose.msra.mxu0 0.0
    %1635 = vmatprep.subr.mxu0 0.0
    %1636 = vmatpush1.xpose.msra.mxu0 0.0
    %1637 = vmatprep.subr.mxu0 0.0
    %1638 = vmatpush1.xpose.msra.mxu0 0.0
    %1639 = vmatprep.subr.mxu0 0.0
    %1640 = vmatpush1.xpose.msra.mxu0 0.0
    %1641 = vmatprep.subr.mxu0 0.0
    %1642 = vmatpush1.xpose.msra.mxu0 0.0
    %1643 = vmatprep.subr.mxu0 0.0
    %1644 = vmatpush1.xpose.msra.mxu0 0.0
    %1645 = vmatprep.subr.mxu0 0.0
    %1646 = vmatpush1.xpose.msra.mxu0 0.0
    %1647 = vmatprep.subr.mxu0 0.0
    %1648 = vmatpush1.xpose.msra.mxu0 0.0
    %1649 = vmatprep.subr.mxu0 0.0
    %1650 = vmatpush1.xpose.msra.mxu0 0.0
    %1651 = vmatprep.subr.mxu0 0.0
    %1652 = vmatpush1.xpose.msra.mxu0 0.0
    %1653 = vmatprep.subr.mxu0 0.0
    %1654 = vmatpush1.xpose.msra.mxu0 0.0
    %1655 = vmatprep.subr.mxu0 0.0
    %1656 = vmatpush1.xpose.msra.mxu0 0.0
    %1657 = vmatprep.subr.mxu0 0.0
    %1658 = vmatpush1.xpose.msra.mxu0 0.0
    %1659 = vmatprep.subr.mxu0 0.0
    %1660 = vmatpush1.xpose.msra.mxu0 0.0
    %1661 = vmatprep.subr.mxu0 0.0
    %1662 = vmatpush1.xpose.msra.mxu0 0.0
    %1663 = vmatprep.subr.mxu0 0.0
    %1664 = vmatpush1.xpose.msra.mxu0 0.0
    %1665 = vmatprep.subr.mxu0 0.0
    %1666 = vmatpush1.xpose.msra.mxu0 0.0
    %1667 = vmatprep.subr.mxu0 0.0
    %1668 = vmatpush1.xpose.msra.mxu0 0.0
    %1669 = vmatprep.subr.mxu0 0.0
    %1670 = vmatpush1.xpose.msra.mxu0 0.0
    %1671 = vmatprep.subr.mxu0 0.0
    %1672 = vmatpush1.xpose.msra.mxu0 0.0
    %1673 = vmatprep.subr.mxu0 0.0
    %1674 = vmatpush1.xpose.msra.mxu0 0.0
    %1675 = vmatprep.subr.mxu0 0.0
    %1676 = vmatpush1.xpose.msra.mxu0 0.0
    %1677 = vmatprep.subr.mxu0 0.0
    %1678 = vmatpush1.xpose.msra.mxu0 0.0
    %1679 = vmatprep.subr.mxu0 0.0
    %1680 = vmatpush1.xpose.msra.mxu0 0.0
    %1681 = vmatprep.mubr.f32.mxu0 0.0
    %1682 = vmatmul.mubr.f32.gmra.mrb[0].mxu0 %v1613
    %v1683 = vpop.f32.mrb[0].mxu0
    %v1684 = vadd.f32 0.0, %v1683
    %v1685 = vpop.f32.mrb[0].mxu0
    %1686 = vdwg.mxu0
    %v1687 = vmul.f32 %v1684, 0.35355338
    %v1688 = vadd.f32 %v1687, %v1269
    %v1689 = vsel %vm201, %v1688, -inf
    %1690 = vmax.xlane.f32.xlu0 %v1689
    %v1691 = vpop.xlane.xlu0 %1690
    %v1692 = vsub.f32 %v1688, %v1691
    %v1693 = vmul.f32 %v1692, 1.442695
    %v1694 = vpow.pop %v1693
    %v1695 = vsel %vm201, %v1694, 0.0
    %1696 = vadd.xlane.f32.xlu0 %v1695
    %v1697 = vpop.xlane.xlu0 %1696
    %v1698 = vrcp.pop %v1697
    %v1699 = vmul.f32 %v1694, %v1698
    %v1700 = vpack.c.bf16 %v1699, %v1699
    %v1702 = vsel %vm201, %v1700, 0
    %1704 = vmatprep.subr.bf16.mxu0 0
    %1705 = vmatpush1.bf16.msra.mxu0 %v1291
    %1706 = vmatprep.subr.bf16.mxu0 0
    %1707 = vmatpush1.bf16.msra.mxu0 0
    %1708 = vmatprep.subr.bf16.mxu0 0
    %1709 = vmatpush1.bf16.msra.mxu0 0
    %1710 = vmatprep.subr.bf16.mxu0 0
    %1711 = vmatpush1.bf16.msra.mxu0 0
    %1712 = vmatprep.subr.bf16.mxu0 0
    %1713 = vmatpush1.bf16.msra.mxu0 0
    %1714 = vmatprep.subr.bf16.mxu0 0
    %1715 = vmatpush1.bf16.msra.mxu0 0
    %1716 = vmatprep.subr.bf16.mxu0 0
    %1717 = vmatpush1.bf16.msra.mxu0 0
    %1718 = vmatprep.subr.bf16.mxu0 0
    %1719 = vmatpush1.bf16.msra.mxu0 0
    %1720 = vmatprep.subr.bf16.mxu0 0
    %1721 = vmatpush1.bf16.msra.mxu0 0
    %1722 = vmatprep.subr.bf16.mxu0 0
    %1723 = vmatpush1.bf16.msra.mxu0 0
    %1724 = vmatprep.subr.bf16.mxu0 0
    %1725 = vmatpush1.bf16.msra.mxu0 0
    %1726 = vmatprep.subr.bf16.mxu0 0
    %1727 = vmatpush1.bf16.msra.mxu0 0
    %1728 = vmatprep.subr.bf16.mxu0 0
    %1729 = vmatpush1.bf16.msra.mxu0 0
    %1730 = vmatprep.subr.bf16.mxu0 0
    %1731 = vmatpush1.bf16.msra.mxu0 0
    %1732 = vmatprep.subr.bf16.mxu0 0
    %1733 = vmatpush1.bf16.msra.mxu0 0
    %1734 = vmatprep.subr.bf16.mxu0 0
    %1735 = vmatpush1.bf16.msra.mxu0 0
    %1736 = vmatprep.mubr.bf16.mxu0 0
    %1737 = vmatmul.mubr.bf16.gmra.mrb[0].mxu0 %v1702
    %v1738 = vpop.f32.mrb[0].mxu0
    %v1739 = vadd.f32 0.0, %v1738
    %v1740 = vpop.f32.mrb[0].mxu0
    %v1741 = vpop.f32.mrb[0].mxu0
    %v1742 = vpop.f32.mrb[0].mxu0
    %1743 = vdwg.mxu0
    %v1744 = vmul.f32 %v1739, %v546
    %v1745 = vadd.f32 %v1608, %v1744
    %v1746 = vpack.c.bf16 %v1745, %v1187
    %v1747 = vlaneseq
    %v1748 = vshrl.u32 %v1747, 7
    %v1749 = vsub.s32 0, %v1748
    %v1750 = vrot.slane %v556, %v1749
    %v1755 = vunpack.c.l.b16 %v552
    %v1756 = vunpack.c.l.b16 %v553
    %v1757 = vunpack.c.l.b16 %v554
    %v1758 = vunpack.c.l.b16 %v555
    %v1759 = vpack.c.b16 %v1756, %v1755
    %v1760 = vpack.c.b16 %v1758, %v1757
    %v1764 = vsel %vm125, %v1746, 0
    %1766 = vmatprep.subr.bf16.mxu0 0
    %1767 = vmatpush1.bf16.msra.mxu0 %v1759
    %1768 = vmatprep.subr.bf16.mxu0 0
    %1769 = vmatpush1.bf16.msra.mxu0 %v1760
    %1770 = vmatprep.subr.bf16.mxu0 0
    %1771 = vmatpush1.bf16.msra.mxu0 0
    %1772 = vmatprep.subr.bf16.mxu0 0
    %1773 = vmatpush1.bf16.msra.mxu0 0
    %1774 = vmatprep.subr.bf16.mxu0 0
    %1775 = vmatpush1.bf16.msra.mxu0 0
    %1776 = vmatprep.subr.bf16.mxu0 0
    %1777 = vmatpush1.bf16.msra.mxu0 0
    %1778 = vmatprep.subr.bf16.mxu0 0
    %1779 = vmatpush1.bf16.msra.mxu0 0
    %1780 = vmatprep.subr.bf16.mxu0 0
    %1781 = vmatpush1.bf16.msra.mxu0 0
    %1782 = vmatprep.subr.bf16.mxu0 0
    %1783 = vmatpush1.bf16.msra.mxu0 0
    %1784 = vmatprep.subr.bf16.mxu0 0
    %1785 = vmatpush1.bf16.msra.mxu0 0
    %1786 = vmatprep.subr.bf16.mxu0 0
    %1787 = vmatpush1.bf16.msra.mxu0 0
    %1788 = vmatprep.subr.bf16.mxu0 0
    %1789 = vmatpush1.bf16.msra.mxu0 0
    %1790 = vmatprep.subr.bf16.mxu0 0
    %1791 = vmatpush1.bf16.msra.mxu0 0
    %1792 = vmatprep.subr.bf16.mxu0 0
    %1793 = vmatpush1.bf16.msra.mxu0 0
    %1794 = vmatprep.subr.bf16.mxu0 0
    %1795 = vmatpush1.bf16.msra.mxu0 0
    %1796 = vmatprep.subr.bf16.mxu0 0
    %1797 = vmatpush1.bf16.msra.mxu0 0
    %1798 = vmatprep.mubr.bf16.mxu0 0
    %1799 = vmatmul.mubr.bf16.gmra.mrb[0].mxu0 %v1764
    %v1800 = vpop.f32.mrb[0].mxu0
    %v1801 = vadd.f32 %v1750, %v1800
    %v1802 = vpop.f32.mrb[0].mxu0
    %v1803 = vpop.f32.mrb[0].mxu0
    %v1804 = vadd.f32 %v1750, %v1803
    %v1805 = vpop.f32.mrb[0].mxu0
    %1806 = vdwg.mxu0
    %v1807 = vadd.f32 %v163, %v1801
    %v1808 = vadd.f32 %v164, %v1804
    %v1809 = vsel %vm125, %v1807, 0.0
    %1810 = vadd.xlane.f32.xlu0 %v1809
    %v1811 = vpop.xlane.xlu0 %1810
    %v1812 = vsel %vm125, %v1808, 0.0
    %1813 = vadd.xlane.f32.xlu0 %v1812
    %v1814 = vpop.xlane.xlu0 %1813
    %v1815 = vmul.f32 %v1811, %v132
    %v1816 = vmul.f32 %v1814, %v132
    %v1817 = vsub.f32 %v1807, %v1815
    %v1818 = vsub.f32 %v1808, %v1816
    %v1819 = vmul.f32 %v1817, %v1817
    %v1820 = vmul.f32 %v1818, %v1818
    %v1821 = vsel %vm125, %v1819, 0.0
    %1822 = vadd.xlane.f32.xlu0 %v1821
    %v1823 = vpop.xlane.xlu0 %1822
    %v1824 = vsel %vm125, %v1820, 0.0
    %1825 = vadd.xlane.f32.xlu0 %v1824
    %v1826 = vpop.xlane.xlu0 %1825
    %v1827 = vmul.f32 %v1823, %v132
    %v1828 = vmul.f32 %v1826, %v132
    %v1829 = vadd.f32 %v1827, 1e-06
    %v1830 = vadd.f32 %v1828, 1e-06
    %v1831 = vrsqrt.pop %v1829
    %v1832 = vrsqrt.pop %v1830
    %v1833 = vmul.f32 %v1817, %v1831
    %v1834 = vmul.f32 %v1818, %v1832
    %v1835 = vlaneseq
    %v1836 = vshrl.u32 %v1835, 7
    %v1837 = vsub.s32 1, %v1836
    %v1838 = vrot.slane %v556, %v1837
    %v1839 = vmul.f32 %v1833, %v1838
    %v1840 = vmul.f32 %v1834, %v1838
    %v1841 = vlaneseq
    %v1842 = vshrl.u32 %v1841, 7
    %v1843 = vsub.s32 2, %v1842
    %v1844 = vrot.slane %v556, %v1843
    %v1845 = vadd.f32 %v1839, %v1844
    %v1846 = vadd.f32 %v1840, %v1844
    %v1847 = vpack.c.bf16 %v1846, %v1845
    %v1849 = vlaneseq
    %v1850 = vshrl.u32 %v1849, 7
    %v1851 = vsub.s32 0, %v1850
    %v1852 = vrot.slane %v561, %v1851
    %v1858 = vunpack.c.l.b16 %v557
    %v1859 = vunpack.c.l.b16 %v558
    %v1860 = vunpack.c.l.b16 %v559
    %v1861 = vunpack.c.l.b16 %v560
    %v1862 = vpack.c.b16 %v1859, %v1858
    %v1863 = vpack.c.b16 %v1861, %v1860
    %v1867 = vsel %vm125, %v1847, 0
    %1869 = vmatprep.subr.bf16.mxu0 0
    %1870 = vmatpush1.bf16.msra.mxu0 %v1862
    %1871 = vmatprep.subr.bf16.mxu0 0
    %1872 = vmatpush1.bf16.msra.mxu0 %v1863
    %1873 = vmatprep.subr.bf16.mxu0 0
    %1874 = vmatpush1.bf16.msra.mxu0 0
    %1875 = vmatprep.subr.bf16.mxu0 0
    %1876 = vmatpush1.bf16.msra.mxu0 0
    %1877 = vmatprep.subr.bf16.mxu0 0
    %1878 = vmatpush1.bf16.msra.mxu0 0
    %1879 = vmatprep.subr.bf16.mxu0 0
    %1880 = vmatpush1.bf16.msra.mxu0 0
    %1881 = vmatprep.subr.bf16.mxu0 0
    %1882 = vmatpush1.bf16.msra.mxu0 0
    %1883 = vmatprep.subr.bf16.mxu0 0
    %1884 = vmatpush1.bf16.msra.mxu0 0
    %1885 = vmatprep.subr.bf16.mxu0 0
    %1886 = vmatpush1.bf16.msra.mxu0 0
    %1887 = vmatprep.subr.bf16.mxu0 0
    %1888 = vmatpush1.bf16.msra.mxu0 0
    %1889 = vmatprep.subr.bf16.mxu0 0
    %1890 = vmatpush1.bf16.msra.mxu0 0
    %1891 = vmatprep.subr.bf16.mxu0 0
    %1892 = vmatpush1.bf16.msra.mxu0 0
    %1893 = vmatprep.subr.bf16.mxu0 0
    %1894 = vmatpush1.bf16.msra.mxu0 0
    %1895 = vmatprep.subr.bf16.mxu0 0
    %1896 = vmatpush1.bf16.msra.mxu0 0
    %1897 = vmatprep.subr.bf16.mxu0 0
    %1898 = vmatpush1.bf16.msra.mxu0 0
    %1899 = vmatprep.subr.bf16.mxu0 0
    %1900 = vmatpush1.bf16.msra.mxu0 0
    %1901 = vmatprep.mubr.bf16.mxu0 0
    %1902 = vmatmul.mubr.bf16.gmra.mrb[0].mxu0 %v1867
    %v1903 = vpop.f32.mrb[0].mxu0
    %v1904 = vadd.f32 %v1852, %v1903
    %v1905 = vpop.f32.mrb[0].mxu0
    %v1906 = vpop.f32.mrb[0].mxu0
    %v1907 = vadd.f32 %v1852, %v1906
    %v1908 = vpop.f32.mrb[0].mxu0
    %1909 = vdwg.mxu0
    %v1910 = vmul.f32 %v1904, %v1904
    %v1911 = vmul.f32 %v1907, %v1907
    %v1912 = vmul.f32 %v1904, %v1910
    %v1913 = vmul.f32 %v1907, %v1911
    %v1914 = vmul.f32 %v1912, 0.044715
    %v1915 = vmul.f32 %v1913, 0.044715
    %v1916 = vadd.f32 %v1904, %v1914
    %v1917 = vadd.f32 %v1907, %v1915
    %v1918 = vmul.f32 %v1916, 0.7978846
    %v1919 = vmul.f32 %v1917, 0.7978846
    %v1920 = vtanh.pop %v1918
    %v1921 = vtanh.pop %v1919
    %v1922 = vadd.f32 %v1920, 1.0
    %v1923 = vadd.f32 %v1921, 1.0
    %v1924 = vmul.f32 %v1922, 0.5
    %v1925 = vmul.f32 %v1923, 0.5
    %v1926 = vmul.f32 %v1904, %v1924
    %v1927 = vmul.f32 %v1907, %v1925
    %v1928 = vpack.c.bf16 %v1927, %v1926
    %v1929 = vlaneseq
    %v1930 = vshrl.u32 %v1929, 7
    %v1931 = vsub.s32 3, %v1930
    %v1932 = vrot.slane %v556, %v1931
    %v1941 = vunpack.c.l.b16 %v562
    %v1942 = vunpack.c.l.b16 %v563
    %v1943 = vunpack.c.l.b16 %v564
    %v1944 = vunpack.c.l.b16 %v565
    %v1945 = vunpack.c.l.b16 %v566
    %v1946 = vunpack.c.l.b16 %v567
    %v1947 = vunpack.c.l.b16 %v568
    %v1948 = vunpack.c.l.b16 %v569
    %v1949 = vpack.c.b16 %v1942, %v1941
    %v1950 = vpack.c.b16 %v1944, %v1943
    %v1951 = vpack.c.b16 %v1946, %v1945
    %v1952 = vpack.c.b16 %v1948, %v1947
    %vm1957 = vcmask 523264
    %v1959 = vsel %vm1957, %v1928, 0
    %1961 = vmatprep.subr.bf16.mxu0 0
    %1962 = vmatpush1.bf16.msra.mxu0 %v1949
    %1963 = vmatprep.subr.bf16.mxu0 0
    %1964 = vmatpush1.bf16.msra.mxu0 %v1950
    %1965 = vmatprep.subr.bf16.mxu0 0
    %1966 = vmatpush1.bf16.msra.mxu0 %v1951
    %1967 = vmatprep.subr.bf16.mxu0 0
    %1968 = vmatpush1.bf16.msra.mxu0 %v1952
    %1969 = vmatprep.subr.bf16.mxu0 0
    %1970 = vmatpush1.bf16.msra.mxu0 0
    %1971 = vmatprep.subr.bf16.mxu0 0
    %1972 = vmatpush1.bf16.msra.mxu0 0
    %1973 = vmatprep.subr.bf16.mxu0 0
    %1974 = vmatpush1.bf16.msra.mxu0 0
    %1975 = vmatprep.subr.bf16.mxu0 0
    %1976 = vmatpush1.bf16.msra.mxu0 0
    %1977 = vmatprep.subr.bf16.mxu0 0
    %1978 = vmatpush1.bf16.msra.mxu0 0
    %1979 = vmatprep.subr.bf16.mxu0 0
    %1980 = vmatpush1.bf16.msra.mxu0 0
    %1981 = vmatprep.subr.bf16.mxu0 0
    %1982 = vmatpush1.bf16.msra.mxu0 0
    %1983 = vmatprep.subr.bf16.mxu0 0
    %1984 = vmatpush1.bf16.msra.mxu0 0
    %1985 = vmatprep.subr.bf16.mxu0 0
    %1986 = vmatpush1.bf16.msra.mxu0 0
    %1987 = vmatprep.subr.bf16.mxu0 0
    %1988 = vmatpush1.bf16.msra.mxu0 0
    %1989 = vmatprep.subr.bf16.mxu0 0
    %1990 = vmatpush1.bf16.msra.mxu0 0
    %1991 = vmatprep.subr.bf16.mxu0 0
    %1992 = vmatpush1.bf16.msra.mxu0 0
    %1993 = vmatprep.mubr.bf16.mxu0 0
    %1994 = vmatmul.mubr.bf16.gmra.mrb[0].mxu0 %v1959
    %v1995 = vpop.f32.mrb[0].mxu0
    %v1996 = vadd.f32 %v1932, %v1995
    %v1997 = vpop.f32.mrb[0].mxu0
    %v1998 = vpop.f32.mrb[0].mxu0
    %v1999 = vadd.f32 %v1932, %v1998
    %v2000 = vpop.f32.mrb[0].mxu0
    %2001 = vdwg.mxu0
    %v2002 = vadd.f32 %v1845, %v1996
    %v2003 = vadd.f32 %v1846, %v1999
    %v2004 = vsel %vm125, %v2002, 0.0
    %2005 = vadd.xlane.f32.xlu0 %v2004
    %v2006 = vpop.xlane.xlu0 %2005
    %v2007 = vsel %vm125, %v2003, 0.0
    %2008 = vadd.xlane.f32.xlu0 %v2007
    %v2009 = vpop.xlane.xlu0 %2008
    %v2010 = vmul.f32 %v2006, %v132
    %v2011 = vmul.f32 %v2009, %v132
    %v2012 = vsub.f32 %v2002, %v2010
    %v2013 = vsub.f32 %v2003, %v2011
    %v2014 = vmul.f32 %v2012, %v2012
    %v2015 = vmul.f32 %v2013, %v2013
    %v2016 = vsel %vm125, %v2014, 0.0
    %2017 = vadd.xlane.f32.xlu0 %v2016
    %v2018 = vpop.xlane.xlu0 %2017
    %v2019 = vsel %vm125, %v2015, 0.0
    %2020 = vadd.xlane.f32.xlu0 %v2019
    %v2021 = vpop.xlane.xlu0 %2020
    %v2022 = vmul.f32 %v2018, %v132
    %v2023 = vmul.f32 %v2021, %v132
    %v2024 = vadd.f32 %v2022, 1e-06
    %v2025 = vadd.f32 %v2023, 1e-06
    %v2026 = vrsqrt.pop %v2024
    %v2027 = vrsqrt.pop %v2025
    %v2028 = vmul.f32 %v2012, %v2026
    %v2029 = vmul.f32 %v2013, %v2027
    %v2030 = vlaneseq
    %v2031 = vshrl.u32 %v2030, 7
    %v2032 = vsub.s32 4, %v2031
    %v2033 = vrot.slane %v556, %v2032
    %v2034 = vmul.f32 %v2028, %v2033
    %v2035 = vmul.f32 %v2029, %v2033
    %v2036 = vlaneseq
    %v2037 = vshrl.u32 %v2036, 7
    %v2038 = vsub.s32 5, %v2037
    %v2039 = vrot.slane %v556, %v2038
    %v2040 = vadd.f32 %v2034, %v2039
    %v2041 = vadd.f32 %v2035, %v2039
    %s2042 = scalar_lea.vmem %s8, 16
    %v2043 = vld [vmem:[%s2042] sm:$0xf]
    %v2044 = vld [vmem:[%s2042 + $0x4] sm:$0xf]
    %v2045 = vld [vmem:[%s2042 + $0x8] sm:$0xf]
    %v2046 = vld [vmem:[%s2042 + $0xc] sm:$0xf]
    %s2047 = scalar_lea.vmem %s9, 1
    %v2048 = vld [vmem:[%s2047] sm:$0x1]
    %s2049 = scalar_lea.vmem %s10, 16
    %v2050 = vld [vmem:[%s2049] sm:$0xf]
    %v2051 = vld [vmem:[%s2049 + $0x4] sm:$0xf]
    %v2052 = vld [vmem:[%s2049 + $0x8] sm:$0xf]
    %v2053 = vld [vmem:[%s2049 + $0xc] sm:$0xf]
    %s2054 = scalar_lea.vmem %s11, 8
    %v2055 = vld [vmem:[%s2054] sm:$0x3f]
    %s2056 = scalar_lea.vmem %s12, 16
    %v2057 = vld [vmem:[%s2056] sm:$0xf]
    %v2058 = vld [vmem:[%s2056 + $0x4] sm:$0xf]
    %v2059 = vld [vmem:[%s2056 + $0x8] sm:$0xf]
    %v2060 = vld [vmem:[%s2056 + $0xc] sm:$0xf]
    %s2061 = scalar_lea.vmem %s13, 1
    %v2062 = vld [vmem:[%s2061] sm:$0x1]
    %s2063 = scalar_lea.vmem %s14, 32
    %v2064 = vld [vmem:[%s2063] sm:$0xf]
    %v2065 = vld [vmem:[%s2063 + $0x4] sm:$0xf]
    %v2066 = vld [vmem:[%s2063 + $0x8] sm:$0xf]
    %v2067 = vld [vmem:[%s2063 + $0xc] sm:$0xf]
    %v2068 = vld [vmem:[%s2063 + $0x10] sm:$0xf]
    %v2069 = vld [vmem:[%s2063 + $0x14] sm:$0xf]
    %v2070 = vld [vmem:[%s2063 + $0x18] sm:$0xf]
    %v2071 = vld [vmem:[%s2063 + $0x1c] sm:$0xf]
    %v2072 = vpack.c.bf16 %v2041, %v2040
    %v2074 = vlaneseq
    %v2075 = vshrl.u32 %v2074, 7
    %v2076 = vsub.s32 0, %v2075
    %v2077 = vrot.slane %v2048, %v2076
    %v2083 = vunpack.c.l.b16 %v2043
    %v2084 = vunpack.c.l.b16 %v2044
    %v2085 = vunpack.c.l.b16 %v2045
    %v2086 = vunpack.c.l.b16 %v2046
    %v2087 = vpack.c.b16 %v2084, %v2083
    %v2088 = vpack.c.b16 %v2086, %v2085
    %v2092 = vsel %vm125, %v2072, 0
    %2094 = vmatprep.subr.bf16.mxu0 0
    %2095 = vmatpush1.bf16.msra.mxu0 %v2087
    %2096 = vmatprep.subr.bf16.mxu0 0
    %2097 = vmatpush1.bf16.msra.mxu0 %v2088
    %2098 = vmatprep.subr.bf16.mxu0 0
    %2099 = vmatpush1.bf16.msra.mxu0 0
    %2100 = vmatprep.subr.bf16.mxu0 0
    %2101 = vmatpush1.bf16.msra.mxu0 0
    %2102 = vmatprep.subr.bf16.mxu0 0
    %2103 = vmatpush1.bf16.msra.mxu0 0
    %2104 = vmatprep.subr.bf16.mxu0 0
    %2105 = vmatpush1.bf16.msra.mxu0 0
    %2106 = vmatprep.subr.bf16.mxu0 0
    %2107 = vmatpush1.bf16.msra.mxu0 0
    %2108 = vmatprep.subr.bf16.mxu0 0
    %2109 = vmatpush1.bf16.msra.mxu0 0
    %2110 = vmatprep.subr.bf16.mxu0 0
    %2111 = vmatpush1.bf16.msra.mxu0 0
    %2112 = vmatprep.subr.bf16.mxu0 0
    %2113 = vmatpush1.bf16.msra.mxu0 0
    %2114 = vmatprep.subr.bf16.mxu0 0
    %2115 = vmatpush1.bf16.msra.mxu0 0
    %2116 = vmatprep.subr.bf16.mxu0 0
    %2117 = vmatpush1.bf16.msra.mxu0 0
    %2118 = vmatprep.subr.bf16.mxu0 0
    %2119 = vmatpush1.bf16.msra.mxu0 0
    %2120 = vmatprep.subr.bf16.mxu0 0
    %2121 = vmatpush1.bf16.msra.mxu0 0
    %2122 = vmatprep.subr.bf16.mxu0 0
    %2123 = vmatpush1.bf16.msra.mxu0 0
    %2124 = vmatprep.subr.bf16.mxu0 0
    %2125 = vmatpush1.bf16.msra.mxu0 0
    %2126 = vmatprep.mubr.bf16.mxu0 0
    %2127 = vmatmul.mubr.bf16.gmra.mrb[0].mxu0 %v2092
    %v2128 = vpop.f32.mrb[0].mxu0
    %v2129 = vadd.f32 %v2077, %v2128
    %v2130 = vpop.f32.mrb[0].mxu0
    %v2131 = vpop.f32.mrb[0].mxu0
    %v2132 = vadd.f32 %v2077, %v2131
    %v2133 = vpop.f32.mrb[0].mxu0
    %2134 = vdwg.mxu0
    %v2135 = vpack.c.bf16 %v2129, %v2129
    %2137 = vrot.lane.b32.xlu0 %v2129, 96
    %v2138 = vpop.permute.xlu0 %2137
    %v2139 = vsel %vm201, %v2129, 0
    %v2141 = vsel %vm201, %v2138, 0
    %2143 = vmatprep.subr.mxu0 0.0
    %2144 = vmatpush1.xpose.msra.mxu0 %v2141
    %2145 = vmatprep.subr.mxu0 0.0
    %2146 = vmatpush1.xpose.msra.mxu0 0.0
    %2147 = vmatprep.subr.mxu0 0.0
    %2148 = vmatpush1.xpose.msra.mxu0 0.0
    %2149 = vmatprep.subr.mxu0 0.0
    %2150 = vmatpush1.xpose.msra.mxu0 0.0
    %2151 = vmatprep.subr.mxu0 0.0
    %2152 = vmatpush1.xpose.msra.mxu0 0.0
    %2153 = vmatprep.subr.mxu0 0.0
    %2154 = vmatpush1.xpose.msra.mxu0 0.0
    %2155 = vmatprep.subr.mxu0 0.0
    %2156 = vmatpush1.xpose.msra.mxu0 0.0
    %2157 = vmatprep.subr.mxu0 0.0
    %2158 = vmatpush1.xpose.msra.mxu0 0.0
    %2159 = vmatprep.subr.mxu0 0.0
    %2160 = vmatpush1.xpose.msra.mxu0 0.0
    %2161 = vmatprep.subr.mxu0 0.0
    %2162 = vmatpush1.xpose.msra.mxu0 0.0
    %2163 = vmatprep.subr.mxu0 0.0
    %2164 = vmatpush1.xpose.msra.mxu0 0.0
    %2165 = vmatprep.subr.mxu0 0.0
    %2166 = vmatpush1.xpose.msra.mxu0 0.0
    %2167 = vmatprep.subr.mxu0 0.0
    %2168 = vmatpush1.xpose.msra.mxu0 0.0
    %2169 = vmatprep.subr.mxu0 0.0
    %2170 = vmatpush1.xpose.msra.mxu0 0.0
    %2171 = vmatprep.subr.mxu0 0.0
    %2172 = vmatpush1.xpose.msra.mxu0 0.0
    %2173 = vmatprep.subr.mxu0 0.0
    %2174 = vmatpush1.xpose.msra.mxu0 0.0
    %2175 = vmatprep.subr.mxu0 0.0
    %2176 = vmatpush1.xpose.msra.mxu0 0.0
    %2177 = vmatprep.subr.mxu0 0.0
    %2178 = vmatpush1.xpose.msra.mxu0 0.0
    %2179 = vmatprep.subr.mxu0 0.0
    %2180 = vmatpush1.xpose.msra.mxu0 0.0
    %2181 = vmatprep.subr.mxu0 0.0
    %2182 = vmatpush1.xpose.msra.mxu0 0.0
    %2183 = vmatprep.subr.mxu0 0.0
    %2184 = vmatpush1.xpose.msra.mxu0 0.0
    %2185 = vmatprep.subr.mxu0 0.0
    %2186 = vmatpush1.xpose.msra.mxu0 0.0
    %2187 = vmatprep.subr.mxu0 0.0
    %2188 = vmatpush1.xpose.msra.mxu0 0.0
    %2189 = vmatprep.subr.mxu0 0.0
    %2190 = vmatpush1.xpose.msra.mxu0 0.0
    %2191 = vmatprep.subr.mxu0 0.0
    %2192 = vmatpush1.xpose.msra.mxu0 0.0
    %2193 = vmatprep.subr.mxu0 0.0
    %2194 = vmatpush1.xpose.msra.mxu0 0.0
    %2195 = vmatprep.subr.mxu0 0.0
    %2196 = vmatpush1.xpose.msra.mxu0 0.0
    %2197 = vmatprep.subr.mxu0 0.0
    %2198 = vmatpush1.xpose.msra.mxu0 0.0
    %2199 = vmatprep.subr.mxu0 0.0
    %2200 = vmatpush1.xpose.msra.mxu0 0.0
    %2201 = vmatprep.subr.mxu0 0.0
    %2202 = vmatpush1.xpose.msra.mxu0 0.0
    %2203 = vmatprep.subr.mxu0 0.0
    %2204 = vmatpush1.xpose.msra.mxu0 0.0
    %2205 = vmatprep.subr.mxu0 0.0
    %2206 = vmatpush1.xpose.msra.mxu0 0.0
    %2207 = vmatprep.mubr.f32.mxu0 0.0
    %2208 = vmatmul.mubr.f32.gmra.mrb[0].mxu0 %v2139
    %v2209 = vpop.f32.mrb[0].mxu0
    %v2210 = vadd.f32 0.0, %v2209
    %v2211 = vpop.f32.mrb[0].mxu0
    %2212 = vdwg.mxu0
    %v2213 = vmul.f32 %v2210, 0.35355338
    %v2214 = vadd.f32 %v2213, %v525
    %v2215 = vsel %vm201, %v2214, -inf
    %2216 = vmax.xlane.f32.xlu0 %v2215
    %v2217 = vpop.xlane.xlu0 %2216
    %v2218 = vsub.f32 %v2214, %v2217
    %v2219 = vmul.f32 %v2218, 1.442695
    %v2220 = vpow.pop %v2219
    %v2221 = vsel %vm201, %v2220, 0.0
    %2222 = vadd.xlane.f32.xlu0 %v2221
    %v2223 = vpop.xlane.xlu0 %2222
    %v2224 = vrcp.pop %v2223
    %v2225 = vmul.f32 %v2220, %v2224
    %v2226 = vpack.c.bf16 %v2225, %v2225
    %2228 = vrot.lane.b32.xlu0 %v2135, 64
    %v2229 = vpop.permute.xlu0 %2228
    %v2231 = vsel %vm201, %v2226, 0
    %v2234 = vsel %vm731, %v2229, 0
    %2236 = vmatprep.subr.bf16.mxu0 0
    %2237 = vmatpush1.bf16.msra.mxu0 %v2234
    %2238 = vmatprep.subr.bf16.mxu0 0
    %2239 = vmatpush1.bf16.msra.mxu0 0
    %2240 = vmatprep.subr.bf16.mxu0 0
    %2241 = vmatpush1.bf16.msra.mxu0 0
    %2242 = vmatprep.subr.bf16.mxu0 0
    %2243 = vmatpush1.bf16.msra.mxu0 0
    %2244 = vmatprep.subr.bf16.mxu0 0
    %2245 = vmatpush1.bf16.msra.mxu0 0
    %2246 = vmatprep.subr.bf16.mxu0 0
    %2247 = vmatpush1.bf16.msra.mxu0 0
    %2248 = vmatprep.subr.bf16.mxu0 0
    %2249 = vmatpush1.bf16.msra.mxu0 0
    %2250 = vmatprep.subr.bf16.mxu0 0
    %2251 = vmatpush1.bf16.msra.mxu0 0
    %2252 = vmatprep.subr.bf16.mxu0 0
    %2253 = vmatpush1.bf16.msra.mxu0 0
    %2254 = vmatprep.subr.bf16.mxu0 0
    %2255 = vmatpush1.bf16.msra.mxu0 0
    %2256 = vmatprep.subr.bf16.mxu0 0
    %2257 = vmatpush1.bf16.msra.mxu0 0
    %2258 = vmatprep.subr.bf16.mxu0 0
    %2259 = vmatpush1.bf16.msra.mxu0 0
    %2260 = vmatprep.subr.bf16.mxu0 0
    %2261 = vmatpush1.bf16.msra.mxu0 0
    %2262 = vmatprep.subr.bf16.mxu0 0
    %2263 = vmatpush1.bf16.msra.mxu0 0
    %2264 = vmatprep.subr.bf16.mxu0 0
    %2265 = vmatpush1.bf16.msra.mxu0 0
    %2266 = vmatprep.subr.bf16.mxu0 0
    %2267 = vmatpush1.bf16.msra.mxu0 0
    %2268 = vmatprep.mubr.bf16.mxu0 0
    %2269 = vmatmul.mubr.bf16.gmra.mrb[0].mxu0 %v2231
    %v2270 = vpop.f32.mrb[0].mxu0
    %v2271 = vadd.f32 0.0, %v2270
    %v2272 = vpop.f32.mrb[0].mxu0
    %v2273 = vpop.f32.mrb[0].mxu0
    %v2274 = vpop.f32.mrb[0].mxu0
    %2275 = vdwg.mxu0
    %v2276 = vmul.f32 %v2271, %v531
    %v2277 = vadd.f32 %v2276, 0.0
    %2278 = vrot.lane.b32.xlu0 %v2129, 120
    %v2279 = vpop.permute.xlu0 %2278
    %2280 = vrot.lane.b32.xlu0 %v2129, 88
    %v2281 = vpop.permute.xlu0 %2280
    %v2282 = vsel %vm201, %v2279, 0
    %v2284 = vsel %vm201, %v2281, 0
    %2286 = vmatprep.subr.mxu0 0.0
    %2287 = vmatpush1.xpose.msra.mxu0 %v2284
    %2288 = vmatprep.subr.mxu0 0.0
    %2289 = vmatpush1.xpose.msra.mxu0 0.0
    %2290 = vmatprep.subr.mxu0 0.0
    %2291 = vmatpush1.xpose.msra.mxu0 0.0
    %2292 = vmatprep.subr.mxu0 0.0
    %2293 = vmatpush1.xpose.msra.mxu0 0.0
    %2294 = vmatprep.subr.mxu0 0.0
    %2295 = vmatpush1.xpose.msra.mxu0 0.0
    %2296 = vmatprep.subr.mxu0 0.0
    %2297 = vmatpush1.xpose.msra.mxu0 0.0
    %2298 = vmatprep.subr.mxu0 0.0
    %2299 = vmatpush1.xpose.msra.mxu0 0.0
    %2300 = vmatprep.subr.mxu0 0.0
    %2301 = vmatpush1.xpose.msra.mxu0 0.0
    %2302 = vmatprep.subr.mxu0 0.0
    %2303 = vmatpush1.xpose.msra.mxu0 0.0
    %2304 = vmatprep.subr.mxu0 0.0
    %2305 = vmatpush1.xpose.msra.mxu0 0.0
    %2306 = vmatprep.subr.mxu0 0.0
    %2307 = vmatpush1.xpose.msra.mxu0 0.0
    %2308 = vmatprep.subr.mxu0 0.0
    %2309 = vmatpush1.xpose.msra.mxu0 0.0
    %2310 = vmatprep.subr.mxu0 0.0
    %2311 = vmatpush1.xpose.msra.mxu0 0.0
    %2312 = vmatprep.subr.mxu0 0.0
    %2313 = vmatpush1.xpose.msra.mxu0 0.0
    %2314 = vmatprep.subr.mxu0 0.0
    %2315 = vmatpush1.xpose.msra.mxu0 0.0
    %2316 = vmatprep.subr.mxu0 0.0
    %2317 = vmatpush1.xpose.msra.mxu0 0.0
    %2318 = vmatprep.subr.mxu0 0.0
    %2319 = vmatpush1.xpose.msra.mxu0 0.0
    %2320 = vmatprep.subr.mxu0 0.0
    %2321 = vmatpush1.xpose.msra.mxu0 0.0
    %2322 = vmatprep.subr.mxu0 0.0
    %2323 = vmatpush1.xpose.msra.mxu0 0.0
    %2324 = vmatprep.subr.mxu0 0.0
    %2325 = vmatpush1.xpose.msra.mxu0 0.0
    %2326 = vmatprep.subr.mxu0 0.0
    %2327 = vmatpush1.xpose.msra.mxu0 0.0
    %2328 = vmatprep.subr.mxu0 0.0
    %2329 = vmatpush1.xpose.msra.mxu0 0.0
    %2330 = vmatprep.subr.mxu0 0.0
    %2331 = vmatpush1.xpose.msra.mxu0 0.0
    %2332 = vmatprep.subr.mxu0 0.0
    %2333 = vmatpush1.xpose.msra.mxu0 0.0
    %2334 = vmatprep.subr.mxu0 0.0
    %2335 = vmatpush1.xpose.msra.mxu0 0.0
    %2336 = vmatprep.subr.mxu0 0.0
    %2337 = vmatpush1.xpose.msra.mxu0 0.0
    %2338 = vmatprep.subr.mxu0 0.0
    %2339 = vmatpush1.xpose.msra.mxu0 0.0
    %2340 = vmatprep.subr.mxu0 0.0
    %2341 = vmatpush1.xpose.msra.mxu0 0.0
    %2342 = vmatprep.subr.mxu0 0.0
    %2343 = vmatpush1.xpose.msra.mxu0 0.0
    %2344 = vmatprep.subr.mxu0 0.0
    %2345 = vmatpush1.xpose.msra.mxu0 0.0
    %2346 = vmatprep.subr.mxu0 0.0
    %2347 = vmatpush1.xpose.msra.mxu0 0.0
    %2348 = vmatprep.subr.mxu0 0.0
    %2349 = vmatpush1.xpose.msra.mxu0 0.0
    %2350 = vmatprep.mubr.f32.mxu0 0.0
    %2351 = vmatmul.mubr.f32.gmra.mrb[0].mxu0 %v2282
    %v2352 = vpop.f32.mrb[0].mxu0
    %v2353 = vadd.f32 0.0, %v2352
    %v2354 = vpop.f32.mrb[0].mxu0
    %2355 = vdwg.mxu0
    %v2356 = vmul.f32 %v2353, 0.35355338
    %v2357 = vadd.f32 %v2356, %v525
    %v2358 = vsel %vm201, %v2357, -inf
    %2359 = vmax.xlane.f32.xlu0 %v2358
    %v2360 = vpop.xlane.xlu0 %2359
    %v2361 = vsub.f32 %v2357, %v2360
    %v2362 = vmul.f32 %v2361, 1.442695
    %v2363 = vpow.pop %v2362
    %v2364 = vsel %vm201, %v2363, 0.0
    %2365 = vadd.xlane.f32.xlu0 %v2364
    %v2366 = vpop.xlane.xlu0 %2365
    %v2367 = vrcp.pop %v2366
    %v2368 = vmul.f32 %v2363, %v2367
    %v2369 = vpack.c.bf16 %v2368, %v2368
    %v2371 = vsel %vm201, %v2369, 0
    %2373 = vmatprep.subr.bf16.mxu0 0
    %2374 = vmatpush1.bf16.msra.mxu0 %v2234
    %2375 = vmatprep.subr.bf16.mxu0 0
    %2376 = vmatpush1.bf16.msra.mxu0 0
    %2377 = vmatprep.subr.bf16.mxu0 0
    %2378 = vmatpush1.bf16.msra.mxu0 0
    %2379 = vmatprep.subr.bf16.mxu0 0
    %2380 = vmatpush1.bf16.msra.mxu0 0
    %2381 = vmatprep.subr.bf16.mxu0 0
    %2382 = vmatpush1.bf16.msra.mxu0 0
    %2383 = vmatprep.subr.bf16.mxu0 0
    %2384 = vmatpush1.bf16.msra.mxu0 0
    %2385 = vmatprep.subr.bf16.mxu0 0
    %2386 = vmatpush1.bf16.msra.mxu0 0
    %2387 = vmatprep.subr.bf16.mxu0 0
    %2388 = vmatpush1.bf16.msra.mxu0 0
    %2389 = vmatprep.subr.bf16.mxu0 0
    %2390 = vmatpush1.bf16.msra.mxu0 0
    %2391 = vmatprep.subr.bf16.mxu0 0
    %2392 = vmatpush1.bf16.msra.mxu0 0
    %2393 = vmatprep.subr.bf16.mxu0 0
    %2394 = vmatpush1.bf16.msra.mxu0 0
    %2395 = vmatprep.subr.bf16.mxu0 0
    %2396 = vmatpush1.bf16.msra.mxu0 0
    %2397 = vmatprep.subr.bf16.mxu0 0
    %2398 = vmatpush1.bf16.msra.mxu0 0
    %2399 = vmatprep.subr.bf16.mxu0 0
    %2400 = vmatpush1.bf16.msra.mxu0 0
    %2401 = vmatprep.subr.bf16.mxu0 0
    %2402 = vmatpush1.bf16.msra.mxu0 0
    %2403 = vmatprep.subr.bf16.mxu0 0
    %2404 = vmatpush1.bf16.msra.mxu0 0
    %2405 = vmatprep.mubr.bf16.mxu0 0
    %2406 = vmatmul.mubr.bf16.gmra.mrb[0].mxu0 %v2371
    %v2407 = vpop.f32.mrb[0].mxu0
    %v2408 = vadd.f32 0.0, %v2407
    %v2409 = vpop.f32.mrb[0].mxu0
    %v2410 = vpop.f32.mrb[0].mxu0
    %v2411 = vpop.f32.mrb[0].mxu0
    %2412 = vdwg.mxu0
    %v2413 = vmul.f32 %v2408, %v536
    %v2414 = vadd.f32 %v2277, %v2413
    %2415 = vrot.lane.b32.xlu0 %v2129, 112
    %v2416 = vpop.permute.xlu0 %2415
    %2417 = vrot.lane.b32.xlu0 %v2129, 80
    %v2418 = vpop.permute.xlu0 %2417
    %v2419 = vsel %vm201, %v2416, 0
    %v2421 = vsel %vm201, %v2418, 0
    %2423 = vmatprep.subr.mxu0 0.0
    %2424 = vmatpush1.xpose.msra.mxu0 %v2421
    %2425 = vmatprep.subr.mxu0 0.0
    %2426 = vmatpush1.xpose.msra.mxu0 0.0
    %2427 = vmatprep.subr.mxu0 0.0
    %2428 = vmatpush1.xpose.msra.mxu0 0.0
    %2429 = vmatprep.subr.mxu0 0.0
    %2430 = vmatpush1.xpose.msra.mxu0 0.0
    %2431 = vmatprep.subr.mxu0 0.0
    %2432 = vmatpush1.xpose.msra.mxu0 0.0
    %2433 = vmatprep.subr.mxu0 0.0
    %2434 = vmatpush1.xpose.msra.mxu0 0.0
    %2435 = vmatprep.subr.mxu0 0.0
    %2436 = vmatpush1.xpose.msra.mxu0 0.0
    %2437 = vmatprep.subr.mxu0 0.0
    %2438 = vmatpush1.xpose.msra.mxu0 0.0
    %2439 = vmatprep.subr.mxu0 0.0
    %2440 = vmatpush1.xpose.msra.mxu0 0.0
    %2441 = vmatprep.subr.mxu0 0.0
    %2442 = vmatpush1.xpose.msra.mxu0 0.0
    %2443 = vmatprep.subr.mxu0 0.0
    %2444 = vmatpush1.xpose.msra.mxu0 0.0
    %2445 = vmatprep.subr.mxu0 0.0
    %2446 = vmatpush1.xpose.msra.mxu0 0.0
    %2447 = vmatprep.subr.mxu0 0.0
    %2448 = vmatpush1.xpose.msra.mxu0 0.0
    %2449 = vmatprep.subr.mxu0 0.0
    %2450 = vmatpush1.xpose.msra.mxu0 0.0
    %2451 = vmatprep.subr.mxu0 0.0
    %2452 = vmatpush1.xpose.msra.mxu0 0.0
    %2453 = vmatprep.subr.mxu0 0.0
    %2454 = vmatpush1.xpose.msra.mxu0 0.0
    %2455 = vmatprep.subr.mxu0 0.0
    %2456 = vmatpush1.xpose.msra.mxu0 0.0
    %2457 = vmatprep.subr.mxu0 0.0
    %2458 = vmatpush1.xpose.msra.mxu0 0.0
    %2459 = vmatprep.subr.mxu0 0.0
    %2460 = vmatpush1.xpose.msra.mxu0 0.0
    %2461 = vmatprep.subr.mxu0 0.0
    %2462 = vmatpush1.xpose.msra.mxu0 0.0
    %2463 = vmatprep.subr.mxu0 0.0
    %2464 = vmatpush1.xpose.msra.mxu0 0.0
    %2465 = vmatprep.subr.mxu0 0.0
    %2466 = vmatpush1.xpose.msra.mxu0 0.0
    %2467 = vmatprep.subr.mxu0 0.0
    %2468 = vmatpush1.xpose.msra.mxu0 0.0
    %2469 = vmatprep.subr.mxu0 0.0
    %2470 = vmatpush1.xpose.msra.mxu0 0.0
    %2471 = vmatprep.subr.mxu0 0.0
    %2472 = vmatpush1.xpose.msra.mxu0 0.0
    %2473 = vmatprep.subr.mxu0 0.0
    %2474 = vmatpush1.xpose.msra.mxu0 0.0
    %2475 = vmatprep.subr.mxu0 0.0
    %2476 = vmatpush1.xpose.msra.mxu0 0.0
    %2477 = vmatprep.subr.mxu0 0.0
    %2478 = vmatpush1.xpose.msra.mxu0 0.0
    %2479 = vmatprep.subr.mxu0 0.0
    %2480 = vmatpush1.xpose.msra.mxu0 0.0
    %2481 = vmatprep.subr.mxu0 0.0
    %2482 = vmatpush1.xpose.msra.mxu0 0.0
    %2483 = vmatprep.subr.mxu0 0.0
    %2484 = vmatpush1.xpose.msra.mxu0 0.0
    %2485 = vmatprep.subr.mxu0 0.0
    %2486 = vmatpush1.xpose.msra.mxu0 0.0
    %2487 = vmatprep.mubr.f32.mxu0 0.0
    %2488 = vmatmul.mubr.f32.gmra.mrb[0].mxu0 %v2419
    %v2489 = vpop.f32.mrb[0].mxu0
    %v2490 = vadd.f32 0.0, %v2489
    %v2491 = vpop.f32.mrb[0].mxu0
    %2492 = vdwg.mxu0
    %v2493 = vmul.f32 %v2490, 0.35355338
    %v2494 = vadd.f32 %v2493, %v525
    %v2495 = vsel %vm201, %v2494, -inf
    %2496 = vmax.xlane.f32.xlu0 %v2495
    %v2497 = vpop.xlane.xlu0 %2496
    %v2498 = vsub.f32 %v2494, %v2497
    %v2499 = vmul.f32 %v2498, 1.442695
    %v2500 = vpow.pop %v2499
    %v2501 = vsel %vm201, %v2500, 0.0
    %2502 = vadd.xlane.f32.xlu0 %v2501
    %v2503 = vpop.xlane.xlu0 %2502
    %v2504 = vrcp.pop %v2503
    %v2505 = vmul.f32 %v2500, %v2504
    %v2506 = vpack.c.bf16 %v2505, %v2505
    %v2508 = vsel %vm201, %v2506, 0
    %2510 = vmatprep.subr.bf16.mxu0 0
    %2511 = vmatpush1.bf16.msra.mxu0 %v2234
    %2512 = vmatprep.subr.bf16.mxu0 0
    %2513 = vmatpush1.bf16.msra.mxu0 0
    %2514 = vmatprep.subr.bf16.mxu0 0
    %2515 = vmatpush1.bf16.msra.mxu0 0
    %2516 = vmatprep.subr.bf16.mxu0 0
    %2517 = vmatpush1.bf16.msra.mxu0 0
    %2518 = vmatprep.subr.bf16.mxu0 0
    %2519 = vmatpush1.bf16.msra.mxu0 0
    %2520 = vmatprep.subr.bf16.mxu0 0
    %2521 = vmatpush1.bf16.msra.mxu0 0
    %2522 = vmatprep.subr.bf16.mxu0 0
    %2523 = vmatpush1.bf16.msra.mxu0 0
    %2524 = vmatprep.subr.bf16.mxu0 0
    %2525 = vmatpush1.bf16.msra.mxu0 0
    %2526 = vmatprep.subr.bf16.mxu0 0
    %2527 = vmatpush1.bf16.msra.mxu0 0
    %2528 = vmatprep.subr.bf16.mxu0 0
    %2529 = vmatpush1.bf16.msra.mxu0 0
    %2530 = vmatprep.subr.bf16.mxu0 0
    %2531 = vmatpush1.bf16.msra.mxu0 0
    %2532 = vmatprep.subr.bf16.mxu0 0
    %2533 = vmatpush1.bf16.msra.mxu0 0
    %2534 = vmatprep.subr.bf16.mxu0 0
    %2535 = vmatpush1.bf16.msra.mxu0 0
    %2536 = vmatprep.subr.bf16.mxu0 0
    %2537 = vmatpush1.bf16.msra.mxu0 0
    %2538 = vmatprep.subr.bf16.mxu0 0
    %2539 = vmatpush1.bf16.msra.mxu0 0
    %2540 = vmatprep.subr.bf16.mxu0 0
    %2541 = vmatpush1.bf16.msra.mxu0 0
    %2542 = vmatprep.mubr.bf16.mxu0 0
    %2543 = vmatmul.mubr.bf16.gmra.mrb[0].mxu0 %v2508
    %v2544 = vpop.f32.mrb[0].mxu0
    %v2545 = vadd.f32 0.0, %v2544
    %v2546 = vpop.f32.mrb[0].mxu0
    %v2547 = vpop.f32.mrb[0].mxu0
    %v2548 = vpop.f32.mrb[0].mxu0
    %2549 = vdwg.mxu0
    %v2550 = vmul.f32 %v2545, %v541
    %v2551 = vadd.f32 %v2414, %v2550
    %2552 = vrot.lane.b32.xlu0 %v2129, 104
    %v2553 = vpop.permute.xlu0 %2552
    %2554 = vrot.lane.b32.xlu0 %v2129, 72
    %v2555 = vpop.permute.xlu0 %2554
    %v2556 = vsel %vm201, %v2553, 0
    %v2558 = vsel %vm201, %v2555, 0
    %2560 = vmatprep.subr.mxu0 0.0
    %2561 = vmatpush1.xpose.msra.mxu0 %v2558
    %2562 = vmatprep.subr.mxu0 0.0
    %2563 = vmatpush1.xpose.msra.mxu0 0.0
    %2564 = vmatprep.subr.mxu0 0.0
    %2565 = vmatpush1.xpose.msra.mxu0 0.0
    %2566 = vmatprep.subr.mxu0 0.0
    %2567 = vmatpush1.xpose.msra.mxu0 0.0
    %2568 = vmatprep.subr.mxu0 0.0
    %2569 = vmatpush1.xpose.msra.mxu0 0.0
    %2570 = vmatprep.subr.mxu0 0.0
    %2571 = vmatpush1.xpose.msra.mxu0 0.0
    %2572 = vmatprep.subr.mxu0 0.0
    %2573 = vmatpush1.xpose.msra.mxu0 0.0
    %2574 = vmatprep.subr.mxu0 0.0
    %2575 = vmatpush1.xpose.msra.mxu0 0.0
    %2576 = vmatprep.subr.mxu0 0.0
    %2577 = vmatpush1.xpose.msra.mxu0 0.0
    %2578 = vmatprep.subr.mxu0 0.0
    %2579 = vmatpush1.xpose.msra.mxu0 0.0
    %2580 = vmatprep.subr.mxu0 0.0
    %2581 = vmatpush1.xpose.msra.mxu0 0.0
    %2582 = vmatprep.subr.mxu0 0.0
    %2583 = vmatpush1.xpose.msra.mxu0 0.0
    %2584 = vmatprep.subr.mxu0 0.0
    %2585 = vmatpush1.xpose.msra.mxu0 0.0
    %2586 = vmatprep.subr.mxu0 0.0
    %2587 = vmatpush1.xpose.msra.mxu0 0.0
    %2588 = vmatprep.subr.mxu0 0.0
    %2589 = vmatpush1.xpose.msra.mxu0 0.0
    %2590 = vmatprep.subr.mxu0 0.0
    %2591 = vmatpush1.xpose.msra.mxu0 0.0
    %2592 = vmatprep.subr.mxu0 0.0
    %2593 = vmatpush1.xpose.msra.mxu0 0.0
    %2594 = vmatprep.subr.mxu0 0.0
    %2595 = vmatpush1.xpose.msra.mxu0 0.0
    %2596 = vmatprep.subr.mxu0 0.0
    %2597 = vmatpush1.xpose.msra.mxu0 0.0
    %2598 = vmatprep.subr.mxu0 0.0
    %2599 = vmatpush1.xpose.msra.mxu0 0.0
    %2600 = vmatprep.subr.mxu0 0.0
    %2601 = vmatpush1.xpose.msra.mxu0 0.0
    %2602 = vmatprep.subr.mxu0 0.0
    %2603 = vmatpush1.xpose.msra.mxu0 0.0
    %2604 = vmatprep.subr.mxu0 0.0
    %2605 = vmatpush1.xpose.msra.mxu0 0.0
    %2606 = vmatprep.subr.mxu0 0.0
    %2607 = vmatpush1.xpose.msra.mxu0 0.0
    %2608 = vmatprep.subr.mxu0 0.0
    %2609 = vmatpush1.xpose.msra.mxu0 0.0
    %2610 = vmatprep.subr.mxu0 0.0
    %2611 = vmatpush1.xpose.msra.mxu0 0.0
    %2612 = vmatprep.subr.mxu0 0.0
    %2613 = vmatpush1.xpose.msra.mxu0 0.0
    %2614 = vmatprep.subr.mxu0 0.0
    %2615 = vmatpush1.xpose.msra.mxu0 0.0
    %2616 = vmatprep.subr.mxu0 0.0
    %2617 = vmatpush1.xpose.msra.mxu0 0.0
    %2618 = vmatprep.subr.mxu0 0.0
    %2619 = vmatpush1.xpose.msra.mxu0 0.0
    %2620 = vmatprep.subr.mxu0 0.0
    %2621 = vmatpush1.xpose.msra.mxu0 0.0
    %2622 = vmatprep.subr.mxu0 0.0
    %2623 = vmatpush1.xpose.msra.mxu0 0.0
    %2624 = vmatprep.mubr.f32.mxu0 0.0
    %2625 = vmatmul.mubr.f32.gmra.mrb[0].mxu0 %v2556
    %v2626 = vpop.f32.mrb[0].mxu0
    %v2627 = vadd.f32 0.0, %v2626
    %v2628 = vpop.f32.mrb[0].mxu0
    %2629 = vdwg.mxu0
    %v2630 = vmul.f32 %v2627, 0.35355338
    %v2631 = vadd.f32 %v2630, %v525
    %v2632 = vsel %vm201, %v2631, -inf
    %2633 = vmax.xlane.f32.xlu0 %v2632
    %v2634 = vpop.xlane.xlu0 %2633
    %v2635 = vsub.f32 %v2631, %v2634
    %v2636 = vmul.f32 %v2635, 1.442695
    %v2637 = vpow.pop %v2636
    %v2638 = vsel %vm201, %v2637, 0.0
    %2639 = vadd.xlane.f32.xlu0 %v2638
    %v2640 = vpop.xlane.xlu0 %2639
    %v2641 = vrcp.pop %v2640
    %v2642 = vmul.f32 %v2637, %v2641
    %v2643 = vpack.c.bf16 %v2642, %v2642
    %v2645 = vsel %vm201, %v2643, 0
    %2647 = vmatprep.subr.bf16.mxu0 0
    %2648 = vmatpush1.bf16.msra.mxu0 %v2234
    %2649 = vmatprep.subr.bf16.mxu0 0
    %2650 = vmatpush1.bf16.msra.mxu0 0
    %2651 = vmatprep.subr.bf16.mxu0 0
    %2652 = vmatpush1.bf16.msra.mxu0 0
    %2653 = vmatprep.subr.bf16.mxu0 0
    %2654 = vmatpush1.bf16.msra.mxu0 0
    %2655 = vmatprep.subr.bf16.mxu0 0
    %2656 = vmatpush1.bf16.msra.mxu0 0
    %2657 = vmatprep.subr.bf16.mxu0 0
    %2658 = vmatpush1.bf16.msra.mxu0 0
    %2659 = vmatprep.subr.bf16.mxu0 0
    %2660 = vmatpush1.bf16.msra.mxu0 0
    %2661 = vmatprep.subr.bf16.mxu0 0
    %2662 = vmatpush1.bf16.msra.mxu0 0
    %2663 = vmatprep.subr.bf16.mxu0 0
    %2664 = vmatpush1.bf16.msra.mxu0 0
    %2665 = vmatprep.subr.bf16.mxu0 0
    %2666 = vmatpush1.bf16.msra.mxu0 0
    %2667 = vmatprep.subr.bf16.mxu0 0
    %2668 = vmatpush1.bf16.msra.mxu0 0
    %2669 = vmatprep.subr.bf16.mxu0 0
    %2670 = vmatpush1.bf16.msra.mxu0 0
    %2671 = vmatprep.subr.bf16.mxu0 0
    %2672 = vmatpush1.bf16.msra.mxu0 0
    %2673 = vmatprep.subr.bf16.mxu0 0
    %2674 = vmatpush1.bf16.msra.mxu0 0
    %2675 = vmatprep.subr.bf16.mxu0 0
    %2676 = vmatpush1.bf16.msra.mxu0 0
    %2677 = vmatprep.subr.bf16.mxu0 0
    %2678 = vmatpush1.bf16.msra.mxu0 0
    %2679 = vmatprep.mubr.bf16.mxu0 0
    %2680 = vmatmul.mubr.bf16.gmra.mrb[0].mxu0 %v2645
    %v2681 = vpop.f32.mrb[0].mxu0
    %v2682 = vadd.f32 0.0, %v2681
    %v2683 = vpop.f32.mrb[0].mxu0
    %v2684 = vpop.f32.mrb[0].mxu0
    %v2685 = vpop.f32.mrb[0].mxu0
    %2686 = vdwg.mxu0
    %v2687 = vmul.f32 %v2682, %v546
    %v2688 = vadd.f32 %v2551, %v2687
    %v2689 = vpack.c.bf16 %v2132, %v2132
    %2691 = vrot.lane.b32.xlu0 %v2132, 96
    %v2692 = vpop.permute.xlu0 %2691
    %v2693 = vsel %vm201, %v2132, 0
    %v2695 = vsel %vm201, %v2692, 0
    %2697 = vmatprep.subr.mxu0 0.0
    %2698 = vmatpush1.xpose.msra.mxu0 %v2695
    %2699 = vmatprep.subr.mxu0 0.0
    %2700 = vmatpush1.xpose.msra.mxu0 0.0
    %2701 = vmatprep.subr.mxu0 0.0
    %2702 = vmatpush1.xpose.msra.mxu0 0.0
    %2703 = vmatprep.subr.mxu0 0.0
    %2704 = vmatpush1.xpose.msra.mxu0 0.0
    %2705 = vmatprep.subr.mxu0 0.0
    %2706 = vmatpush1.xpose.msra.mxu0 0.0
    %2707 = vmatprep.subr.mxu0 0.0
    %2708 = vmatpush1.xpose.msra.mxu0 0.0
    %2709 = vmatprep.subr.mxu0 0.0
    %2710 = vmatpush1.xpose.msra.mxu0 0.0
    %2711 = vmatprep.subr.mxu0 0.0
    %2712 = vmatpush1.xpose.msra.mxu0 0.0
    %2713 = vmatprep.subr.mxu0 0.0
    %2714 = vmatpush1.xpose.msra.mxu0 0.0
    %2715 = vmatprep.subr.mxu0 0.0
    %2716 = vmatpush1.xpose.msra.mxu0 0.0
    %2717 = vmatprep.subr.mxu0 0.0
    %2718 = vmatpush1.xpose.msra.mxu0 0.0
    %2719 = vmatprep.subr.mxu0 0.0
    %2720 = vmatpush1.xpose.msra.mxu0 0.0
    %2721 = vmatprep.subr.mxu0 0.0
    %2722 = vmatpush1.xpose.msra.mxu0 0.0
    %2723 = vmatprep.subr.mxu0 0.0
    %2724 = vmatpush1.xpose.msra.mxu0 0.0
    %2725 = vmatprep.subr.mxu0 0.0
    %2726 = vmatpush1.xpose.msra.mxu0 0.0
    %2727 = vmatprep.subr.mxu0 0.0
    %2728 = vmatpush1.xpose.msra.mxu0 0.0
    %2729 = vmatprep.subr.mxu0 0.0
    %2730 = vmatpush1.xpose.msra.mxu0 0.0
    %2731 = vmatprep.subr.mxu0 0.0
    %2732 = vmatpush1.xpose.msra.mxu0 0.0
    %2733 = vmatprep.subr.mxu0 0.0
    %2734 = vmatpush1.xpose.msra.mxu0 0.0
    %2735 = vmatprep.subr.mxu0 0.0
    %2736 = vmatpush1.xpose.msra.mxu0 0.0
    %2737 = vmatprep.subr.mxu0 0.0
    %2738 = vmatpush1.xpose.msra.mxu0 0.0
    %2739 = vmatprep.subr.mxu0 0.0
    %2740 = vmatpush1.xpose.msra.mxu0 0.0
    %2741 = vmatprep.subr.mxu0 0.0
    %2742 = vmatpush1.xpose.msra.mxu0 0.0
    %2743 = vmatprep.subr.mxu0 0.0
    %2744 = vmatpush1.xpose.msra.mxu0 0.0
    %2745 = vmatprep.subr.mxu0 0.0
    %2746 = vmatpush1.xpose.msra.mxu0 0.0
    %2747 = vmatprep.subr.mxu0 0.0
    %2748 = vmatpush1.xpose.msra.mxu0 0.0
    %2749 = vmatprep.subr.mxu0 0.0
    %2750 = vmatpush1.xpose.msra.mxu0 0.0
    %2751 = vmatprep.subr.mxu0 0.0
    %2752 = vmatpush1.xpose.msra.mxu0 0.0
    %2753 = vmatprep.subr.mxu0 0.0
    %2754 = vmatpush1.xpose.msra.mxu0 0.0
    %2755 = vmatprep.subr.mxu0 0.0
    %2756 = vmatpush1.xpose.msra.mxu0 0.0
    %2757 = vmatprep.subr.mxu0 0.0
    %2758 = vmatpush1.xpose.msra.mxu0 0.0
    %2759 = vmatprep.subr.mxu0 0.0
    %2760 = vmatpush1.xpose.msra.mxu0 0.0
    %2761 = vmatprep.mubr.f32.mxu0 0.0
    %2762 = vmatmul.mubr.f32.gmra.mrb[0].mxu0 %v2693
    %v2763 = vpop.f32.mrb[0].mxu0
    %v2764 = vadd.f32 0.0, %v2763
    %v2765 = vpop.f32.mrb[0].mxu0
    %2766 = vdwg.mxu0
    %v2767 = vmul.f32 %v2764, 0.35355338
    %v2768 = vadd.f32 %v2767, %v1269
    %v2769 = vsel %vm201, %v2768, -inf
    %2770 = vmax.xlane.f32.xlu0 %v2769
    %v2771 = vpop.xlane.xlu0 %2770
    %v2772 = vsub.f32 %v2768, %v2771
    %v2773 = vmul.f32 %v2772, 1.442695
    %v2774 = vpow.pop %v2773
    %v2775 = vsel %vm201, %v2774, 0.0
    %2776 = vadd.xlane.f32.xlu0 %v2775
    %v2777 = vpop.xlane.xlu0 %2776
    %v2778 = vrcp.pop %v2777
    %v2779 = vmul.f32 %v2774, %v2778
    %v2780 = vpack.c.bf16 %v2779, %v2779
    %2782 = vrot.lane.b32.xlu0 %v2689, 64
    %v2783 = vpop.permute.xlu0 %2782
    %v2785 = vsel %vm201, %v2780, 0
    %v2788 = vsel %vm731, %v2783, 0
    %2790 = vmatprep.subr.bf16.mxu0 0
    %2791 = vmatpush1.bf16.msra.mxu0 %v2788
    %2792 = vmatprep.subr.bf16.mxu0 0
    %2793 = vmatpush1.bf16.msra.mxu0 0
    %2794 = vmatprep.subr.bf16.mxu0 0
    %2795 = vmatpush1.bf16.msra.mxu0 0
    %2796 = vmatprep.subr.bf16.mxu0 0
    %2797 = vmatpush1.bf16.msra.mxu0 0
    %2798 = vmatprep.subr.bf16.mxu0 0
    %2799 = vmatpush1.bf16.msra.mxu0 0
    %2800 = vmatprep.subr.bf16.mxu0 0
    %2801 = vmatpush1.bf16.msra.mxu0 0
    %2802 = vmatprep.subr.bf16.mxu0 0
    %2803 = vmatpush1.bf16.msra.mxu0 0
    %2804 = vmatprep.subr.bf16.mxu0 0
    %2805 = vmatpush1.bf16.msra.mxu0 0
    %2806 = vmatprep.subr.bf16.mxu0 0
    %2807 = vmatpush1.bf16.msra.mxu0 0
    %2808 = vmatprep.subr.bf16.mxu0 0
    %2809 = vmatpush1.bf16.msra.mxu0 0
    %2810 = vmatprep.subr.bf16.mxu0 0
    %2811 = vmatpush1.bf16.msra.mxu0 0
    %2812 = vmatprep.subr.bf16.mxu0 0
    %2813 = vmatpush1.bf16.msra.mxu0 0
    %2814 = vmatprep.subr.bf16.mxu0 0
    %2815 = vmatpush1.bf16.msra.mxu0 0
    %2816 = vmatprep.subr.bf16.mxu0 0
    %2817 = vmatpush1.bf16.msra.mxu0 0
    %2818 = vmatprep.subr.bf16.mxu0 0
    %2819 = vmatpush1.bf16.msra.mxu0 0
    %2820 = vmatprep.subr.bf16.mxu0 0
    %2821 = vmatpush1.bf16.msra.mxu0 0
    %2822 = vmatprep.mubr.bf16.mxu0 0
    %2823 = vmatmul.mubr.bf16.gmra.mrb[0].mxu0 %v2785
    %v2824 = vpop.f32.mrb[0].mxu0
    %v2825 = vadd.f32 0.0, %v2824
    %v2826 = vpop.f32.mrb[0].mxu0
    %v2827 = vpop.f32.mrb[0].mxu0
    %v2828 = vpop.f32.mrb[0].mxu0
    %2829 = vdwg.mxu0
    %v2830 = vmul.f32 %v2825, %v531
    %v2831 = vadd.f32 %v2830, 0.0
    %2832 = vrot.lane.b32.xlu0 %v2132, 120
    %v2833 = vpop.permute.xlu0 %2832
    %2834 = vrot.lane.b32.xlu0 %v2132, 88
    %v2835 = vpop.permute.xlu0 %2834
    %v2836 = vsel %vm201, %v2833, 0
    %v2838 = vsel %vm201, %v2835, 0
    %2840 = vmatprep.subr.mxu0 0.0
    %2841 = vmatpush1.xpose.msra.mxu0 %v2838
    %2842 = vmatprep.subr.mxu0 0.0
    %2843 = vmatpush1.xpose.msra.mxu0 0.0
    %2844 = vmatprep.subr.mxu0 0.0
    %2845 = vmatpush1.xpose.msra.mxu0 0.0
    %2846 = vmatprep.subr.mxu0 0.0
    %2847 = vmatpush1.xpose.msra.mxu0 0.0
    %2848 = vmatprep.subr.mxu0 0.0
    %2849 = vmatpush1.xpose.msra.mxu0 0.0
    %2850 = vmatprep.subr.mxu0 0.0
    %2851 = vmatpush1.xpose.msra.mxu0 0.0
    %2852 = vmatprep.subr.mxu0 0.0
    %2853 = vmatpush1.xpose.msra.mxu0 0.0
    %2854 = vmatprep.subr.mxu0 0.0
    %2855 = vmatpush1.xpose.msra.mxu0 0.0
    %2856 = vmatprep.subr.mxu0 0.0
    %2857 = vmatpush1.xpose.msra.mxu0 0.0
    %2858 = vmatprep.subr.mxu0 0.0
    %2859 = vmatpush1.xpose.msra.mxu0 0.0
    %2860 = vmatprep.subr.mxu0 0.0
    %2861 = vmatpush1.xpose.msra.mxu0 0.0
    %2862 = vmatprep.subr.mxu0 0.0
    %2863 = vmatpush1.xpose.msra.mxu0 0.0
    %2864 = vmatprep.subr.mxu0 0.0
    %2865 = vmatpush1.xpose.msra.mxu0 0.0
    %2866 = vmatprep.subr.mxu0 0.0
    %2867 = vmatpush1.xpose.msra.mxu0 0.0
    %2868 = vmatprep.subr.mxu0 0.0
    %2869 = vmatpush1.xpose.msra.mxu0 0.0
    %2870 = vmatprep.subr.mxu0 0.0
    %2871 = vmatpush1.xpose.msra.mxu0 0.0
    %2872 = vmatprep.subr.mxu0 0.0
    %2873 = vmatpush1.xpose.msra.mxu0 0.0
    %2874 = vmatprep.subr.mxu0 0.0
    %2875 = vmatpush1.xpose.msra.mxu0 0.0
    %2876 = vmatprep.subr.mxu0 0.0
    %2877 = vmatpush1.xpose.msra.mxu0 0.0
    %2878 = vmatprep.subr.mxu0 0.0
    %2879 = vmatpush1.xpose.msra.mxu0 0.0
    %2880 = vmatprep.subr.mxu0 0.0
    %2881 = vmatpush1.xpose.msra.mxu0 0.0
    %2882 = vmatprep.subr.mxu0 0.0
    %2883 = vmatpush1.xpose.msra.mxu0 0.0
    %2884 = vmatprep.subr.mxu0 0.0
    %2885 = vmatpush1.xpose.msra.mxu0 0.0
    %2886 = vmatprep.subr.mxu0 0.0
    %2887 = vmatpush1.xpose.msra.mxu0 0.0
    %2888 = vmatprep.subr.mxu0 0.0
    %2889 = vmatpush1.xpose.msra.mxu0 0.0
    %2890 = vmatprep.subr.mxu0 0.0
    %2891 = vmatpush1.xpose.msra.mxu0 0.0
    %2892 = vmatprep.subr.mxu0 0.0
    %2893 = vmatpush1.xpose.msra.mxu0 0.0
    %2894 = vmatprep.subr.mxu0 0.0
    %2895 = vmatpush1.xpose.msra.mxu0 0.0
    %2896 = vmatprep.subr.mxu0 0.0
    %2897 = vmatpush1.xpose.msra.mxu0 0.0
    %2898 = vmatprep.subr.mxu0 0.0
    %2899 = vmatpush1.xpose.msra.mxu0 0.0
    %2900 = vmatprep.subr.mxu0 0.0
    %2901 = vmatpush1.xpose.msra.mxu0 0.0
    %2902 = vmatprep.subr.mxu0 0.0
    %2903 = vmatpush1.xpose.msra.mxu0 0.0
    %2904 = vmatprep.mubr.f32.mxu0 0.0
    %2905 = vmatmul.mubr.f32.gmra.mrb[0].mxu0 %v2836
    %v2906 = vpop.f32.mrb[0].mxu0
    %v2907 = vadd.f32 0.0, %v2906
    %v2908 = vpop.f32.mrb[0].mxu0
    %2909 = vdwg.mxu0
    %v2910 = vmul.f32 %v2907, 0.35355338
    %v2911 = vadd.f32 %v2910, %v1269
    %v2912 = vsel %vm201, %v2911, -inf
    %2913 = vmax.xlane.f32.xlu0 %v2912
    %v2914 = vpop.xlane.xlu0 %2913
    %v2915 = vsub.f32 %v2911, %v2914
    %v2916 = vmul.f32 %v2915, 1.442695
    %v2917 = vpow.pop %v2916
    %v2918 = vsel %vm201, %v2917, 0.0
    %2919 = vadd.xlane.f32.xlu0 %v2918
    %v2920 = vpop.xlane.xlu0 %2919
    %v2921 = vrcp.pop %v2920
    %v2922 = vmul.f32 %v2917, %v2921
    %v2923 = vpack.c.bf16 %v2922, %v2922
    %v2925 = vsel %vm201, %v2923, 0
    %2927 = vmatprep.subr.bf16.mxu0 0
    %2928 = vmatpush1.bf16.msra.mxu0 %v2788
    %2929 = vmatprep.subr.bf16.mxu0 0
    %2930 = vmatpush1.bf16.msra.mxu0 0
    %2931 = vmatprep.subr.bf16.mxu0 0
    %2932 = vmatpush1.bf16.msra.mxu0 0
    %2933 = vmatprep.subr.bf16.mxu0 0
    %2934 = vmatpush1.bf16.msra.mxu0 0
    %2935 = vmatprep.subr.bf16.mxu0 0
    %2936 = vmatpush1.bf16.msra.mxu0 0
    %2937 = vmatprep.subr.bf16.mxu0 0
    %2938 = vmatpush1.bf16.msra.mxu0 0
    %2939 = vmatprep.subr.bf16.mxu0 0
    %2940 = vmatpush1.bf16.msra.mxu0 0
    %2941 = vmatprep.subr.bf16.mxu0 0
    %2942 = vmatpush1.bf16.msra.mxu0 0
    %2943 = vmatprep.subr.bf16.mxu0 0
    %2944 = vmatpush1.bf16.msra.mxu0 0
    %2945 = vmatprep.subr.bf16.mxu0 0
    %2946 = vmatpush1.bf16.msra.mxu0 0
    %2947 = vmatprep.subr.bf16.mxu0 0
    %2948 = vmatpush1.bf16.msra.mxu0 0
    %2949 = vmatprep.subr.bf16.mxu0 0
    %2950 = vmatpush1.bf16.msra.mxu0 0
    %2951 = vmatprep.subr.bf16.mxu0 0
    %2952 = vmatpush1.bf16.msra.mxu0 0
    %2953 = vmatprep.subr.bf16.mxu0 0
    %2954 = vmatpush1.bf16.msra.mxu0 0
    %2955 = vmatprep.subr.bf16.mxu0 0
    %2956 = vmatpush1.bf16.msra.mxu0 0
    %2957 = vmatprep.subr.bf16.mxu0 0
    %2958 = vmatpush1.bf16.msra.mxu0 0
    %2959 = vmatprep.mubr.bf16.mxu0 0
    %2960 = vmatmul.mubr.bf16.gmra.mrb[0].mxu0 %v2925
    %v2961 = vpop.f32.mrb[0].mxu0
    %v2962 = vadd.f32 0.0, %v2961
    %v2963 = vpop.f32.mrb[0].mxu0
    %v2964 = vpop.f32.mrb[0].mxu0
    %v2965 = vpop.f32.mrb[0].mxu0
    %2966 = vdwg.mxu0
    %v2967 = vmul.f32 %v2962, %v536
    %v2968 = vadd.f32 %v2831, %v2967
    %2969 = vrot.lane.b32.xlu0 %v2132, 112
    %v2970 = vpop.permute.xlu0 %2969
    %2971 = vrot.lane.b32.xlu0 %v2132, 80
    %v2972 = vpop.permute.xlu0 %2971
    %v2973 = vsel %vm201, %v2970, 0
    %v2975 = vsel %vm201, %v2972, 0
    %2977 = vmatprep.subr.mxu0 0.0
    %2978 = vmatpush1.xpose.msra.mxu0 %v2975
    %2979 = vmatprep.subr.mxu0 0.0
    %2980 = vmatpush1.xpose.msra.mxu0 0.0
    %2981 = vmatprep.subr.mxu0 0.0
    %2982 = vmatpush1.xpose.msra.mxu0 0.0
    %2983 = vmatprep.subr.mxu0 0.0
    %2984 = vmatpush1.xpose.msra.mxu0 0.0
    %2985 = vmatprep.subr.mxu0 0.0
    %2986 = vmatpush1.xpose.msra.mxu0 0.0
    %2987 = vmatprep.subr.mxu0 0.0
    %2988 = vmatpush1.xpose.msra.mxu0 0.0
    %2989 = vmatprep.subr.mxu0 0.0
    %2990 = vmatpush1.xpose.msra.mxu0 0.0
    %2991 = vmatprep.subr.mxu0 0.0
    %2992 = vmatpush1.xpose.msra.mxu0 0.0
    %2993 = vmatprep.subr.mxu0 0.0
    %2994 = vmatpush1.xpose.msra.mxu0 0.0
    %2995 = vmatprep.subr.mxu0 0.0
    %2996 = vmatpush1.xpose.msra.mxu0 0.0
    %2997 = vmatprep.subr.mxu0 0.0
    %2998 = vmatpush1.xpose.msra.mxu0 0.0
    %2999 = vmatprep.subr.mxu0 0.0
    %3000 = vmatpush1.xpose.msra.mxu0 0.0
    %3001 = vmatprep.subr.mxu0 0.0
    %3002 = vmatpush1.xpose.msra.mxu0 0.0
    %3003 = vmatprep.subr.mxu0 0.0
    %3004 = vmatpush1.xpose.msra.mxu0 0.0
    %3005 = vmatprep.subr.mxu0 0.0
    %3006 = vmatpush1.xpose.msra.mxu0 0.0
    %3007 = vmatprep.subr.mxu0 0.0
    %3008 = vmatpush1.xpose.msra.mxu0 0.0
    %3009 = vmatprep.subr.mxu0 0.0
    %3010 = vmatpush1.xpose.msra.mxu0 0.0
    %3011 = vmatprep.subr.mxu0 0.0
    %3012 = vmatpush1.xpose.msra.mxu0 0.0
    %3013 = vmatprep.subr.mxu0 0.0
    %3014 = vmatpush1.xpose.msra.mxu0 0.0
    %3015 = vmatprep.subr.mxu0 0.0
    %3016 = vmatpush1.xpose.msra.mxu0 0.0
    %3017 = vmatprep.subr.mxu0 0.0
    %3018 = vmatpush1.xpose.msra.mxu0 0.0
    %3019 = vmatprep.subr.mxu0 0.0
    %3020 = vmatpush1.xpose.msra.mxu0 0.0
    %3021 = vmatprep.subr.mxu0 0.0
    %3022 = vmatpush1.xpose.msra.mxu0 0.0
    %3023 = vmatprep.subr.mxu0 0.0
    %3024 = vmatpush1.xpose.msra.mxu0 0.0
    %3025 = vmatprep.subr.mxu0 0.0
    %3026 = vmatpush1.xpose.msra.mxu0 0.0
    %3027 = vmatprep.subr.mxu0 0.0
    %3028 = vmatpush1.xpose.msra.mxu0 0.0
    %3029 = vmatprep.subr.mxu0 0.0
    %3030 = vmatpush1.xpose.msra.mxu0 0.0
    %3031 = vmatprep.subr.mxu0 0.0
    %3032 = vmatpush1.xpose.msra.mxu0 0.0
    %3033 = vmatprep.subr.mxu0 0.0
    %3034 = vmatpush1.xpose.msra.mxu0 0.0
    %3035 = vmatprep.subr.mxu0 0.0
    %3036 = vmatpush1.xpose.msra.mxu0 0.0
    %3037 = vmatprep.subr.mxu0 0.0
    %3038 = vmatpush1.xpose.msra.mxu0 0.0
    %3039 = vmatprep.subr.mxu0 0.0
    %3040 = vmatpush1.xpose.msra.mxu0 0.0
    %3041 = vmatprep.mubr.f32.mxu0 0.0
    %3042 = vmatmul.mubr.f32.gmra.mrb[0].mxu0 %v2973
    %v3043 = vpop.f32.mrb[0].mxu0
    %v3044 = vadd.f32 0.0, %v3043
    %v3045 = vpop.f32.mrb[0].mxu0
    %3046 = vdwg.mxu0
    %v3047 = vmul.f32 %v3044, 0.35355338
    %v3048 = vadd.f32 %v3047, %v1269
    %v3049 = vsel %vm201, %v3048, -inf
    %3050 = vmax.xlane.f32.xlu0 %v3049
    %v3051 = vpop.xlane.xlu0 %3050
    %v3052 = vsub.f32 %v3048, %v3051
    %v3053 = vmul.f32 %v3052, 1.442695
    %v3054 = vpow.pop %v3053
    %v3055 = vsel %vm201, %v3054, 0.0
    %3056 = vadd.xlane.f32.xlu0 %v3055
    %v3057 = vpop.xlane.xlu0 %3056
    %v3058 = vrcp.pop %v3057
    %v3059 = vmul.f32 %v3054, %v3058
    %v3060 = vpack.c.bf16 %v3059, %v3059
    %v3062 = vsel %vm201, %v3060, 0
    %3064 = vmatprep.subr.bf16.mxu0 0
    %3065 = vmatpush1.bf16.msra.mxu0 %v2788
    %3066 = vmatprep.subr.bf16.mxu0 0
    %3067 = vmatpush1.bf16.msra.mxu0 0
    %3068 = vmatprep.subr.bf16.mxu0 0
    %3069 = vmatpush1.bf16.msra.mxu0 0
    %3070 = vmatprep.subr.bf16.mxu0 0
    %3071 = vmatpush1.bf16.msra.mxu0 0
    %3072 = vmatprep.subr.bf16.mxu0 0
    %3073 = vmatpush1.bf16.msra.mxu0 0
    %3074 = vmatprep.subr.bf16.mxu0 0
    %3075 = vmatpush1.bf16.msra.mxu0 0
    %3076 = vmatprep.subr.bf16.mxu0 0
    %3077 = vmatpush1.bf16.msra.mxu0 0
    %3078 = vmatprep.subr.bf16.mxu0 0
    %3079 = vmatpush1.bf16.msra.mxu0 0
    %3080 = vmatprep.subr.bf16.mxu0 0
    %3081 = vmatpush1.bf16.msra.mxu0 0
    %3082 = vmatprep.subr.bf16.mxu0 0
    %3083 = vmatpush1.bf16.msra.mxu0 0
    %3084 = vmatprep.subr.bf16.mxu0 0
    %3085 = vmatpush1.bf16.msra.mxu0 0
    %3086 = vmatprep.subr.bf16.mxu0 0
    %3087 = vmatpush1.bf16.msra.mxu0 0
    %3088 = vmatprep.subr.bf16.mxu0 0
    %3089 = vmatpush1.bf16.msra.mxu0 0
    %3090 = vmatprep.subr.bf16.mxu0 0
    %3091 = vmatpush1.bf16.msra.mxu0 0
    %3092 = vmatprep.subr.bf16.mxu0 0
    %3093 = vmatpush1.bf16.msra.mxu0 0
    %3094 = vmatprep.subr.bf16.mxu0 0
    %3095 = vmatpush1.bf16.msra.mxu0 0
    %3096 = vmatprep.mubr.bf16.mxu0 0
    %3097 = vmatmul.mubr.bf16.gmra.mrb[0].mxu0 %v3062
    %v3098 = vpop.f32.mrb[0].mxu0
    %v3099 = vadd.f32 0.0, %v3098
    %v3100 = vpop.f32.mrb[0].mxu0
    %v3101 = vpop.f32.mrb[0].mxu0
    %v3102 = vpop.f32.mrb[0].mxu0
    %3103 = vdwg.mxu0
    %v3104 = vmul.f32 %v3099, %v541
    %v3105 = vadd.f32 %v2968, %v3104
    %3106 = vrot.lane.b32.xlu0 %v2132, 104
    %v3107 = vpop.permute.xlu0 %3106
    %3108 = vrot.lane.b32.xlu0 %v2132, 72
    %v3109 = vpop.permute.xlu0 %3108
    %v3110 = vsel %vm201, %v3107, 0
    %v3112 = vsel %vm201, %v3109, 0
    %3114 = vmatprep.subr.mxu0 0.0
    %3115 = vmatpush1.xpose.msra.mxu0 %v3112
    %3116 = vmatprep.subr.mxu0 0.0
    %3117 = vmatpush1.xpose.msra.mxu0 0.0
    %3118 = vmatprep.subr.mxu0 0.0
    %3119 = vmatpush1.xpose.msra.mxu0 0.0
    %3120 = vmatprep.subr.mxu0 0.0
    %3121 = vmatpush1.xpose.msra.mxu0 0.0
    %3122 = vmatprep.subr.mxu0 0.0
    %3123 = vmatpush1.xpose.msra.mxu0 0.0
    %3124 = vmatprep.subr.mxu0 0.0
    %3125 = vmatpush1.xpose.msra.mxu0 0.0
    %3126 = vmatprep.subr.mxu0 0.0
    %3127 = vmatpush1.xpose.msra.mxu0 0.0
    %3128 = vmatprep.subr.mxu0 0.0
    %3129 = vmatpush1.xpose.msra.mxu0 0.0
    %3130 = vmatprep.subr.mxu0 0.0
    %3131 = vmatpush1.xpose.msra.mxu0 0.0
    %3132 = vmatprep.subr.mxu0 0.0
    %3133 = vmatpush1.xpose.msra.mxu0 0.0
    %3134 = vmatprep.subr.mxu0 0.0
    %3135 = vmatpush1.xpose.msra.mxu0 0.0
    %3136 = vmatprep.subr.mxu0 0.0
    %3137 = vmatpush1.xpose.msra.mxu0 0.0
    %3138 = vmatprep.subr.mxu0 0.0
    %3139 = vmatpush1.xpose.msra.mxu0 0.0
    %3140 = vmatprep.subr.mxu0 0.0
    %3141 = vmatpush1.xpose.msra.mxu0 0.0
    %3142 = vmatprep.subr.mxu0 0.0
    %3143 = vmatpush1.xpose.msra.mxu0 0.0
    %3144 = vmatprep.subr.mxu0 0.0
    %3145 = vmatpush1.xpose.msra.mxu0 0.0
    %3146 = vmatprep.subr.mxu0 0.0
    %3147 = vmatpush1.xpose.msra.mxu0 0.0
    %3148 = vmatprep.subr.mxu0 0.0
    %3149 = vmatpush1.xpose.msra.mxu0 0.0
    %3150 = vmatprep.subr.mxu0 0.0
    %3151 = vmatpush1.xpose.msra.mxu0 0.0
    %3152 = vmatprep.subr.mxu0 0.0
    %3153 = vmatpush1.xpose.msra.mxu0 0.0
    %3154 = vmatprep.subr.mxu0 0.0
    %3155 = vmatpush1.xpose.msra.mxu0 0.0
    %3156 = vmatprep.subr.mxu0 0.0
    %3157 = vmatpush1.xpose.msra.mxu0 0.0
    %3158 = vmatprep.subr.mxu0 0.0
    %3159 = vmatpush1.xpose.msra.mxu0 0.0
    %3160 = vmatprep.subr.mxu0 0.0
    %3161 = vmatpush1.xpose.msra.mxu0 0.0
    %3162 = vmatprep.subr.mxu0 0.0
    %3163 = vmatpush1.xpose.msra.mxu0 0.0
    %3164 = vmatprep.subr.mxu0 0.0
    %3165 = vmatpush1.xpose.msra.mxu0 0.0
    %3166 = vmatprep.subr.mxu0 0.0
    %3167 = vmatpush1.xpose.msra.mxu0 0.0
    %3168 = vmatprep.subr.mxu0 0.0
    %3169 = vmatpush1.xpose.msra.mxu0 0.0
    %3170 = vmatprep.subr.mxu0 0.0
    %3171 = vmatpush1.xpose.msra.mxu0 0.0
    %3172 = vmatprep.subr.mxu0 0.0
    %3173 = vmatpush1.xpose.msra.mxu0 0.0
    %3174 = vmatprep.subr.mxu0 0.0
    %3175 = vmatpush1.xpose.msra.mxu0 0.0
    %3176 = vmatprep.subr.mxu0 0.0
    %3177 = vmatpush1.xpose.msra.mxu0 0.0
    %3178 = vmatprep.mubr.f32.mxu0 0.0
    %3179 = vmatmul.mubr.f32.gmra.mrb[0].mxu0 %v3110
    %v3180 = vpop.f32.mrb[0].mxu0
    %v3181 = vadd.f32 0.0, %v3180
    %v3182 = vpop.f32.mrb[0].mxu0
    %3183 = vdwg.mxu0
    %v3184 = vmul.f32 %v3181, 0.35355338
    %v3185 = vadd.f32 %v3184, %v1269
    %v3186 = vsel %vm201, %v3185, -inf
    %3187 = vmax.xlane.f32.xlu0 %v3186
    %v3188 = vpop.xlane.xlu0 %3187
    %v3189 = vsub.f32 %v3185, %v3188
    %v3190 = vmul.f32 %v3189, 1.442695
    %v3191 = vpow.pop %v3190
    %v3192 = vsel %vm201, %v3191, 0.0
    %3193 = vadd.xlane.f32.xlu0 %v3192
    %v3194 = vpop.xlane.xlu0 %3193
    %v3195 = vrcp.pop %v3194
    %v3196 = vmul.f32 %v3191, %v3195
    %v3197 = vpack.c.bf16 %v3196, %v3196
    %v3199 = vsel %vm201, %v3197, 0
    %3201 = vmatprep.subr.bf16.mxu0 0
    %3202 = vmatpush1.bf16.msra.mxu0 %v2788
    %3203 = vmatprep.subr.bf16.mxu0 0
    %3204 = vmatpush1.bf16.msra.mxu0 0
    %3205 = vmatprep.subr.bf16.mxu0 0
    %3206 = vmatpush1.bf16.msra.mxu0 0
    %3207 = vmatprep.subr.bf16.mxu0 0
    %3208 = vmatpush1.bf16.msra.mxu0 0
    %3209 = vmatprep.subr.bf16.mxu0 0
    %3210 = vmatpush1.bf16.msra.mxu0 0
    %3211 = vmatprep.subr.bf16.mxu0 0
    %3212 = vmatpush1.bf16.msra.mxu0 0
    %3213 = vmatprep.subr.bf16.mxu0 0
    %3214 = vmatpush1.bf16.msra.mxu0 0
    %3215 = vmatprep.subr.bf16.mxu0 0
    %3216 = vmatpush1.bf16.msra.mxu0 0
    %3217 = vmatprep.subr.bf16.mxu0 0
    %3218 = vmatpush1.bf16.msra.mxu0 0
    %3219 = vmatprep.subr.bf16.mxu0 0
    %3220 = vmatpush1.bf16.msra.mxu0 0
    %3221 = vmatprep.subr.bf16.mxu0 0
    %3222 = vmatpush1.bf16.msra.mxu0 0
    %3223 = vmatprep.subr.bf16.mxu0 0
    %3224 = vmatpush1.bf16.msra.mxu0 0
    %3225 = vmatprep.subr.bf16.mxu0 0
    %3226 = vmatpush1.bf16.msra.mxu0 0
    %3227 = vmatprep.subr.bf16.mxu0 0
    %3228 = vmatpush1.bf16.msra.mxu0 0
    %3229 = vmatprep.subr.bf16.mxu0 0
    %3230 = vmatpush1.bf16.msra.mxu0 0
    %3231 = vmatprep.subr.bf16.mxu0 0
    %3232 = vmatpush1.bf16.msra.mxu0 0
    %3233 = vmatprep.mubr.bf16.mxu0 0
    %3234 = vmatmul.mubr.bf16.gmra.mrb[0].mxu0 %v3199
    %v3235 = vpop.f32.mrb[0].mxu0
    %v3236 = vadd.f32 0.0, %v3235
    %v3237 = vpop.f32.mrb[0].mxu0
    %v3238 = vpop.f32.mrb[0].mxu0
    %v3239 = vpop.f32.mrb[0].mxu0
    %3240 = vdwg.mxu0
    %v3241 = vmul.f32 %v3236, %v546
    %v3242 = vadd.f32 %v3105, %v3241
    %v3243 = vpack.c.bf16 %v3242, %v2688
    %v3244 = vlaneseq
    %v3245 = vshrl.u32 %v3244, 7
    %v3246 = vsub.s32 0, %v3245
    %v3247 = vrot.slane %v2055, %v3246
    %v3252 = vunpack.c.l.b16 %v2050
    %v3253 = vunpack.c.l.b16 %v2051
    %v3254 = vunpack.c.l.b16 %v2052
    %v3255 = vunpack.c.l.b16 %v2053
    %v3256 = vpack.c.b16 %v3253, %v3252
    %v3257 = vpack.c.b16 %v3255, %v3254
    %v3261 = vsel %vm125, %v3243, 0
    %3263 = vmatprep.subr.bf16.mxu0 0
    %3264 = vmatpush1.bf16.msra.mxu0 %v3256
    %3265 = vmatprep.subr.bf16.mxu0 0
    %3266 = vmatpush1.bf16.msra.mxu0 %v3257
    %3267 = vmatprep.subr.bf16.mxu0 0
    %3268 = vmatpush1.bf16.msra.mxu0 0
    %3269 = vmatprep.subr.bf16.mxu0 0
    %3270 = vmatpush1.bf16.msra.mxu0 0
    %3271 = vmatprep.subr.bf16.mxu0 0
    %3272 = vmatpush1.bf16.msra.mxu0 0
    %3273 = vmatprep.subr.bf16.mxu0 0
    %3274 = vmatpush1.bf16.msra.mxu0 0
    %3275 = vmatprep.subr.bf16.mxu0 0
    %3276 = vmatpush1.bf16.msra.mxu0 0
    %3277 = vmatprep.subr.bf16.mxu0 0
    %3278 = vmatpush1.bf16.msra.mxu0 0
    %3279 = vmatprep.subr.bf16.mxu0 0
    %3280 = vmatpush1.bf16.msra.mxu0 0
    %3281 = vmatprep.subr.bf16.mxu0 0
    %3282 = vmatpush1.bf16.msra.mxu0 0
    %3283 = vmatprep.subr.bf16.mxu0 0
    %3284 = vmatpush1.bf16.msra.mxu0 0
    %3285 = vmatprep.subr.bf16.mxu0 0
    %3286 = vmatpush1.bf16.msra.mxu0 0
    %3287 = vmatprep.subr.bf16.mxu0 0
    %3288 = vmatpush1.bf16.msra.mxu0 0
    %3289 = vmatprep.subr.bf16.mxu0 0
    %3290 = vmatpush1.bf16.msra.mxu0 0
    %3291 = vmatprep.subr.bf16.mxu0 0
    %3292 = vmatpush1.bf16.msra.mxu0 0
    %3293 = vmatprep.subr.bf16.mxu0 0
    %3294 = vmatpush1.bf16.msra.mxu0 0
    %3295 = vmatprep.mubr.bf16.mxu0 0
    %3296 = vmatmul.mubr.bf16.gmra.mrb[0].mxu0 %v3261
    %v3297 = vpop.f32.mrb[0].mxu0
    %v3298 = vadd.f32 %v3247, %v3297
    %v3299 = vpop.f32.mrb[0].mxu0
    %v3300 = vpop.f32.mrb[0].mxu0
    %v3301 = vadd.f32 %v3247, %v3300
    %v3302 = vpop.f32.mrb[0].mxu0
    %3303 = vdwg.mxu0
    %v3304 = vadd.f32 %v2040, %v3298
    %v3305 = vadd.f32 %v2041, %v3301
    %v3306 = vsel %vm125, %v3304, 0.0
    %3307 = vadd.xlane.f32.xlu0 %v3306
    %v3308 = vpop.xlane.xlu0 %3307
    %v3309 = vsel %vm125, %v3305, 0.0
    %3310 = vadd.xlane.f32.xlu0 %v3309
    %v3311 = vpop.xlane.xlu0 %3310
    %v3312 = vmul.f32 %v3308, %v132
    %v3313 = vmul.f32 %v3311, %v132
    %v3314 = vsub.f32 %v3304, %v3312
    %v3315 = vsub.f32 %v3305, %v3313
    %v3316 = vmul.f32 %v3314, %v3314
    %v3317 = vmul.f32 %v3315, %v3315
    %v3318 = vsel %vm125, %v3316, 0.0
    %3319 = vadd.xlane.f32.xlu0 %v3318
    %v3320 = vpop.xlane.xlu0 %3319
    %v3321 = vsel %vm125, %v3317, 0.0
    %3322 = vadd.xlane.f32.xlu0 %v3321
    %v3323 = vpop.xlane.xlu0 %3322
    %v3324 = vmul.f32 %v3320, %v132
    %v3325 = vmul.f32 %v3323, %v132
    %v3326 = vadd.f32 %v3324, 1e-06
    %v3327 = vadd.f32 %v3325, 1e-06
    %v3328 = vrsqrt.pop %v3326
    %v3329 = vrsqrt.pop %v3327
    %v3330 = vmul.f32 %v3314, %v3328
    %v3331 = vmul.f32 %v3315, %v3329
    %v3332 = vlaneseq
    %v3333 = vshrl.u32 %v3332, 7
    %v3334 = vsub.s32 1, %v3333
    %v3335 = vrot.slane %v2055, %v3334
    %v3336 = vmul.f32 %v3330, %v3335
    %v3337 = vmul.f32 %v3331, %v3335
    %v3338 = vlaneseq
    %v3339 = vshrl.u32 %v3338, 7
    %v3340 = vsub.s32 2, %v3339
    %v3341 = vrot.slane %v2055, %v3340
    %v3342 = vadd.f32 %v3336, %v3341
    %v3343 = vadd.f32 %v3337, %v3341
    %v3344 = vpack.c.bf16 %v3343, %v3342
    %v3346 = vlaneseq
    %v3347 = vshrl.u32 %v3346, 7
    %v3348 = vsub.s32 0, %v3347
    %v3349 = vrot.slane %v2062, %v3348
    %v3355 = vunpack.c.l.b16 %v2057
    %v3356 = vunpack.c.l.b16 %v2058
    %v3357 = vunpack.c.l.b16 %v2059
    %v3358 = vunpack.c.l.b16 %v2060
    %v3359 = vpack.c.b16 %v3356, %v3355
    %v3360 = vpack.c.b16 %v3358, %v3357
    %v3364 = vsel %vm125, %v3344, 0
    %3366 = vmatprep.subr.bf16.mxu0 0
    %3367 = vmatpush1.bf16.msra.mxu0 %v3359
    %3368 = vmatprep.subr.bf16.mxu0 0
    %3369 = vmatpush1.bf16.msra.mxu0 %v3360
    %3370 = vmatprep.subr.bf16.mxu0 0
    %3371 = vmatpush1.bf16.msra.mxu0 0
    %3372 = vmatprep.subr.bf16.mxu0 0
    %3373 = vmatpush1.bf16.msra.mxu0 0
    %3374 = vmatprep.subr.bf16.mxu0 0
    %3375 = vmatpush1.bf16.msra.mxu0 0
    %3376 = vmatprep.subr.bf16.mxu0 0
    %3377 = vmatpush1.bf16.msra.mxu0 0
    %3378 = vmatprep.subr.bf16.mxu0 0
    %3379 = vmatpush1.bf16.msra.mxu0 0
    %3380 = vmatprep.subr.bf16.mxu0 0
    %3381 = vmatpush1.bf16.msra.mxu0 0
    %3382 = vmatprep.subr.bf16.mxu0 0
    %3383 = vmatpush1.bf16.msra.mxu0 0
    %3384 = vmatprep.subr.bf16.mxu0 0
    %3385 = vmatpush1.bf16.msra.mxu0 0
    %3386 = vmatprep.subr.bf16.mxu0 0
    %3387 = vmatpush1.bf16.msra.mxu0 0
    %3388 = vmatprep.subr.bf16.mxu0 0
    %3389 = vmatpush1.bf16.msra.mxu0 0
    %3390 = vmatprep.subr.bf16.mxu0 0
    %3391 = vmatpush1.bf16.msra.mxu0 0
    %3392 = vmatprep.subr.bf16.mxu0 0
    %3393 = vmatpush1.bf16.msra.mxu0 0
    %3394 = vmatprep.subr.bf16.mxu0 0
    %3395 = vmatpush1.bf16.msra.mxu0 0
    %3396 = vmatprep.subr.bf16.mxu0 0
    %3397 = vmatpush1.bf16.msra.mxu0 0
    %3398 = vmatprep.mubr.bf16.mxu0 0
    %3399 = vmatmul.mubr.bf16.gmra.mrb[0].mxu0 %v3364
    %v3400 = vpop.f32.mrb[0].mxu0
    %v3401 = vadd.f32 %v3349, %v3400
    %v3402 = vpop.f32.mrb[0].mxu0
    %v3403 = vpop.f32.mrb[0].mxu0
    %v3404 = vadd.f32 %v3349, %v3403
    %v3405 = vpop.f32.mrb[0].mxu0
    %3406 = vdwg.mxu0
    %v3407 = vmul.f32 %v3401, %v3401
    %v3408 = vmul.f32 %v3404, %v3404
    %v3409 = vmul.f32 %v3401, %v3407
    %v3410 = vmul.f32 %v3404, %v3408
    %v3411 = vmul.f32 %v3409, 0.044715
    %v3412 = vmul.f32 %v3410, 0.044715
    %v3413 = vadd.f32 %v3401, %v3411
    %v3414 = vadd.f32 %v3404, %v3412
    %v3415 = vmul.f32 %v3413, 0.7978846
    %v3416 = vmul.f32 %v3414, 0.7978846
    %v3417 = vtanh.pop %v3415
    %v3418 = vtanh.pop %v3416
    %v3419 = vadd.f32 %v3417, 1.0
    %v3420 = vadd.f32 %v3418, 1.0
    %v3421 = vmul.f32 %v3419, 0.5
    %v3422 = vmul.f32 %v3420, 0.5
    %v3423 = vmul.f32 %v3401, %v3421
    %v3424 = vmul.f32 %v3404, %v3422
    %v3425 = vpack.c.bf16 %v3424, %v3423
    %v3426 = vlaneseq
    %v3427 = vshrl.u32 %v3426, 7
    %v3428 = vsub.s32 3, %v3427
    %v3429 = vrot.slane %v2055, %v3428
    %v3438 = vunpack.c.l.b16 %v2064
    %v3439 = vunpack.c.l.b16 %v2065
    %v3440 = vunpack.c.l.b16 %v2066
    %v3441 = vunpack.c.l.b16 %v2067
    %v3442 = vunpack.c.l.b16 %v2068
    %v3443 = vunpack.c.l.b16 %v2069
    %v3444 = vunpack.c.l.b16 %v2070
    %v3445 = vunpack.c.l.b16 %v2071
    %v3446 = vpack.c.b16 %v3439, %v3438
    %v3447 = vpack.c.b16 %v3441, %v3440
    %v3448 = vpack.c.b16 %v3443, %v3442
    %v3449 = vpack.c.b16 %v3445, %v3444
    %v3455 = vsel %vm1957, %v3425, 0
    %3457 = vmatprep.subr.bf16.mxu0 0
    %3458 = vmatpush1.bf16.msra.mxu0 %v3446
    %3459 = vmatprep.subr.bf16.mxu0 0
    %3460 = vmatpush1.bf16.msra.mxu0 %v3447
    %3461 = vmatprep.subr.bf16.mxu0 0
    %3462 = vmatpush1.bf16.msra.mxu0 %v3448
    %3463 = vmatprep.subr.bf16.mxu0 0
    %3464 = vmatpush1.bf16.msra.mxu0 %v3449
    %3465 = vmatprep.subr.bf16.mxu0 0
    %3466 = vmatpush1.bf16.msra.mxu0 0
    %3467 = vmatprep.subr.bf16.mxu0 0
    %3468 = vmatpush1.bf16.msra.mxu0 0
    %3469 = vmatprep.subr.bf16.mxu0 0
    %3470 = vmatpush1.bf16.msra.mxu0 0
    %3471 = vmatprep.subr.bf16.mxu0 0
    %3472 = vmatpush1.bf16.msra.mxu0 0
    %3473 = vmatprep.subr.bf16.mxu0 0
    %3474 = vmatpush1.bf16.msra.mxu0 0
    %3475 = vmatprep.subr.bf16.mxu0 0
    %3476 = vmatpush1.bf16.msra.mxu0 0
    %3477 = vmatprep.subr.bf16.mxu0 0
    %3478 = vmatpush1.bf16.msra.mxu0 0
    %3479 = vmatprep.subr.bf16.mxu0 0
    %3480 = vmatpush1.bf16.msra.mxu0 0
    %3481 = vmatprep.subr.bf16.mxu0 0
    %3482 = vmatpush1.bf16.msra.mxu0 0
    %3483 = vmatprep.subr.bf16.mxu0 0
    %3484 = vmatpush1.bf16.msra.mxu0 0
    %3485 = vmatprep.subr.bf16.mxu0 0
    %3486 = vmatpush1.bf16.msra.mxu0 0
    %3487 = vmatprep.subr.bf16.mxu0 0
    %3488 = vmatpush1.bf16.msra.mxu0 0
    %3489 = vmatprep.mubr.bf16.mxu0 0
    %3490 = vmatmul.mubr.bf16.gmra.mrb[0].mxu0 %v3455
    %v3491 = vpop.f32.mrb[0].mxu0
    %v3492 = vadd.f32 %v3429, %v3491
    %v3493 = vpop.f32.mrb[0].mxu0
    %v3494 = vpop.f32.mrb[0].mxu0
    %v3495 = vadd.f32 %v3429, %v3494
    %v3496 = vpop.f32.mrb[0].mxu0
    %3497 = vdwg.mxu0
    %v3498 = vadd.f32 %v3342, %v3492
    %v3499 = vadd.f32 %v3343, %v3495
    %v3500 = vsel %vm125, %v3498, 0.0
    %3501 = vadd.xlane.f32.xlu0 %v3500
    %v3502 = vpop.xlane.xlu0 %3501
    %v3503 = vsel %vm125, %v3499, 0.0
    %3504 = vadd.xlane.f32.xlu0 %v3503
    %v3505 = vpop.xlane.xlu0 %3504
    %v3506 = vmul.f32 %v3502, %v132
    %v3507 = vmul.f32 %v3505, %v132
    %v3508 = vsub.f32 %v3498, %v3506
    %v3509 = vsub.f32 %v3499, %v3507
    %v3510 = vmul.f32 %v3508, %v3508
    %v3511 = vmul.f32 %v3509, %v3509
    %v3512 = vsel %vm125, %v3510, 0.0
    %3513 = vadd.xlane.f32.xlu0 %v3512
    %v3514 = vpop.xlane.xlu0 %3513
    %v3515 = vsel %vm125, %v3511, 0.0
    %3516 = vadd.xlane.f32.xlu0 %v3515
    %v3517 = vpop.xlane.xlu0 %3516
    %v3518 = vmul.f32 %v3514, %v132
    %v3519 = vmul.f32 %v3517, %v132
    %v3520 = vadd.f32 %v3518, 1e-06
    %v3521 = vadd.f32 %v3519, 1e-06
    %v3522 = vrsqrt.pop %v3520
    %v3523 = vrsqrt.pop %v3521
    %v3524 = vmul.f32 %v3508, %v3522
    %v3525 = vmul.f32 %v3509, %v3523
    %v3526 = vlaneseq
    %v3527 = vshrl.u32 %v3526, 7
    %v3528 = vsub.s32 4, %v3527
    %v3529 = vrot.slane %v2055, %v3528
    %v3530 = vmul.f32 %v3524, %v3529
    %v3531 = vmul.f32 %v3525, %v3529
    %v3532 = vlaneseq
    %v3533 = vshrl.u32 %v3532, 7
    %v3534 = vsub.s32 5, %v3533
    %v3535 = vrot.slane %v2055, %v3534
    %v3536 = vadd.f32 %v3530, %v3535
    %v3537 = vadd.f32 %v3531, %v3535
    %3538 = vst.msk [vmem:[#allocation2] sm:$0xff] %vm125, %v3536
    %3539 = vst.msk [vmem:[#allocation2 + $0x8] sm:$0xff] %vm125, %v3537
    // Predicated region
    $region62: #{tpu_custom_call.1} parent=1 // pred_check
      _
    $region63: #{tpu_custom_call.1} parent=1 // pred_check_branch
      %3541 = sbr.rel (0) target = $region65
    $region64: #{tpu_custom_call.1} parent=1 // pred_region
      %s3543 = ssub.s32 256, 256
      %3544 = vsyncadd [#allocation3], %s3543
      %s3545 = sshll.u32 [#allocation2], 4
      %s3546 = int_to_ptr.vmem [resolvable:$true] %s3545
      %3551 = dma.vmem_to_hbm [thread:$0]  %s3546, 256, %s15, [#allocation3], 128, 128, 8
    $region65: #{tpu_custom_call.1} parent=1 // pred_fallthru
      _
    // Predicated region
    $region66: #{tpu_custom_call.1} parent=1 // pred_check
      _
    $region67: #{tpu_custom_call.1} parent=1 // pred_check_branch
      %3553 = sbr.rel (0) target = $region69
    $region68: #{tpu_custom_call.1} parent=1 // pred_region
      %3554 = dma.done [#allocation3], 256
    $region69: #{tpu_custom_call.1} parent=1 // pred_fallthru
      _
    %3555 = vsyncpa [#allocation3], 1

</llo_original>
